<compile_context>
chip_gen: v5e
topology: v5e:2x2
jax: 0.10.0
libtpu: 0.0.40
codegen_flags: <defaults>
</compile_context>

<pallas_src>
import math

import jax
import jax.numpy as jnp
from jax.experimental import pallas as pl
from jax.experimental.pallas import tpu as pltpu


# -----------------------------------------------------------------------------
# Pallas kernel (token-transposed layout: lane dim = tokens)
#   zT   = shortcutT + yT                                    (C, T)
#   outT = zT + w2T @ gelu(w1T' @ LNcentered(zT) + b1') + b2
# (LayerNorm's gamma/beta are pre-folded into w1T'/b1' on the host.)
# -----------------------------------------------------------------------------
def _make_kernel(use_tanh_gelu):
    inv_sqrt2 = 1.0 / math.sqrt(2.0)
    c_tanh = math.sqrt(2.0 / math.pi)

    def swin_block_kernel(xa_ref, xb_ref, w1t_ref, b1_ref, w2t_ref, b2_ref,
                          out_ref):
        # xa_ref: (T, C) raw-view (shortcut) slab; xb_ref: (C, T) channels-major.
        shortcut_t = jnp.transpose(xa_ref[...], (1, 0))    # XLU transpose -> (C, T)
        z = shortcut_t + xb_ref[...]                       # (C, T), lane dim = T

        # LayerNorm over the channel axis (sublane axis); eps=1e-5, biased var.
        # Affine (gamma, beta) is folded into w1t/b1 on the host.
        mean = jnp.mean(z, axis=0, keepdims=True)          # (1, T)
        xc = z - mean
        var = jnp.mean(xc * xc, axis=0, keepdims=True)
        h = xc * jax.lax.rsqrt(var + 1e-5)                 # (C, T)

        # MLP transposed: (Hd,C)@(C,T) -> (Hd,T); GELU; (C,Hd)@(Hd,T) -> (C,T)
        h1 = jnp.dot(w1t_ref[...], h,
                     preferred_element_type=jnp.float32) + b1_ref[...]
        if use_tanh_gelu:
            # EUP-routed tanh approximation (perturbs numerics vs exact erf).
            g = 0.5 * h1 * (1.0 + jnp.tanh(c_tanh * (h1 + 0.044715 * h1 * h1 * h1)))
        else:
            # Exact GELU -- matches torch.nn.GELU() bit-for-bit.
            g = 0.5 * h1 * (1.0 + jax.lax.erf(h1 * inv_sqrt2))
        h2 = jnp.dot(w2t_ref[...], g,
                     preferred_element_type=jnp.float32) + b2_ref[...]

        out_ref[...] = (z + h2).astype(out_ref.dtype)

    return swin_block_kernel


def _pick_tile_n(N, B, C, Hd, *, target_tokens=8192, vmem_budget_bytes=40 << 20):
    """Largest multiple-of-128 divisor of N that is <= target_tokens, fits the
    VMEM budget (conservative for v7x's 64 MiB), and keeps >=2 total grid steps
    when B == 1 (so v7x's second TensorCore is not idled)."""
    lane = 128
    c_pad = -(-C // lane) * lane                       # xa block lane padding in VMEM
    # per-token f32 VMEM: xa dbl-buf (padded) + xb/out dbl-buf + z/h/h2 + h1/g temps
    per_token = (2 * c_pad + 7 * C + 2 * Hd) * 4
    cap = max(lane, vmem_budget_bytes // per_token)
    limit = min(target_tokens, cap, N)

    def best_div(upper):
        best, t = 0, lane
        while t <= upper:
            if N % t == 0:
                best = t
            t += lane
        return best

    tile = best_div(limit)
    if tile == N and B == 1:                           # prefer >=2 grid steps (megacore)
        alt = best_div(N // 2)
        if alt:
            tile = alt
    if tile == 0:
        tile = N                                       # non-128-multiple N: full-extent block
    return tile, per_token


def swin_transformer_block(x, gamma, beta, w1, b1, w2, b2, *,
                           tile_n=None, use_tanh_gelu=False):
    """x: (B, C, S, H, W) float32. Returns (B, C, S, H, W)."""
    B, C, S, H, W = x.shape
    N = S * H * W
    Hd = w1.shape[1]

    if tile_n is None:
        tile_n, per_token = _pick_tile_n(N, B, C, Hd)
    else:
        _, per_token = _pick_tile_n(N, B, C, Hd)
        if N % tile_n != 0:
            tile_n, _ = _pick_tile_n(N, B, C, Hd, target_tokens=tile_n)

    # Scoped-VMEM request: actual footprint with margin, raised above the 16/32 MiB
    # defaults but capped at 48 MiB so it is always legal on v7x (64 MiB physical).
    est = per_token * tile_n + 4 * 2 * (2 * Hd * C + Hd + C)
    vmem_limit = int(min(48 << 20, max(32 << 20, 2 * est)))

    # Free reshapes of the same contiguous buffer -- no HBM pre-passes.
    xa = x.reshape(B, N, C)    # raw "shortcut" view (matches torch .view)
    xb = x.reshape(B, C, N)    # channels-major view == y^T per batch

    # Fold LayerNorm affine into fc1 (h feeds only the first matmul):
    #   w1'[c,h] = gamma[c] * w1[c,h]     b1' = b1 + beta @ w1
    w1t = (w1 * gamma[:, None]).T          # (Hd, C)
    b1f = (b1 + beta @ w1).reshape(Hd, 1)  # (Hd, 1)
    w2t = w2.T                             # (C, Hd)
    b2_2 = b2.reshape(C, 1)

    const = lambda shape: pl.BlockSpec(shape, lambda b, j: (0, 0))

    out_t = pl.pallas_call(
        _make_kernel(use_tanh_gelu),
        out_shape=jax.ShapeDtypeStruct((B, C, N), x.dtype),
        grid_spec=pltpu.PrefetchScalarGridSpec(
            num_scalar_prefetch=0,
            grid=(B, N // tile_n),
            in_specs=[
                pl.BlockSpec((None, tile_n, C), lambda b, j: (b, j, 0)),  # xa
                pl.BlockSpec((None, C, tile_n), lambda b, j: (b, 0, j)),  # xb (y^T)
                const((Hd, C)),   # w1^T (gamma-folded; resident, constant index_map)
                const((Hd, 1)),   # b1'  (beta-folded)
                const((C, Hd)),   # w2^T
                const((C, 1)),    # b2
            ],
            out_specs=pl.BlockSpec((None, C, tile_n), lambda b, j: (b, 0, j)),
        ),
        compiler_params=pltpu.CompilerParams(
            dimension_semantics=("parallel", "parallel"),
            vmem_limit_bytes=vmem_limit),
    )(xa, xb, w1t, b1f, w2t, b2_2)

    # Output is already channels-major: (B, C, N) -> (B, C, S, H, W) is free.
    return out_t.reshape(B, C, S, H, W)


# -----------------------------------------------------------------------------
# Pure-JAX reference for correctness check (mirrors the PyTorch module exactly)
# -----------------------------------------------------------------------------
def reference(x, gamma, beta, w1, b1, w2, b2):
    B, C, S, H, W = x.shape
    N = S * H * W
    shortcut = x.reshape(B, N, C)
    y = jnp.transpose(x, (0, 2, 3, 4, 1)).reshape(B, N, C)
    z = shortcut + y
    mean = z.mean(-1, keepdims=True)
    var = ((z - mean) ** 2).mean(-1, keepdims=True)
    h = (z - mean) / jnp.sqrt(var + 1e-5) * gamma + beta
    h1 = h @ w1 + b1
    g = 0.5 * h1 * (1.0 + jax.lax.erf(h1 / math.sqrt(2.0)))
    out = z + g @ w2 + b2
    return jnp.transpose(out.reshape(B, S, H, W, C), (0, 4, 1, 2, 3))


if __name__ == "__main__":
    # Module config: dim=32, num_heads=4, window_size=4, shift_size=0, mlp_ratio=4
    # S=H=W=8 (multiples of window_size) -> N = 512 tokens/batch.
    B, C, S, H, W = 2, 32, 8, 8, 8
    hidden = int(C * 4.0)

    key = jax.random.PRNGKey(0)
    kx, k1, k2, kg, kb, kb1, kb2 = jax.random.split(key, 7)

    x = jax.random.normal(kx, (B, C, S, H, W), dtype=jnp.float32)

    gamma = 1.0 + 0.1 * jax.random.normal(kg, (C,), dtype=jnp.float32)
    beta = 0.1 * jax.random.normal(kb, (C,), dtype=jnp.float32)
    w1 = 0.02 * jax.random.normal(k1, (C, hidden), dtype=jnp.float32)
    b1 = 0.01 * jax.random.normal(kb1, (hidden,), dtype=jnp.float32)
    w2 = 0.02 * jax.random.normal(k2, (hidden, C), dtype=jnp.float32)
    b2 = 0.01 * jax.random.normal(kb2, (C,), dtype=jnp.float32)

    out = swin_transformer_block(x, gamma, beta, w1, b1, w2, b2)
    out = jax.block_until_ready(out)

    ref = reference(x, gamma, beta, w1, b1, w2, b2)
    assert out.shape == (B, C, S, H, W)
    assert jnp.allclose(out, ref, atol=1e-4, rtol=1e-4), "mismatch vs reference"

    print("KERNEL_OK")
</pallas_src>

<mosaic_0001>
module attributes {stable_mosaic.version = 11 : i64} {
  func.func @swin_block_kernel(%arg0: i32, %arg1: i32, %arg2: memref<1x512x32xf32, #tpu.memory_space<vmem>>, %arg3: memref<1x32x512xf32, #tpu.memory_space<vmem>>, %arg4: memref<128x32xf32, #tpu.memory_space<vmem>>, %arg5: memref<128x1xf32, #tpu.memory_space<vmem>>, %arg6: memref<32x128xf32, #tpu.memory_space<vmem>>, %arg7: memref<32x1xf32, #tpu.memory_space<vmem>>, %arg8: memref<1x32x512xf32, #tpu.memory_space<vmem>>) attributes {dimension_semantics = [#tpu.dimension_semantics<parallel>, #tpu.dimension_semantics<parallel>], iteration_bounds = array<i64: 2, 1>, scalar_prefetch = 0 : i64, scratch_operands = 0 : i64, tpu.core_type = #tpu.core_type<tc>, window_params = [{transform_indices = @transform_0, window_bounds = array<i64: 1, 512, 32>}, {transform_indices = @transform_1, window_bounds = array<i64: 1, 32, 512>}, {pipeline_mode = #tpu.pipeline_mode<synchronous>, transform_indices = @transform_2, window_bounds = array<i64: 128, 32>}, {pipeline_mode = #tpu.pipeline_mode<synchronous>, transform_indices = @transform_3, window_bounds = array<i64: 128, 1>}, {pipeline_mode = #tpu.pipeline_mode<synchronous>, transform_indices = @transform_4, window_bounds = array<i64: 32, 128>}, {pipeline_mode = #tpu.pipeline_mode<synchronous>, transform_indices = @transform_5, window_bounds = array<i64: 32, 1>}, {transform_indices = @transform_6, window_bounds = array<i64: 1, 32, 512>}]} {
    %c0 = arith.constant 0 : index
    %c0_0 = arith.constant 0 : index
    %c0_1 = arith.constant 0 : index
    %0 = vector.load %arg2[%c0, %c0_0, %c0_1] : memref<1x512x32xf32, #tpu.memory_space<vmem>>, vector<1x512x32xf32>
    %1 = vector.shape_cast %0 : vector<1x512x32xf32> to vector<512x32xf32>
    %2 = tpu.transpose %1, [1, 0] : vector<512x32xf32> -> vector<32x512xf32>
    %c0_2 = arith.constant 0 : index
    %c0_3 = arith.constant 0 : index
    %c0_4 = arith.constant 0 : index
    %3 = vector.load %arg3[%c0_2, %c0_3, %c0_4] : memref<1x32x512xf32, #tpu.memory_space<vmem>>, vector<1x32x512xf32>
    %4 = vector.shape_cast %3 : vector<1x32x512xf32> to vector<32x512xf32>
    %5 = arith.addf %2, %4 : vector<32x512xf32>
    %cst = arith.constant dense<0.000000e+00> : vector<512xf32>
    %6 = vector.multi_reduction <add>, %5, %cst [0] : vector<32x512xf32> to vector<512xf32>
    %7 = vector.shape_cast %6 : vector<512xf32> to vector<1x512xf32>
    %cst_5 = arith.constant 3.200000e+01 : f32
    %8 = vector.broadcast %cst_5 : f32 to vector<1x512xf32>
    %9 = arith.divf %7, %8 : vector<1x512xf32>
    %10 = vector.broadcast %9 : vector<1x512xf32> to vector<32x512xf32>
    %11 = arith.subf %5, %10 : vector<32x512xf32>
    %12 = arith.mulf %11, %11 : vector<32x512xf32>
    %cst_6 = arith.constant dense<0.000000e+00> : vector<512xf32>
    %13 = vector.multi_reduction <add>, %12, %cst_6 [0] : vector<32x512xf32> to vector<512xf32>
    %14 = vector.shape_cast %13 : vector<512xf32> to vector<1x512xf32>
    %cst_7 = arith.constant 3.200000e+01 : f32
    %15 = vector.broadcast %cst_7 : f32 to vector<1x512xf32>
    %16 = arith.divf %14, %15 : vector<1x512xf32>
    %cst_8 = arith.constant 9.99999974E-6 : f32
    %17 = vector.broadcast %cst_8 : f32 to vector<1x512xf32>
    %18 = arith.addf %16, %17 : vector<1x512xf32>
    %19 = math.rsqrt %18 : vector<1x512xf32>
    %20 = vector.broadcast %19 : vector<1x512xf32> to vector<32x512xf32>
    %21 = arith.mulf %11, %20 : vector<32x512xf32>
    %c0_9 = arith.constant 0 : index
    %c0_10 = arith.constant 0 : index
    %22 = vector.load %arg4[%c0_9, %c0_10] : memref<128x32xf32, #tpu.memory_space<vmem>>, vector<128x32xf32>
    %cst_11 = arith.constant dense<0.000000e+00> : vector<128x512xf32>
    %23 = tpu.matmul %22, %21, %cst_11 {dimension_numbers = #tpu.dot_dimension_numbers<[1], [0], [0], [1], [0, 0, 1, 1], [], []>} : vector<128x32xf32>, vector<32x512xf32>, vector<128x512xf32> -> vector<128x512xf32>
    %c0_12 = arith.constant 0 : index
    %c0_13 = arith.constant 0 : index
    %24 = vector.load %arg5[%c0_12, %c0_13] : memref<128x1xf32, #tpu.memory_space<vmem>>, vector<128x1xf32>
    %25 = vector.broadcast %24 : vector<128x1xf32> to vector<128x512xf32>
    %26 = arith.addf %23, %25 : vector<128x512xf32>
    %cst_14 = arith.constant 5.000000e-01 : f32
    %27 = vector.broadcast %cst_14 : f32 to vector<128x512xf32>
    %28 = arith.mulf %27, %26 : vector<128x512xf32>
    %cst_15 = arith.constant 0.707106769 : f32
    %29 = vector.broadcast %cst_15 : f32 to vector<128x512xf32>
    %30 = arith.mulf %26, %29 : vector<128x512xf32>
    %31 = math.erf %30 : vector<128x512xf32>
    %cst_16 = arith.constant 1.000000e+00 : f32
    %32 = vector.broadcast %cst_16 : f32 to vector<128x512xf32>
    %33 = arith.addf %32, %31 : vector<128x512xf32>
    %34 = arith.mulf %28, %33 : vector<128x512xf32>
    %c0_17 = arith.constant 0 : index
    %c0_18 = arith.constant 0 : index
    %35 = vector.load %arg6[%c0_17, %c0_18] : memref<32x128xf32, #tpu.memory_space<vmem>>, vector<32x128xf32>
    %cst_19 = arith.constant dense<0.000000e+00> : vector<32x512xf32>
    %36 = tpu.matmul %35, %34, %cst_19 {dimension_numbers = #tpu.dot_dimension_numbers<[1], [0], [0], [1], [0, 0, 1, 1], [], []>} : vector<32x128xf32>, vector<128x512xf32>, vector<32x512xf32> -> vector<32x512xf32>
    %c0_20 = arith.constant 0 : index
    %c0_21 = arith.constant 0 : index
    %37 = vector.load %arg7[%c0_20, %c0_21] : memref<32x1xf32, #tpu.memory_space<vmem>>, vector<32x1xf32>
    %38 = vector.broadcast %37 : vector<32x1xf32> to vector<32x512xf32>
    %39 = arith.addf %36, %38 : vector<32x512xf32>
    %40 = arith.addf %5, %39 : vector<32x512xf32>
    %c0_22 = arith.constant 0 : index
    %c0_23 = arith.constant 0 : index
    %c0_24 = arith.constant 0 : index
    %41 = vector.load %arg8[%c0_22, %c0_23, %c0_24] : memref<1x32x512xf32, #tpu.memory_space<vmem>>, vector<1x32x512xf32>
    %42 = vector.shape_cast %41 : vector<1x32x512xf32> to vector<32x512xf32>
    %43 = vector.shape_cast %40 : vector<32x512xf32> to vector<1x32x512xf32>
    tpu.vector_store %arg8[%c0_22, %c0_23, %c0_24], %43 {strides = array<i32>} : memref<1x32x512xf32, #tpu.memory_space<vmem>>, vector<1x32x512xf32>,
    return
  }
  func.func @transform_0(%arg0: i32, %arg1: i32) -> (i32, i32, i32) {
    %c0_i32 = arith.constant 0 : i32
    %c0_i32_0 = arith.constant 0 : i32
    return %arg0, %arg1, %c0_i32 : i32, i32, i32
  }
  func.func @transform_1(%arg0: i32, %arg1: i32) -> (i32, i32, i32) {
    %c0_i32 = arith.constant 0 : i32
    %c0_i32_0 = arith.constant 0 : i32
    return %arg0, %c0_i32, %arg1 : i32, i32, i32
  }
  func.func @transform_2(%arg0: i32, %arg1: i32) -> (i32, i32) {
    %c0_i32 = arith.constant 0 : i32
    %c0_i32_0 = arith.constant 0 : i32
    %c0_i32_1 = arith.constant 0 : i32
    return %c0_i32, %c0_i32_0 : i32, i32
  }
  func.func @transform_3(%arg0: i32, %arg1: i32) -> (i32, i32) {
    %c0_i32 = arith.constant 0 : i32
    %c0_i32_0 = arith.constant 0 : i32
    %c0_i32_1 = arith.constant 0 : i32
    return %c0_i32, %c0_i32_0 : i32, i32
  }
  func.func @transform_4(%arg0: i32, %arg1: i32) -> (i32, i32) {
    %c0_i32 = arith.constant 0 : i32
    %c0_i32_0 = arith.constant 0 : i32
    %c0_i32_1 = arith.constant 0 : i32
    return %c0_i32, %c0_i32_0 : i32, i32
  }
  func.func @transform_5(%arg0: i32, %arg1: i32) -> (i32, i32) {
    %c0_i32 = arith.constant 0 : i32
    %c0_i32_0 = arith.constant 0 : i32
    %c0_i32_1 = arith.constant 0 : i32
    return %c0_i32, %c0_i32_0 : i32, i32
  }
  func.func @transform_6(%arg0: i32, %arg1: i32) -> (i32, i32, i32) {
    %c0_i32 = arith.constant 0 : i32
    %c0_i32_0 = arith.constant 0 : i32
    return %arg0, %c0_i32, %arg1 : i32, i32, i32
  }
}

</mosaic_0001>

<llo_original>
// kernel: tpu_custom_call.1
$region0: #{tpu_custom_call.1}
  #allocation0 [shape = 'u32[]', space=smem, size = 0x4, offset = 0x4, fixed_abs, tag = 'smem constant byte address 0x4 - core index']
  #allocation1 [shape = 'u32[72,128]{1,0:T(1,128)}', space=vmem, size = 0x9000, scoped, tag = 'internal scratch']
  %s0 = inlined_call_operand.vmem [shape: f32[2,512,32], index: 0, kind: input, shape index: {}]
  %s1 = inlined_call_operand.vmem [shape: f32[2,32,512], index: 1, kind: input, shape index: {}]
  %s2 = inlined_call_operand.vmem [shape: f32[128,32], index: 2, kind: input, shape index: {}]
  %s3 = inlined_call_operand.vmem [shape: f32[128,1], index: 3, kind: input, shape index: {}]
  %s4 = inlined_call_operand.vmem [shape: f32[32,128], index: 4, kind: input, shape index: {}]
  %s5 = inlined_call_operand.vmem [shape: f32[32,1], index: 5, kind: input, shape index: {}]
  %s6 = inlined_call_operand.hbm [shape: f32[2,32,512], index: 6, kind: output, shape index: {}]
  %s7 = sld [smem:[#allocation0]]
  $region57: #{tpu_custom_call.1} parent=0
    _
  %s9 = ssub.s32 1, %s7
  %s10 = scalar_select 0, %s9, %s7
  $region1: #{tpu_custom_call.1} parent=0
    #allocation2 [shape = 'u8[131072]{0}', space=vmem, size = 0x20000, scoped, tag = 'output window, operand 0']
    #allocation3 [shape = 's32[2]{0}', space=sflag, size = 0x8, scoped, tag = 'scoped memory for tpu_custom_call.1']
    %11 = vsyncpa [#allocation3], 0
    %s12 = scalar_lea.sflag [#allocation3], 1
    %13 = vsyncpa %s12, 0
    loop: start=0, step=1, limit=4
    $region2: #{tpu_custom_call.1} parent=1 // loop_pre_header
      _
    $region3: #{tpu_custom_call.1} parent=1 // loop_header
      %s15 = sphi 0, %s19
      %p16 = scmp.ge.s32.totalorder %s15, 4
      %s22 = sphi 0, %s34
      %s23 = sphi 0, %s30
      %s24 = sphi 0, %s22
      %s25 = sphi 0, %s23
      %s26 = sphi 0, %s24
      %s27 = sphi 0, %s25
      %s39 = sphi 0, %s41
      %s42 = sphi 0, %s39
      %s43 = sphi 0, %s42
      %s59 = sphi 0, %s43
      %s67 = sphi 0, %s69
      %s70 = sphi 0, %s67
      %s71 = sphi 0, %s70
      %s87 = sphi 0, %s71
      %s91 = sphi 0, %s91
      %s93 = sphi 0, %s91
      %s94 = sphi 0, %s93
      %s108 = sphi 0, %s94
      %s112 = sphi 0, %s112
      %s114 = sphi 0, %s112
      %s115 = sphi 0, %s114
      %s129 = sphi 0, %s115
      %s133 = sphi 0, %s133
      %s135 = sphi 0, %s133
      %s136 = sphi 0, %s135
      %s150 = sphi 0, %s136
      %s154 = sphi 0, %s154
      %s156 = sphi 0, %s154
      %s157 = sphi 0, %s156
      %s171 = sphi 0, %s157
      %s179 = sphi 0, %s181
      %s182 = sphi 0, %s179
      %s183 = sphi 0, %s182
      %s199 = sphi 0, %s183
    $region4: #{tpu_custom_call.1} parent=1 // loop_header_branch
      %18 = sbr.rel (%p16) target = $region8
    $region5: #{tpu_custom_call.1} parent=1 // loop_body
      %s20 = ssub.s32 %s15, 1
      %s21 = ssub.s32 %s15, 2
      %s28 = sadd.s32 1, %s23
      %p29 = scmp.ge.s32.totalorder %s28, 1
      %s30 = scalar_select %p29, 0, %s28
      %s31 = sadd.s32 1, %s22
      %s32 = scalar_select %p29, %s31, %s22
      %p33 = scmp.ge.s32.totalorder %s32, 2
      %s34 = scalar_select %p33, 0, %s32
      %s35 = ssub.s32 %s22, %s34
      %s36 = ssub.s32 %s23, %s30
      %s37 = sor.u32 %s35, %s36
      %p38 = scmp.eq.s32.totalorder %s37, 0
      %s40 = sadd.s32 %s39, 1
      %s41 = scalar_select %p38, %s39, %s40
      %p44 = pneg %p38
      %p45 = scmp.eq.s32.totalorder %s15, 1
      %p46 = por %p44, %p45
      %p47 = scmp.ne.s32.totalorder %s39, %s42
      %p48 = scmp.eq.s32.totalorder %s15, 0
      %p49 = por %p47, %p48
      %p50 = scmp.ne.s32.totalorder %s39, %s42
      %p51 = scmp.eq.s32.totalorder %s20, 1
      %p52 = por %p50, %p51
      %p53 = scmp.ne.s32.totalorder %s42, %s43
      %p54 = scmp.eq.s32.totalorder %s20, 0
      %p55 = por %p53, %p54
      %p56 = scmp.ne.s32.totalorder %s42, %s43
      %p57 = scmp.eq.s32.totalorder %s21, 1
      %p58 = por %p56, %p57
      %p60 = scmp.ne.s32.totalorder %s43, %s59
      %p61 = scmp.eq.s32.totalorder %s21, 0
      %p62 = por %p60, %p61
      %s63 = ssub.s32 %s22, %s34
      %s64 = ssub.s32 %s23, %s30
      %s65 = sor.u32 %s63, %s64
      %p66 = scmp.eq.s32.totalorder %s65, 0
      %s68 = sadd.s32 %s67, 1
      %s69 = scalar_select %p66, %s67, %s68
      %p72 = pneg %p66
      %p73 = scmp.eq.s32.totalorder %s15, 1
      %p74 = por %p72, %p73
      %p75 = scmp.ne.s32.totalorder %s67, %s70
      %p76 = scmp.eq.s32.totalorder %s15, 0
      %p77 = por %p75, %p76
      %p78 = scmp.ne.s32.totalorder %s67, %s70
      %p79 = scmp.eq.s32.totalorder %s20, 1
      %p80 = por %p78, %p79
      %p81 = scmp.ne.s32.totalorder %s70, %s71
      %p82 = scmp.eq.s32.totalorder %s20, 0
      %p83 = por %p81, %p82
      %p84 = scmp.ne.s32.totalorder %s70, %s71
      %p85 = scmp.eq.s32.totalorder %s21, 1
      %p86 = por %p84, %p85
      %p88 = scmp.ne.s32.totalorder %s71, %s87
      %p89 = scmp.eq.s32.totalorder %s21, 0
      %p90 = por %p88, %p89
      %s92 = sadd.s32 %s91, 1
      %p95 = scmp.eq.s32.totalorder %s15, 1
      %p96 = scmp.ne.s32.totalorder %s91, %s93
      %p97 = scmp.eq.s32.totalorder %s15, 0
      %p98 = por %p96, %p97
      %p99 = scmp.ne.s32.totalorder %s91, %s93
      %p100 = scmp.eq.s32.totalorder %s20, 1
      %p101 = por %p99, %p100
      %p102 = scmp.ne.s32.totalorder %s93, %s94
      %p103 = scmp.eq.s32.totalorder %s20, 0
      %p104 = por %p102, %p103
      %p105 = scmp.ne.s32.totalorder %s93, %s94
      %p106 = scmp.eq.s32.totalorder %s21, 1
      %p107 = por %p105, %p106
      %p109 = scmp.ne.s32.totalorder %s94, %s108
      %p110 = scmp.eq.s32.totalorder %s21, 0
      %p111 = por %p109, %p110
      %s113 = sadd.s32 %s112, 1
      %p116 = scmp.eq.s32.totalorder %s15, 1
      %p117 = scmp.ne.s32.totalorder %s112, %s114
      %p118 = scmp.eq.s32.totalorder %s15, 0
      %p119 = por %p117, %p118
      %p120 = scmp.ne.s32.totalorder %s112, %s114
      %p121 = scmp.eq.s32.totalorder %s20, 1
      %p122 = por %p120, %p121
      %p123 = scmp.ne.s32.totalorder %s114, %s115
      %p124 = scmp.eq.s32.totalorder %s20, 0
      %p125 = por %p123, %p124
      %p126 = scmp.ne.s32.totalorder %s114, %s115
      %p127 = scmp.eq.s32.totalorder %s21, 1
      %p128 = por %p126, %p127
      %p130 = scmp.ne.s32.totalorder %s115, %s129
      %p131 = scmp.eq.s32.totalorder %s21, 0
      %p132 = por %p130, %p131
      %s134 = sadd.s32 %s133, 1
      %p137 = scmp.eq.s32.totalorder %s15, 1
      %p138 = scmp.ne.s32.totalorder %s133, %s135
      %p139 = scmp.eq.s32.totalorder %s15, 0
      %p140 = por %p138, %p139
      %p141 = scmp.ne.s32.totalorder %s133, %s135
      %p142 = scmp.eq.s32.totalorder %s20, 1
      %p143 = por %p141, %p142
      %p144 = scmp.ne.s32.totalorder %s135, %s136
      %p145 = scmp.eq.s32.totalorder %s20, 0
      %p146 = por %p144, %p145
      %p147 = scmp.ne.s32.totalorder %s135, %s136
      %p148 = scmp.eq.s32.totalorder %s21, 1
      %p149 = por %p147, %p148
      %p151 = scmp.ne.s32.totalorder %s136, %s150
      %p152 = scmp.eq.s32.totalorder %s21, 0
      %p153 = por %p151, %p152
      %s155 = sadd.s32 %s154, 1
      %p158 = scmp.eq.s32.totalorder %s15, 1
      %p159 = scmp.ne.s32.totalorder %s154, %s156
      %p160 = scmp.eq.s32.totalorder %s15, 0
      %p161 = por %p159, %p160
      %p162 = scmp.ne.s32.totalorder %s154, %s156
      %p163 = scmp.eq.s32.totalorder %s20, 1
      %p164 = por %p162, %p163
      %p165 = scmp.ne.s32.totalorder %s156, %s157
      %p166 = scmp.eq.s32.totalorder %s20, 0
      %p167 = por %p165, %p166
      %p168 = scmp.ne.s32.totalorder %s156, %s157
      %p169 = scmp.eq.s32.totalorder %s21, 1
      %p170 = por %p168, %p169
      %p172 = scmp.ne.s32.totalorder %s157, %s171
      %p173 = scmp.eq.s32.totalorder %s21, 0
      %p174 = por %p172, %p173
      %s175 = ssub.s32 %s22, %s34
      %s176 = ssub.s32 %s23, %s30
      %s177 = sor.u32 %s175, %s176
      %p178 = scmp.eq.s32.totalorder %s177, 0
      %s180 = sadd.s32 %s179, 1
      %s181 = scalar_select %p178, %s179, %s180
      %p184 = pneg %p178
      %p185 = scmp.eq.s32.totalorder %s15, 1
      %p186 = por %p184, %p185
      %p187 = scmp.ne.s32.totalorder %s179, %s182
      %p188 = scmp.eq.s32.totalorder %s15, 0
      %p189 = por %p187, %p188
      %p190 = scmp.ne.s32.totalorder %s179, %s182
      %p191 = scmp.eq.s32.totalorder %s20, 1
      %p192 = por %p190, %p191
      %p193 = scmp.ne.s32.totalorder %s182, %s183
      %p194 = scmp.eq.s32.totalorder %s20, 0
      %p195 = por %p193, %p194
      %p196 = scmp.ne.s32.totalorder %s182, %s183
      %p197 = scmp.eq.s32.totalorder %s21, 1
      %p198 = por %p196, %p197
      %p200 = scmp.ne.s32.totalorder %s183, %s199
      %p201 = scmp.eq.s32.totalorder %s21, 0
      %p202 = por %p200, %p201
      %p203 = scmp.le.s32.totalorder 1, %s15
      %p204 = scmp.lt.s32.totalorder %s15, 3
      %p205 = pnand %p203, %p204
      %p206 = pneg %p205
      // Predicated region
      $region9: #{tpu_custom_call.1} parent=5 // pred_check
        _
      $region10: #{tpu_custom_call.1} parent=5 // pred_check_branch
        %208 = sbr.rel (%p205) target = $region12
      $region11: #{tpu_custom_call.1} parent=5 // pred_region
        %s209 = ssub.s32 %s15, 1
        // Predicated region
        $region13: #{tpu_custom_call.1} parent=11 // pred_check
          %p210 = pneg %p104
        $region14: #{tpu_custom_call.1} parent=11 // pred_check_branch
          %212 = sbr.rel (%p210) target = $region16
        $region15: #{tpu_custom_call.1} parent=11 // pred_region
          _
        $region16: #{tpu_custom_call.1} parent=11 // pred_fallthru
          _
        // Predicated region
        $region17: #{tpu_custom_call.1} parent=11 // pred_check
          %p213 = pneg %p125
        $region18: #{tpu_custom_call.1} parent=11 // pred_check_branch
          %215 = sbr.rel (%p213) target = $region20
        $region19: #{tpu_custom_call.1} parent=11 // pred_region
          _
        $region20: #{tpu_custom_call.1} parent=11 // pred_fallthru
          _
        // Predicated region
        $region21: #{tpu_custom_call.1} parent=11 // pred_check
          %p216 = pneg %p146
        $region22: #{tpu_custom_call.1} parent=11 // pred_check_branch
          %218 = sbr.rel (%p216) target = $region24
        $region23: #{tpu_custom_call.1} parent=11 // pred_region
          _
        $region24: #{tpu_custom_call.1} parent=11 // pred_fallthru
          _
        // Predicated region
        $region25: #{tpu_custom_call.1} parent=11 // pred_check
          %p219 = pneg %p167
        $region26: #{tpu_custom_call.1} parent=11 // pred_check_branch
          %221 = sbr.rel (%p219) target = $region28
        $region27: #{tpu_custom_call.1} parent=11 // pred_region
          _
        $region28: #{tpu_custom_call.1} parent=11 // pred_fallthru
          _
      $region12: #{tpu_custom_call.1} parent=5 // pred_fallthru
        _
      %p222 = scmp.lt.s32.totalorder %s15, 2
      // Predicated region
      $region29: #{tpu_custom_call.1} parent=5 // pred_check
        %p223 = pneg %p222
      $region30: #{tpu_custom_call.1} parent=5 // pred_check_branch
        %225 = sbr.rel (%p223) target = $region32
      $region31: #{tpu_custom_call.1} parent=5 // pred_region
        // Predicated region
        $region33: #{tpu_custom_call.1} parent=31 // pred_check
          %p226 = pneg %p49
        $region34: #{tpu_custom_call.1} parent=31 // pred_check_branch
          %228 = sbr.rel (%p226) target = $region36
        $region35: #{tpu_custom_call.1} parent=31 // pred_region
          %s229 = smul.u32 64, %s23
          %p230 = scmp.lt.s32.totalorder %s22, 1
          %s231 = scalar_select %p230, %s22, 1
          %p232 = scmp.lt.s32.totalorder %s229, 63
          %s233 = scalar_select %p232, %s229, 63
          %s234 = smul.addr %s231, 64
          %s235 = sadd.s32 %s233, %s234
          %s236 = smul.addr %s235, 8
          %s237 = scalar_lea.vmem %s0, %s236
          %s238 = smul.u32 64, %s23
        $region36: #{tpu_custom_call.1} parent=31 // pred_fallthru
          _
        // Predicated region
        $region37: #{tpu_custom_call.1} parent=31 // pred_check
          %p239 = pneg %p77
        $region38: #{tpu_custom_call.1} parent=31 // pred_check_branch
          %241 = sbr.rel (%p239) target = $region40
        $region39: #{tpu_custom_call.1} parent=31 // pred_region
          %s242 = smul.u32 4, %s23
          %p243 = scmp.lt.s32.totalorder %s22, 1
          %s244 = scalar_select %p243, %s22, 1
          %p245 = scmp.lt.s32.totalorder %s242, 3
          %s246 = scalar_select %p245, %s242, 3
          %s247 = smul.addr %s244, 16
          %s248 = sadd.s32 %s246, %s247
          %s249 = smul.addr %s248, 8
          %s250 = scalar_lea.vmem %s1, %s249
          %s251 = smul.u32 4, %s23
        $region40: #{tpu_custom_call.1} parent=31 // pred_fallthru
          _
      $region32: #{tpu_custom_call.1} parent=5 // pred_fallthru
        _
      %p252 = scmp.le.s32.totalorder 1, %s15
      %p253 = scmp.lt.s32.totalorder %s15, 3
      %p254 = pnand %p252, %p253
      %p255 = pneg %p254
      // Predicated region
      $region41: #{tpu_custom_call.1} parent=5 // pred_check
        _
      $region42: #{tpu_custom_call.1} parent=5 // pred_check_branch
        %257 = sbr.rel (%p254) target = $region44
      $region43: #{tpu_custom_call.1} parent=5 // pred_region
        %s258 = ssub.s32 %s15, 1
        %s259 = smul.u32 64, %s25
        %p260 = scmp.lt.s32.totalorder %s24, 1
        %s261 = scalar_select %p260, %s24, 1
        %p262 = scmp.lt.s32.totalorder %s259, 63
        %s263 = scalar_select %p262, %s259, 63
        %s264 = smul.addr %s261, 64
        %s265 = sadd.s32 %s263, %s264
        %s266 = smul.addr %s265, 8
        %s267 = scalar_lea.vmem %s0, %s266
        %p268 = pneg %p55
        %p269 = pneg %p52
        %s270 = smul.u32 4, %s25
        %p271 = scmp.lt.s32.totalorder %s24, 1
        %s272 = scalar_select %p271, %s24, 1
        %p273 = scmp.lt.s32.totalorder %s270, 3
        %s274 = scalar_select %p273, %s270, 3
        %s275 = smul.addr %s272, 16
        %s276 = sadd.s32 %s274, %s275
        %s277 = smul.addr %s276, 8
        %s278 = scalar_lea.vmem %s1, %s277
        %p279 = pneg %p83
        %p280 = pneg %p80
        %p281 = pneg %p104
        %p282 = pneg %p101
        %p283 = pneg %p125
        %p284 = pneg %p122
        %p285 = pneg %p146
        %p286 = pneg %p143
        %p287 = pneg %p167
        %p288 = pneg %p164
        %p289 = pneg %p195
        %p290 = pneg %p192
        %s291 = sand.u32 %s182, 1
        %s292 = scalar_lea.sflag [#allocation3], %s291
        %s293 = sand.u32 %s182, 1
        %s294 = smul.addr %s293, 128
        %s295 = scalar_lea.vmem [#allocation2], %s294
        %s296 = smul.u32 64, %s25
        %p297 = scmp.lt.s32.totalorder %s24, 1
        %s298 = scalar_select %p297, %s24, 1
        %p299 = scmp.lt.s32.totalorder %s296, 63
        %s300 = scalar_select %p299, %s296, 63
        %s301 = smul.addr %s298, 64
        %s302 = sadd.s32 %s300, %s301
        %s303 = smul.addr %s302, 8
        %s304 = scalar_lea.vmem %s0, %s303
        %s305 = smul.u32 64, %s25
        %s306 = smul.u32 4, %s25
        %p307 = scmp.lt.s32.totalorder %s24, 1
        %s308 = scalar_select %p307, %s24, 1
        %p309 = scmp.lt.s32.totalorder %s306, 3
        %s310 = scalar_select %p309, %s306, 3
        %s311 = smul.addr %s308, 16
        %s312 = sadd.s32 %s310, %s311
        %s313 = smul.addr %s312, 8
        %s314 = scalar_lea.vmem %s1, %s313
        %s315 = smul.u32 4, %s25
        %s316 = smul.u32 4, %s25
        %v317 = vld [vmem:[%s304] sm:$0xff]
        %v318 = vld [vmem:[%s304 + $0x8] sm:$0xff]
        %v319 = vld [vmem:[%s304 + $0x10] sm:$0xff]
        %v320 = vld [vmem:[%s304 + $0x18] sm:$0xff]
        %v321 = vld [vmem:[%s304 + $0x20] sm:$0xff]
        %v322 = vld [vmem:[%s304 + $0x28] sm:$0xff]
        %v323 = vld [vmem:[%s304 + $0x30] sm:$0xff]
        %v324 = vld [vmem:[%s304 + $0x38] sm:$0xff]
        %v325 = vld [vmem:[%s304 + $0x40] sm:$0xff]
        %v326 = vld [vmem:[%s304 + $0x48] sm:$0xff]
        %v327 = vld [vmem:[%s304 + $0x50] sm:$0xff]
        %v328 = vld [vmem:[%s304 + $0x58] sm:$0xff]
        %v329 = vld [vmem:[%s304 + $0x60] sm:$0xff]
        %v330 = vld [vmem:[%s304 + $0x68] sm:$0xff]
        %v331 = vld [vmem:[%s304 + $0x70] sm:$0xff]
        %v332 = vld [vmem:[%s304 + $0x78] sm:$0xff]
        %v333 = vld [vmem:[%s304 + $0x80] sm:$0xff]
        %v334 = vld [vmem:[%s304 + $0x88] sm:$0xff]
        %v335 = vld [vmem:[%s304 + $0x90] sm:$0xff]
        %v336 = vld [vmem:[%s304 + $0x98] sm:$0xff]
        %v337 = vld [vmem:[%s304 + $0xa0] sm:$0xff]
        %v338 = vld [vmem:[%s304 + $0xa8] sm:$0xff]
        %v339 = vld [vmem:[%s304 + $0xb0] sm:$0xff]
        %v340 = vld [vmem:[%s304 + $0xb8] sm:$0xff]
        %v341 = vld [vmem:[%s304 + $0xc0] sm:$0xff]
        %v342 = vld [vmem:[%s304 + $0xc8] sm:$0xff]
        %v343 = vld [vmem:[%s304 + $0xd0] sm:$0xff]
        %v344 = vld [vmem:[%s304 + $0xd8] sm:$0xff]
        %v345 = vld [vmem:[%s304 + $0xe0] sm:$0xff]
        %v346 = vld [vmem:[%s304 + $0xe8] sm:$0xff]
        %v347 = vld [vmem:[%s304 + $0xf0] sm:$0xff]
        %v348 = vld [vmem:[%s304 + $0xf8] sm:$0xff]
        %v349 = vld [vmem:[%s304 + $0x100] sm:$0xff]
        %v350 = vld [vmem:[%s304 + $0x108] sm:$0xff]
        %v351 = vld [vmem:[%s304 + $0x110] sm:$0xff]
        %v352 = vld [vmem:[%s304 + $0x118] sm:$0xff]
        %v353 = vld [vmem:[%s304 + $0x120] sm:$0xff]
        %v354 = vld [vmem:[%s304 + $0x128] sm:$0xff]
        %v355 = vld [vmem:[%s304 + $0x130] sm:$0xff]
        %v356 = vld [vmem:[%s304 + $0x138] sm:$0xff]
        %v357 = vld [vmem:[%s304 + $0x140] sm:$0xff]
        %v358 = vld [vmem:[%s304 + $0x148] sm:$0xff]
        %v359 = vld [vmem:[%s304 + $0x150] sm:$0xff]
        %v360 = vld [vmem:[%s304 + $0x158] sm:$0xff]
        %v361 = vld [vmem:[%s304 + $0x160] sm:$0xff]
        %v362 = vld [vmem:[%s304 + $0x168] sm:$0xff]
        %v363 = vld [vmem:[%s304 + $0x170] sm:$0xff]
        %v364 = vld [vmem:[%s304 + $0x178] sm:$0xff]
        %v365 = vld [vmem:[%s304 + $0x180] sm:$0xff]
        %v366 = vld [vmem:[%s304 + $0x188] sm:$0xff]
        %v367 = vld [vmem:[%s304 + $0x190] sm:$0xff]
        %v368 = vld [vmem:[%s304 + $0x198] sm:$0xff]
        %v369 = vld [vmem:[%s304 + $0x1a0] sm:$0xff]
        %v370 = vld [vmem:[%s304 + $0x1a8] sm:$0xff]
        %v371 = vld [vmem:[%s304 + $0x1b0] sm:$0xff]
        %v372 = vld [vmem:[%s304 + $0x1b8] sm:$0xff]
        %v373 = vld [vmem:[%s304 + $0x1c0] sm:$0xff]
        %v374 = vld [vmem:[%s304 + $0x1c8] sm:$0xff]
        %v375 = vld [vmem:[%s304 + $0x1d0] sm:$0xff]
        %v376 = vld [vmem:[%s304 + $0x1d8] sm:$0xff]
        %v377 = vld [vmem:[%s304 + $0x1e0] sm:$0xff]
        %v378 = vld [vmem:[%s304 + $0x1e8] sm:$0xff]
        %v379 = vld [vmem:[%s304 + $0x1f0] sm:$0xff]
        %v380 = vld [vmem:[%s304 + $0x1f8] sm:$0xff]
        %381 = vxpose.xlu0.b32.start [1/16] %v317, 128
        %382 = vxpose.xlu0.b32.cont [2/16] %v318, 128
        %383 = vxpose.xlu0.b32.cont [3/16] %v319, 128
        %384 = vxpose.xlu0.b32.cont [4/16] %v320, 128
        %385 = vxpose.xlu0.b32.cont [5/16] %v321, 128
        %386 = vxpose.xlu0.b32.cont [6/16] %v322, 128
        %387 = vxpose.xlu0.b32.cont [7/16] %v323, 128
        %388 = vxpose.xlu0.b32.cont [8/16] %v324, 128
        %389 = vxpose.xlu0.b32.cont [9/16] %v325, 128
        %390 = vxpose.xlu0.b32.cont [10/16] %v326, 128
        %391 = vxpose.xlu0.b32.cont [11/16] %v327, 128
        %392 = vxpose.xlu0.b32.cont [12/16] %v328, 128
        %393 = vxpose.xlu0.b32.cont [13/16] %v329, 128
        %394 = vxpose.xlu0.b32.cont [14/16] %v330, 128
        %395 = vxpose.xlu0.b32.cont [15/16] %v331, 128
        %396 = vxpose.xlu0.b32.end [16/16] %v332, 128
        %v397 = vpop.trf.xlu0
        %v398 = vpop.trf.xlu0
        %v399 = vpop.trf.xlu0
        %v400 = vpop.trf.xlu0
        %v401 = vpop.trf.xlu0
        %v402 = vpop.trf.xlu0
        %v403 = vpop.trf.xlu0
        %v404 = vpop.trf.xlu0
        %v405 = vpop.trf.xlu0
        %v406 = vpop.trf.xlu0
        %v407 = vpop.trf.xlu0
        %v408 = vpop.trf.xlu0
        %v409 = vpop.trf.xlu0
        %v410 = vpop.trf.xlu0
        %v411 = vpop.trf.xlu0
        %v412 = vpop.trf.xlu0
        %413 = vxpose.xlu0.b32.start [1/16] %v333, 128
        %414 = vxpose.xlu0.b32.cont [2/16] %v334, 128
        %415 = vxpose.xlu0.b32.cont [3/16] %v335, 128
        %416 = vxpose.xlu0.b32.cont [4/16] %v336, 128
        %417 = vxpose.xlu0.b32.cont [5/16] %v337, 128
        %418 = vxpose.xlu0.b32.cont [6/16] %v338, 128
        %419 = vxpose.xlu0.b32.cont [7/16] %v339, 128
        %420 = vxpose.xlu0.b32.cont [8/16] %v340, 128
        %421 = vxpose.xlu0.b32.cont [9/16] %v341, 128
        %422 = vxpose.xlu0.b32.cont [10/16] %v342, 128
        %423 = vxpose.xlu0.b32.cont [11/16] %v343, 128
        %424 = vxpose.xlu0.b32.cont [12/16] %v344, 128
        %425 = vxpose.xlu0.b32.cont [13/16] %v345, 128
        %426 = vxpose.xlu0.b32.cont [14/16] %v346, 128
        %427 = vxpose.xlu0.b32.cont [15/16] %v347, 128
        %428 = vxpose.xlu0.b32.end [16/16] %v348, 128
        %v429 = vpop.trf.xlu0
        %v430 = vpop.trf.xlu0
        %v431 = vpop.trf.xlu0
        %v432 = vpop.trf.xlu0
        %v433 = vpop.trf.xlu0
        %v434 = vpop.trf.xlu0
        %v435 = vpop.trf.xlu0
        %v436 = vpop.trf.xlu0
        %v437 = vpop.trf.xlu0
        %v438 = vpop.trf.xlu0
        %v439 = vpop.trf.xlu0
        %v440 = vpop.trf.xlu0
        %v441 = vpop.trf.xlu0
        %v442 = vpop.trf.xlu0
        %v443 = vpop.trf.xlu0
        %v444 = vpop.trf.xlu0
        %445 = vxpose.xlu0.b32.start [1/16] %v349, 128
        %446 = vxpose.xlu0.b32.cont [2/16] %v350, 128
        %447 = vxpose.xlu0.b32.cont [3/16] %v351, 128
        %448 = vxpose.xlu0.b32.cont [4/16] %v352, 128
        %449 = vxpose.xlu0.b32.cont [5/16] %v353, 128
        %450 = vxpose.xlu0.b32.cont [6/16] %v354, 128
        %451 = vxpose.xlu0.b32.cont [7/16] %v355, 128
        %452 = vxpose.xlu0.b32.cont [8/16] %v356, 128
        %453 = vxpose.xlu0.b32.cont [9/16] %v357, 128
        %454 = vxpose.xlu0.b32.cont [10/16] %v358, 128
        %455 = vxpose.xlu0.b32.cont [11/16] %v359, 128
        %456 = vxpose.xlu0.b32.cont [12/16] %v360, 128
        %457 = vxpose.xlu0.b32.cont [13/16] %v361, 128
        %458 = vxpose.xlu0.b32.cont [14/16] %v362, 128
        %459 = vxpose.xlu0.b32.cont [15/16] %v363, 128
        %460 = vxpose.xlu0.b32.end [16/16] %v364, 128
        %v461 = vpop.trf.xlu0
        %v462 = vpop.trf.xlu0
        %v463 = vpop.trf.xlu0
        %v464 = vpop.trf.xlu0
        %v465 = vpop.trf.xlu0
        %v466 = vpop.trf.xlu0
        %v467 = vpop.trf.xlu0
        %v468 = vpop.trf.xlu0
        %v469 = vpop.trf.xlu0
        %v470 = vpop.trf.xlu0
        %v471 = vpop.trf.xlu0
        %v472 = vpop.trf.xlu0
        %v473 = vpop.trf.xlu0
        %v474 = vpop.trf.xlu0
        %v475 = vpop.trf.xlu0
        %v476 = vpop.trf.xlu0
        %477 = vxpose.xlu0.b32.start [1/16] %v365, 128
        %478 = vxpose.xlu0.b32.cont [2/16] %v366, 128
        %479 = vxpose.xlu0.b32.cont [3/16] %v367, 128
        %480 = vxpose.xlu0.b32.cont [4/16] %v368, 128
        %481 = vxpose.xlu0.b32.cont [5/16] %v369, 128
        %482 = vxpose.xlu0.b32.cont [6/16] %v370, 128
        %483 = vxpose.xlu0.b32.cont [7/16] %v371, 128
        %484 = vxpose.xlu0.b32.cont [8/16] %v372, 128
        %485 = vxpose.xlu0.b32.cont [9/16] %v373, 128
        %486 = vxpose.xlu0.b32.cont [10/16] %v374, 128
        %487 = vxpose.xlu0.b32.cont [11/16] %v375, 128
        %488 = vxpose.xlu0.b32.cont [12/16] %v376, 128
        %489 = vxpose.xlu0.b32.cont [13/16] %v377, 128
        %490 = vxpose.xlu0.b32.cont [14/16] %v378, 128
        %491 = vxpose.xlu0.b32.cont [15/16] %v379, 128
        %492 = vxpose.xlu0.b32.end [16/16] %v380, 128
        %v493 = vpop.trf.xlu0
        %v494 = vpop.trf.xlu0
        %v495 = vpop.trf.xlu0
        %v496 = vpop.trf.xlu0
        %v497 = vpop.trf.xlu0
        %v498 = vpop.trf.xlu0
        %v499 = vpop.trf.xlu0
        %v500 = vpop.trf.xlu0
        %v501 = vpop.trf.xlu0
        %v502 = vpop.trf.xlu0
        %v503 = vpop.trf.xlu0
        %v504 = vpop.trf.xlu0
        %v505 = vpop.trf.xlu0
        %v506 = vpop.trf.xlu0
        %v507 = vpop.trf.xlu0
        %v508 = vpop.trf.xlu0
        %v509 = vld [vmem:[%s314] sm:$0xff]
        %v510 = vld [vmem:[%s314 + $0x8] sm:$0xff]
        %v511 = vld [vmem:[%s314 + $0x10] sm:$0xff]
        %v512 = vld [vmem:[%s314 + $0x18] sm:$0xff]
        %v513 = vld [vmem:[%s314 + $0x20] sm:$0xff]
        %v514 = vld [vmem:[%s314 + $0x28] sm:$0xff]
        %v515 = vld [vmem:[%s314 + $0x30] sm:$0xff]
        %v516 = vld [vmem:[%s314 + $0x38] sm:$0xff]
        %v517 = vld [vmem:[%s314 + $0x40] sm:$0xff]
        %v518 = vld [vmem:[%s314 + $0x48] sm:$0xff]
        %v519 = vld [vmem:[%s314 + $0x50] sm:$0xff]
        %v520 = vld [vmem:[%s314 + $0x58] sm:$0xff]
        %v521 = vld [vmem:[%s314 + $0x60] sm:$0xff]
        %v522 = vld [vmem:[%s314 + $0x68] sm:$0xff]
        %v523 = vld [vmem:[%s314 + $0x70] sm:$0xff]
        %v524 = vld [vmem:[%s314 + $0x78] sm:$0xff]
        %v525 = vadd.f32 %v397, %v509
        %v526 = vadd.f32 %v429, %v510
        %v527 = vadd.f32 %v461, %v511
        %v528 = vadd.f32 %v493, %v512
        %v529 = vadd.f32 %v398, %v513
        %v530 = vadd.f32 %v430, %v514
        %v531 = vadd.f32 %v462, %v515
        %v532 = vadd.f32 %v494, %v516
        %v533 = vadd.f32 %v399, %v517
        %v534 = vadd.f32 %v431, %v518
        %v535 = vadd.f32 %v463, %v519
        %v536 = vadd.f32 %v495, %v520
        %v537 = vadd.f32 %v400, %v521
        %v538 = vadd.f32 %v432, %v522
        %v539 = vadd.f32 %v464, %v523
        %v540 = vadd.f32 %v496, %v524
        %v541 = vadd.f32 %v525, %v529
        %v542 = vadd.f32 %v541, %v533
        %v543 = vadd.f32 %v542, %v537
        %v544 = vrot.slane %v543, 4
        %v545 = vadd.f32 %v543, %v544
        %v546 = vrot.slane %v545, 2
        %v547 = vadd.f32 %v545, %v546
        %v548 = vrot.slane %v547, 1
        %v549 = vadd.f32 %v547, %v548
        %v550 = vadd.f32 %v526, %v530
        %v551 = vadd.f32 %v550, %v534
        %v552 = vadd.f32 %v551, %v538
        %v553 = vrot.slane %v552, 4
        %v554 = vadd.f32 %v552, %v553
        %v555 = vrot.slane %v554, 2
        %v556 = vadd.f32 %v554, %v555
        %v557 = vrot.slane %v556, 1
        %v558 = vadd.f32 %v556, %v557
        %v559 = vadd.f32 %v527, %v531
        %v560 = vadd.f32 %v559, %v535
        %v561 = vadd.f32 %v560, %v539
        %v562 = vrot.slane %v561, 4
        %v563 = vadd.f32 %v561, %v562
        %v564 = vrot.slane %v563, 2
        %v565 = vadd.f32 %v563, %v564
        %v566 = vrot.slane %v565, 1
        %v567 = vadd.f32 %v565, %v566
        %v568 = vadd.f32 %v528, %v532
        %v569 = vadd.f32 %v568, %v536
        %v570 = vadd.f32 %v569, %v540
        %v571 = vrot.slane %v570, 4
        %v572 = vadd.f32 %v570, %v571
        %v573 = vrot.slane %v572, 2
        %v574 = vadd.f32 %v572, %v573
        %v575 = vrot.slane %v574, 1
        %v576 = vadd.f32 %v574, %v575
        %v577 = vrcp.pop 32.0
        %v578 = vmul.f32 32.0, %v577
        %v579 = vsub.f32 1.0, %v578
        %v580 = vmul.f32 %v577, %v579
        %v581 = vadd.f32 %v577, %v580
        %vm582 = vweird.f32 %v577
        %v583 = vsel %vm582, %v577, %v581
        %v584 = vmul.f32 %v549, %v583
        %v585 = vmul.f32 %v558, %v583
        %v586 = vmul.f32 %v567, %v583
        %v587 = vmul.f32 %v576, %v583
        %v588 = vsub.f32 %v525, %v584
        %v589 = vsub.f32 %v526, %v585
        %v590 = vsub.f32 %v527, %v586
        %v591 = vsub.f32 %v528, %v587
        %v592 = vsub.f32 %v529, %v584
        %v593 = vsub.f32 %v530, %v585
        %v594 = vsub.f32 %v531, %v586
        %v595 = vsub.f32 %v532, %v587
        %v596 = vsub.f32 %v533, %v584
        %v597 = vsub.f32 %v534, %v585
        %v598 = vsub.f32 %v535, %v586
        %v599 = vsub.f32 %v536, %v587
        %v600 = vsub.f32 %v537, %v584
        %v601 = vsub.f32 %v538, %v585
        %v602 = vsub.f32 %v539, %v586
        %v603 = vsub.f32 %v540, %v587
        %v604 = vmul.f32 %v588, %v588
        %v605 = vmul.f32 %v589, %v589
        %v606 = vmul.f32 %v590, %v590
        %v607 = vmul.f32 %v591, %v591
        %v608 = vmul.f32 %v592, %v592
        %v609 = vmul.f32 %v593, %v593
        %v610 = vmul.f32 %v594, %v594
        %v611 = vmul.f32 %v595, %v595
        %v612 = vmul.f32 %v596, %v596
        %v613 = vmul.f32 %v597, %v597
        %v614 = vmul.f32 %v598, %v598
        %v615 = vmul.f32 %v599, %v599
        %v616 = vmul.f32 %v600, %v600
        %v617 = vmul.f32 %v601, %v601
        %v618 = vmul.f32 %v602, %v602
        %v619 = vmul.f32 %v603, %v603
        %v620 = vadd.f32 %v604, %v608
        %v621 = vadd.f32 %v620, %v612
        %v622 = vadd.f32 %v621, %v616
        %v623 = vrot.slane %v622, 4
        %v624 = vadd.f32 %v622, %v623
        %v625 = vrot.slane %v624, 2
        %v626 = vadd.f32 %v624, %v625
        %v627 = vrot.slane %v626, 1
        %v628 = vadd.f32 %v626, %v627
        %v629 = vadd.f32 %v605, %v609
        %v630 = vadd.f32 %v629, %v613
        %v631 = vadd.f32 %v630, %v617
        %v632 = vrot.slane %v631, 4
        %v633 = vadd.f32 %v631, %v632
        %v634 = vrot.slane %v633, 2
        %v635 = vadd.f32 %v633, %v634
        %v636 = vrot.slane %v635, 1
        %v637 = vadd.f32 %v635, %v636
        %v638 = vadd.f32 %v606, %v610
        %v639 = vadd.f32 %v638, %v614
        %v640 = vadd.f32 %v639, %v618
        %v641 = vrot.slane %v640, 4
        %v642 = vadd.f32 %v640, %v641
        %v643 = vrot.slane %v642, 2
        %v644 = vadd.f32 %v642, %v643
        %v645 = vrot.slane %v644, 1
        %v646 = vadd.f32 %v644, %v645
        %v647 = vadd.f32 %v607, %v611
        %v648 = vadd.f32 %v647, %v615
        %v649 = vadd.f32 %v648, %v619
        %v650 = vrot.slane %v649, 4
        %v651 = vadd.f32 %v649, %v650
        %v652 = vrot.slane %v651, 2
        %v653 = vadd.f32 %v651, %v652
        %v654 = vrot.slane %v653, 1
        %v655 = vadd.f32 %v653, %v654
        %v656 = vmul.f32 %v628, %v583
        %v657 = vmul.f32 %v637, %v583
        %v658 = vmul.f32 %v646, %v583
        %v659 = vmul.f32 %v655, %v583
        %v660 = vadd.f32 %v656, 1e-05
        %v661 = vadd.f32 %v657, 1e-05
        %v662 = vadd.f32 %v658, 1e-05
        %v663 = vadd.f32 %v659, 1e-05
        %v664 = vrsqrt.pop %v660
        %v665 = vmul.f32 %v664, %v660
        %v666 = vmul.f32 %v665, %v664
        %v667 = vmul.f32 0.5, %v666
        %v668 = vsub.f32 1.5, %v667
        %v669 = vmul.f32 %v664, %v668
        %vm670 = vweird.f32 %v660
        %vm671 = vweird.f32 %v664
        %vm672 = vmor %vm670, %vm671
        %v673 = vsel %vm672, %v664, %v669
        %v674 = vrsqrt.pop %v661
        %v675 = vmul.f32 %v674, %v661
        %v676 = vmul.f32 %v675, %v674
        %v677 = vmul.f32 0.5, %v676
        %v678 = vsub.f32 1.5, %v677
        %v679 = vmul.f32 %v674, %v678
        %vm680 = vweird.f32 %v661
        %vm681 = vweird.f32 %v674
        %vm682 = vmor %vm680, %vm681
        %v683 = vsel %vm682, %v674, %v679
        %v684 = vrsqrt.pop %v662
        %v685 = vmul.f32 %v684, %v662
        %v686 = vmul.f32 %v685, %v684
        %v687 = vmul.f32 0.5, %v686
        %v688 = vsub.f32 1.5, %v687
        %v689 = vmul.f32 %v684, %v688
        %vm690 = vweird.f32 %v662
        %vm691 = vweird.f32 %v684
        %vm692 = vmor %vm690, %vm691
        %v693 = vsel %vm692, %v684, %v689
        %v694 = vrsqrt.pop %v663
        %v695 = vmul.f32 %v694, %v663
        %v696 = vmul.f32 %v695, %v694
        %v697 = vmul.f32 0.5, %v696
        %v698 = vsub.f32 1.5, %v697
        %v699 = vmul.f32 %v694, %v698
        %vm700 = vweird.f32 %v663
        %vm701 = vweird.f32 %v694
        %vm702 = vmor %vm700, %vm701
        %v703 = vsel %vm702, %v694, %v699
        %v704 = vmul.f32 %v588, %v673
        %v705 = vmul.f32 %v589, %v683
        %v706 = vmul.f32 %v590, %v693
        %v707 = vmul.f32 %v591, %v703
        %v708 = vmul.f32 %v592, %v673
        %v709 = vmul.f32 %v593, %v683
        %v710 = vmul.f32 %v594, %v693
        %v711 = vmul.f32 %v595, %v703
        %v712 = vmul.f32 %v596, %v673
        %v713 = vmul.f32 %v597, %v683
        %v714 = vmul.f32 %v598, %v693
        %v715 = vmul.f32 %v599, %v703
        %v716 = vmul.f32 %v600, %v673
        %v717 = vmul.f32 %v601, %v683
        %v718 = vmul.f32 %v602, %v693
        %v719 = vmul.f32 %v603, %v703
        %v720 = vld [vmem:[%s2] sm:$0xff]
        %v721 = vld [vmem:[%s2 + $0x8] sm:$0xff]
        %v722 = vld [vmem:[%s2 + $0x10] sm:$0xff]
        %v723 = vld [vmem:[%s2 + $0x18] sm:$0xff]
        %v724 = vld [vmem:[%s2 + $0x20] sm:$0xff]
        %v725 = vld [vmem:[%s2 + $0x28] sm:$0xff]
        %v726 = vld [vmem:[%s2 + $0x30] sm:$0xff]
        %v727 = vld [vmem:[%s2 + $0x38] sm:$0xff]
        %v728 = vld [vmem:[%s2 + $0x40] sm:$0xff]
        %v729 = vld [vmem:[%s2 + $0x48] sm:$0xff]
        %v730 = vld [vmem:[%s2 + $0x50] sm:$0xff]
        %v731 = vld [vmem:[%s2 + $0x58] sm:$0xff]
        %v732 = vld [vmem:[%s2 + $0x60] sm:$0xff]
        %v733 = vld [vmem:[%s2 + $0x68] sm:$0xff]
        %v734 = vld [vmem:[%s2 + $0x70] sm:$0xff]
        %v735 = vld [vmem:[%s2 + $0x78] sm:$0xff]
        %v736 = vld [vmem:[%s3] sm:$0xff]
        %v737 = vld [vmem:[%s3 + $0x8] sm:$0xff]
        %v738 = vld [vmem:[%s3 + $0x10] sm:$0xff]
        %v739 = vld [vmem:[%s3 + $0x18] sm:$0xff]
        %v740 = vld [vmem:[%s3 + $0x20] sm:$0xff]
        %v741 = vld [vmem:[%s3 + $0x28] sm:$0xff]
        %v742 = vld [vmem:[%s3 + $0x30] sm:$0xff]
        %v743 = vld [vmem:[%s3 + $0x38] sm:$0xff]
        %v744 = vld [vmem:[%s3 + $0x40] sm:$0xff]
        %v745 = vld [vmem:[%s3 + $0x48] sm:$0xff]
        %v746 = vld [vmem:[%s3 + $0x50] sm:$0xff]
        %v747 = vld [vmem:[%s3 + $0x58] sm:$0xff]
        %v748 = vld [vmem:[%s3 + $0x60] sm:$0xff]
        %v749 = vld [vmem:[%s3 + $0x68] sm:$0xff]
        %v750 = vld [vmem:[%s3 + $0x70] sm:$0xff]
        %v751 = vld [vmem:[%s3 + $0x78] sm:$0xff]
        %753 = vset.pattern.permute.xlu0 0
        %754 = vperm.xlu0 %753, %v736
        %v755 = vpop.permute.xlu0 %754
        %758 = vset.pattern.permute.xlu0 0
        %759 = vperm.xlu0 %758, %v737
        %v760 = vpop.permute.xlu0 %759
        %763 = vset.pattern.permute.xlu0 0
        %764 = vperm.xlu0 %763, %v738
        %v765 = vpop.permute.xlu0 %764
        %768 = vset.pattern.permute.xlu0 0
        %769 = vperm.xlu0 %768, %v739
        %v770 = vpop.permute.xlu0 %769
        %773 = vset.pattern.permute.xlu0 0
        %774 = vperm.xlu0 %773, %v740
        %v775 = vpop.permute.xlu0 %774
        %778 = vset.pattern.permute.xlu0 0
        %779 = vperm.xlu0 %778, %v741
        %v780 = vpop.permute.xlu0 %779
        %783 = vset.pattern.permute.xlu0 0
        %784 = vperm.xlu0 %783, %v742
        %v785 = vpop.permute.xlu0 %784
        %788 = vset.pattern.permute.xlu0 0
        %789 = vperm.xlu0 %788, %v743
        %v790 = vpop.permute.xlu0 %789
        %793 = vset.pattern.permute.xlu0 0
        %794 = vperm.xlu0 %793, %v744
        %v795 = vpop.permute.xlu0 %794
        %798 = vset.pattern.permute.xlu0 0
        %799 = vperm.xlu0 %798, %v745
        %v800 = vpop.permute.xlu0 %799
        %803 = vset.pattern.permute.xlu0 0
        %804 = vperm.xlu0 %803, %v746
        %v805 = vpop.permute.xlu0 %804
        %808 = vset.pattern.permute.xlu0 0
        %809 = vperm.xlu0 %808, %v747
        %v810 = vpop.permute.xlu0 %809
        %813 = vset.pattern.permute.xlu0 0
        %814 = vperm.xlu0 %813, %v748
        %v815 = vpop.permute.xlu0 %814
        %818 = vset.pattern.permute.xlu0 0
        %819 = vperm.xlu0 %818, %v749
        %v820 = vpop.permute.xlu0 %819
        %823 = vset.pattern.permute.xlu0 0
        %824 = vperm.xlu0 %823, %v750
        %v825 = vpop.permute.xlu0 %824
        %828 = vset.pattern.permute.xlu0 0
        %829 = vperm.xlu0 %828, %v751
        %v830 = vpop.permute.xlu0 %829
        %vm832 = vcmask 261120
        %v834 = vsel %vm832, %v720, 0
        %v837 = vsel %vm832, %v721, 0
        %v840 = vsel %vm832, %v722, 0
        %v843 = vsel %vm832, %v723, 0
        %v846 = vsel %vm832, %v724, 0
        %v849 = vsel %vm832, %v725, 0
        %v852 = vsel %vm832, %v726, 0
        %v855 = vsel %vm832, %v727, 0
        %v858 = vsel %vm832, %v728, 0
        %v861 = vsel %vm832, %v729, 0
        %v864 = vsel %vm832, %v730, 0
        %v867 = vsel %vm832, %v731, 0
        %v870 = vsel %vm832, %v732, 0
        %v873 = vsel %vm832, %v733, 0
        %v876 = vsel %vm832, %v734, 0
        %v879 = vsel %vm832, %v735, 0
        %881 = vmatpush.msra.mxu0 0.0
        %882 = vmatpush.msra.mxu0 0.0
        %883 = vmatpush.msra.mxu0 0.0
        %884 = vmatpush.msra.mxu0 0.0
        %885 = vmatpush.msra.mxu0 0.0
        %886 = vmatpush.msra.mxu0 0.0
        %887 = vmatpush.msra.mxu0 0.0
        %888 = vmatpush.msra.mxu0 0.0
        %889 = vmatpush.msra.mxu0 0.0
        %890 = vmatpush.msra.mxu0 0.0
        %891 = vmatpush.msra.mxu0 0.0
        %892 = vmatpush.msra.mxu0 0.0
        %893 = vmatpush.msra.mxu0 %v716
        %894 = vmatpush.msra.mxu0 %v712
        %895 = vmatpush.msra.mxu0 %v708
        %896 = vmatpush.msra.mxu0 %v704
        %897 = vmatmul.f32.gmra.mxu0 %v834
        %v898 = vpop.f32.mrf.mxu0
        %v899 = vadd.f32 %v755, %v898
        %900 = vmatmul.f32.gmra.mxu0 %v837
        %v901 = vpop.f32.mrf.mxu0
        %v902 = vadd.f32 %v760, %v901
        %903 = vmatmul.f32.gmra.mxu0 %v840
        %v904 = vpop.f32.mrf.mxu0
        %v905 = vadd.f32 %v765, %v904
        %906 = vmatmul.f32.gmra.mxu0 %v843
        %v907 = vpop.f32.mrf.mxu0
        %v908 = vadd.f32 %v770, %v907
        %909 = vmatmul.f32.gmra.mxu0 %v846
        %v910 = vpop.f32.mrf.mxu0
        %v911 = vadd.f32 %v775, %v910
        %912 = vmatmul.f32.gmra.mxu0 %v849
        %v913 = vpop.f32.mrf.mxu0
        %v914 = vadd.f32 %v780, %v913
        %915 = vmatmul.f32.gmra.mxu0 %v852
        %v916 = vpop.f32.mrf.mxu0
        %v917 = vadd.f32 %v785, %v916
        %918 = vmatmul.f32.gmra.mxu0 %v855
        %v919 = vpop.f32.mrf.mxu0
        %v920 = vadd.f32 %v790, %v919
        %921 = vmatmul.f32.gmra.mxu0 %v858
        %v922 = vpop.f32.mrf.mxu0
        %v923 = vadd.f32 %v795, %v922
        %924 = vmatmul.f32.gmra.mxu0 %v861
        %v925 = vpop.f32.mrf.mxu0
        %v926 = vadd.f32 %v800, %v925
        %927 = vmatmul.f32.gmra.mxu0 %v864
        %v928 = vpop.f32.mrf.mxu0
        %v929 = vadd.f32 %v805, %v928
        %930 = vmatmul.f32.gmra.mxu0 %v867
        %v931 = vpop.f32.mrf.mxu0
        %v932 = vadd.f32 %v810, %v931
        %933 = vmatmul.f32.gmra.mxu0 %v870
        %v934 = vpop.f32.mrf.mxu0
        %v935 = vadd.f32 %v815, %v934
        %936 = vmatmul.f32.gmra.mxu0 %v873
        %v937 = vpop.f32.mrf.mxu0
        %v938 = vadd.f32 %v820, %v937
        %939 = vmatmul.f32.gmra.mxu0 %v876
        %v940 = vpop.f32.mrf.mxu0
        %v941 = vadd.f32 %v825, %v940
        %942 = vmatmul.f32.gmra.mxu0 %v879
        %v943 = vpop.f32.mrf.mxu0
        %v944 = vadd.f32 %v830, %v943
        %945 = vdwg.mxu0
        %946 = vmatpush.msra.mxu0 0.0
        %947 = vmatpush.msra.mxu0 0.0
        %948 = vmatpush.msra.mxu0 0.0
        %949 = vmatpush.msra.mxu0 0.0
        %950 = vmatpush.msra.mxu0 0.0
        %951 = vmatpush.msra.mxu0 0.0
        %952 = vmatpush.msra.mxu0 0.0
        %953 = vmatpush.msra.mxu0 0.0
        %954 = vmatpush.msra.mxu0 0.0
        %955 = vmatpush.msra.mxu0 0.0
        %956 = vmatpush.msra.mxu0 0.0
        %957 = vmatpush.msra.mxu0 0.0
        %958 = vmatpush.msra.mxu0 %v717
        %959 = vmatpush.msra.mxu0 %v713
        %960 = vmatpush.msra.mxu0 %v709
        %961 = vmatpush.msra.mxu0 %v705
        %962 = vmatmul.f32.gmra.mxu0 %v834
        %v963 = vpop.f32.mrf.mxu0
        %v964 = vadd.f32 %v755, %v963
        %965 = vmatmul.f32.gmra.mxu0 %v837
        %v966 = vpop.f32.mrf.mxu0
        %v967 = vadd.f32 %v760, %v966
        %968 = vmatmul.f32.gmra.mxu0 %v840
        %v969 = vpop.f32.mrf.mxu0
        %v970 = vadd.f32 %v765, %v969
        %971 = vmatmul.f32.gmra.mxu0 %v843
        %v972 = vpop.f32.mrf.mxu0
        %v973 = vadd.f32 %v770, %v972
        %974 = vmatmul.f32.gmra.mxu0 %v846
        %v975 = vpop.f32.mrf.mxu0
        %v976 = vadd.f32 %v775, %v975
        %977 = vmatmul.f32.gmra.mxu0 %v849
        %v978 = vpop.f32.mrf.mxu0
        %v979 = vadd.f32 %v780, %v978
        %980 = vmatmul.f32.gmra.mxu0 %v852
        %v981 = vpop.f32.mrf.mxu0
        %v982 = vadd.f32 %v785, %v981
        %983 = vmatmul.f32.gmra.mxu0 %v855
        %v984 = vpop.f32.mrf.mxu0
        %v985 = vadd.f32 %v790, %v984
        %986 = vmatmul.f32.gmra.mxu0 %v858
        %v987 = vpop.f32.mrf.mxu0
        %v988 = vadd.f32 %v795, %v987
        %989 = vmatmul.f32.gmra.mxu0 %v861
        %v990 = vpop.f32.mrf.mxu0
        %v991 = vadd.f32 %v800, %v990
        %992 = vmatmul.f32.gmra.mxu0 %v864
        %v993 = vpop.f32.mrf.mxu0
        %v994 = vadd.f32 %v805, %v993
        %995 = vmatmul.f32.gmra.mxu0 %v867
        %v996 = vpop.f32.mrf.mxu0
        %v997 = vadd.f32 %v810, %v996
        %998 = vmatmul.f32.gmra.mxu0 %v870
        %v999 = vpop.f32.mrf.mxu0
        %v1000 = vadd.f32 %v815, %v999
        %1001 = vmatmul.f32.gmra.mxu0 %v873
        %v1002 = vpop.f32.mrf.mxu0
        %v1003 = vadd.f32 %v820, %v1002
        %1004 = vmatmul.f32.gmra.mxu0 %v876
        %v1005 = vpop.f32.mrf.mxu0
        %v1006 = vadd.f32 %v825, %v1005
        %1007 = vmatmul.f32.gmra.mxu0 %v879
        %v1008 = vpop.f32.mrf.mxu0
        %v1009 = vadd.f32 %v830, %v1008
        %1010 = vdwg.mxu0
        %1011 = vmatpush.msra.mxu0 0.0
        %1012 = vmatpush.msra.mxu0 0.0
        %1013 = vmatpush.msra.mxu0 0.0
        %1014 = vmatpush.msra.mxu0 0.0
        %1015 = vmatpush.msra.mxu0 0.0
        %1016 = vmatpush.msra.mxu0 0.0
        %1017 = vmatpush.msra.mxu0 0.0
        %1018 = vmatpush.msra.mxu0 0.0
        %1019 = vmatpush.msra.mxu0 0.0
        %1020 = vmatpush.msra.mxu0 0.0
        %1021 = vmatpush.msra.mxu0 0.0
        %1022 = vmatpush.msra.mxu0 0.0
        %1023 = vmatpush.msra.mxu0 %v718
        %1024 = vmatpush.msra.mxu0 %v714
        %1025 = vmatpush.msra.mxu0 %v710
        %1026 = vmatpush.msra.mxu0 %v706
        %1027 = vmatmul.f32.gmra.mxu0 %v834
        %v1028 = vpop.f32.mrf.mxu0
        %v1029 = vadd.f32 %v755, %v1028
        %1030 = vmatmul.f32.gmra.mxu0 %v837
        %v1031 = vpop.f32.mrf.mxu0
        %v1032 = vadd.f32 %v760, %v1031
        %1033 = vmatmul.f32.gmra.mxu0 %v840
        %v1034 = vpop.f32.mrf.mxu0
        %v1035 = vadd.f32 %v765, %v1034
        %1036 = vmatmul.f32.gmra.mxu0 %v843
        %v1037 = vpop.f32.mrf.mxu0
        %v1038 = vadd.f32 %v770, %v1037
        %1039 = vmatmul.f32.gmra.mxu0 %v846
        %v1040 = vpop.f32.mrf.mxu0
        %v1041 = vadd.f32 %v775, %v1040
        %1042 = vmatmul.f32.gmra.mxu0 %v849
        %v1043 = vpop.f32.mrf.mxu0
        %v1044 = vadd.f32 %v780, %v1043
        %1045 = vmatmul.f32.gmra.mxu0 %v852
        %v1046 = vpop.f32.mrf.mxu0
        %v1047 = vadd.f32 %v785, %v1046
        %1048 = vmatmul.f32.gmra.mxu0 %v855
        %v1049 = vpop.f32.mrf.mxu0
        %v1050 = vadd.f32 %v790, %v1049
        %1051 = vmatmul.f32.gmra.mxu0 %v858
        %v1052 = vpop.f32.mrf.mxu0
        %v1053 = vadd.f32 %v795, %v1052
        %1054 = vmatmul.f32.gmra.mxu0 %v861
        %v1055 = vpop.f32.mrf.mxu0
        %v1056 = vadd.f32 %v800, %v1055
        %1057 = vmatmul.f32.gmra.mxu0 %v864
        %v1058 = vpop.f32.mrf.mxu0
        %v1059 = vadd.f32 %v805, %v1058
        %1060 = vmatmul.f32.gmra.mxu0 %v867
        %v1061 = vpop.f32.mrf.mxu0
        %v1062 = vadd.f32 %v810, %v1061
        %1063 = vmatmul.f32.gmra.mxu0 %v870
        %v1064 = vpop.f32.mrf.mxu0
        %v1065 = vadd.f32 %v815, %v1064
        %1066 = vmatmul.f32.gmra.mxu0 %v873
        %v1067 = vpop.f32.mrf.mxu0
        %v1068 = vadd.f32 %v820, %v1067
        %1069 = vmatmul.f32.gmra.mxu0 %v876
        %v1070 = vpop.f32.mrf.mxu0
        %v1071 = vadd.f32 %v825, %v1070
        %1072 = vmatmul.f32.gmra.mxu0 %v879
        %v1073 = vpop.f32.mrf.mxu0
        %v1074 = vadd.f32 %v830, %v1073
        %1075 = vdwg.mxu0
        %1076 = vmatpush.msra.mxu0 0.0
        %1077 = vmatpush.msra.mxu0 0.0
        %1078 = vmatpush.msra.mxu0 0.0
        %1079 = vmatpush.msra.mxu0 0.0
        %1080 = vmatpush.msra.mxu0 0.0
        %1081 = vmatpush.msra.mxu0 0.0
        %1082 = vmatpush.msra.mxu0 0.0
        %1083 = vmatpush.msra.mxu0 0.0
        %1084 = vmatpush.msra.mxu0 0.0
        %1085 = vmatpush.msra.mxu0 0.0
        %1086 = vmatpush.msra.mxu0 0.0
        %1087 = vmatpush.msra.mxu0 0.0
        %1088 = vmatpush.msra.mxu0 %v719
        %1089 = vmatpush.msra.mxu0 %v715
        %1090 = vmatpush.msra.mxu0 %v711
        %1091 = vmatpush.msra.mxu0 %v707
        %1092 = vmatmul.f32.gmra.mxu0 %v834
        %v1093 = vpop.f32.mrf.mxu0
        %v1094 = vadd.f32 %v755, %v1093
        %1095 = vmatmul.f32.gmra.mxu0 %v837
        %v1096 = vpop.f32.mrf.mxu0
        %v1097 = vadd.f32 %v760, %v1096
        %1098 = vmatmul.f32.gmra.mxu0 %v840
        %v1099 = vpop.f32.mrf.mxu0
        %v1100 = vadd.f32 %v765, %v1099
        %1101 = vmatmul.f32.gmra.mxu0 %v843
        %v1102 = vpop.f32.mrf.mxu0
        %v1103 = vadd.f32 %v770, %v1102
        %1104 = vmatmul.f32.gmra.mxu0 %v846
        %v1105 = vpop.f32.mrf.mxu0
        %v1106 = vadd.f32 %v775, %v1105
        %1107 = vmatmul.f32.gmra.mxu0 %v849
        %v1108 = vpop.f32.mrf.mxu0
        %v1109 = vadd.f32 %v780, %v1108
        %1110 = vmatmul.f32.gmra.mxu0 %v852
        %v1111 = vpop.f32.mrf.mxu0
        %v1112 = vadd.f32 %v785, %v1111
        %1113 = vmatmul.f32.gmra.mxu0 %v855
        %v1114 = vpop.f32.mrf.mxu0
        %v1115 = vadd.f32 %v790, %v1114
        %1116 = vmatmul.f32.gmra.mxu0 %v858
        %v1117 = vpop.f32.mrf.mxu0
        %v1118 = vadd.f32 %v795, %v1117
        %1119 = vmatmul.f32.gmra.mxu0 %v861
        %v1120 = vpop.f32.mrf.mxu0
        %v1121 = vadd.f32 %v800, %v1120
        %1122 = vmatmul.f32.gmra.mxu0 %v864
        %v1123 = vpop.f32.mrf.mxu0
        %v1124 = vadd.f32 %v805, %v1123
        %1125 = vmatmul.f32.gmra.mxu0 %v867
        %v1126 = vpop.f32.mrf.mxu0
        %v1127 = vadd.f32 %v810, %v1126
        %1128 = vmatmul.f32.gmra.mxu0 %v870
        %v1129 = vpop.f32.mrf.mxu0
        %v1130 = vadd.f32 %v815, %v1129
        %1131 = vmatmul.f32.gmra.mxu0 %v873
        %v1132 = vpop.f32.mrf.mxu0
        %v1133 = vadd.f32 %v820, %v1132
        %1134 = vmatmul.f32.gmra.mxu0 %v876
        %v1135 = vpop.f32.mrf.mxu0
        %v1136 = vadd.f32 %v825, %v1135
        %1137 = vmatmul.f32.gmra.mxu0 %v879
        %v1138 = vpop.f32.mrf.mxu0
        %v1139 = vadd.f32 %v830, %v1138
        %1140 = vdwg.mxu0
        %v1141 = vmul.f32 %v899, 0.5
        %v1142 = vmul.f32 %v964, 0.5
        %v1143 = vmul.f32 %v1029, 0.5
        %v1144 = vmul.f32 %v1094, 0.5
        %v1145 = vmul.f32 %v902, 0.5
        %v1146 = vmul.f32 %v967, 0.5
        %v1147 = vmul.f32 %v1032, 0.5
        %v1148 = vmul.f32 %v1097, 0.5
        %v1149 = vmul.f32 %v905, 0.5
        %v1150 = vmul.f32 %v970, 0.5
        %v1151 = vmul.f32 %v1035, 0.5
        %v1152 = vmul.f32 %v1100, 0.5
        %v1153 = vmul.f32 %v908, 0.5
        %v1154 = vmul.f32 %v973, 0.5
        %v1155 = vmul.f32 %v1038, 0.5
        %v1156 = vmul.f32 %v1103, 0.5
        %v1157 = vmul.f32 %v911, 0.5
        %v1158 = vmul.f32 %v976, 0.5
        %v1159 = vmul.f32 %v1041, 0.5
        %v1160 = vmul.f32 %v1106, 0.5
        %v1161 = vmul.f32 %v914, 0.5
        %v1162 = vmul.f32 %v979, 0.5
        %v1163 = vmul.f32 %v1044, 0.5
        %v1164 = vmul.f32 %v1109, 0.5
        %v1165 = vmul.f32 %v917, 0.5
        %v1166 = vmul.f32 %v982, 0.5
        %v1167 = vmul.f32 %v1047, 0.5
        %v1168 = vmul.f32 %v1112, 0.5
        %v1169 = vmul.f32 %v920, 0.5
        %v1170 = vmul.f32 %v985, 0.5
        %v1171 = vmul.f32 %v1050, 0.5
        %v1172 = vmul.f32 %v1115, 0.5
        %v1173 = vmul.f32 %v923, 0.5
        %v1174 = vmul.f32 %v988, 0.5
        %v1175 = vmul.f32 %v1053, 0.5
        %v1176 = vmul.f32 %v1118, 0.5
        %v1177 = vmul.f32 %v926, 0.5
        %v1178 = vmul.f32 %v991, 0.5
        %v1179 = vmul.f32 %v1056, 0.5
        %v1180 = vmul.f32 %v1121, 0.5
        %v1181 = vmul.f32 %v929, 0.5
        %v1182 = vmul.f32 %v994, 0.5
        %v1183 = vmul.f32 %v1059, 0.5
        %v1184 = vmul.f32 %v1124, 0.5
        %v1185 = vmul.f32 %v932, 0.5
        %v1186 = vmul.f32 %v997, 0.5
        %v1187 = vmul.f32 %v1062, 0.5
        %v1188 = vmul.f32 %v1127, 0.5
        %v1189 = vmul.f32 %v935, 0.5
        %v1190 = vmul.f32 %v1000, 0.5
        %v1191 = vmul.f32 %v1065, 0.5
        %v1192 = vmul.f32 %v1130, 0.5
        %v1193 = vmul.f32 %v938, 0.5
        %v1194 = vmul.f32 %v1003, 0.5
        %v1195 = vmul.f32 %v1068, 0.5
        %v1196 = vmul.f32 %v1133, 0.5
        %v1197 = vmul.f32 %v941, 0.5
        %v1198 = vmul.f32 %v1006, 0.5
        %v1199 = vmul.f32 %v1071, 0.5
        %v1200 = vmul.f32 %v1136, 0.5
        %v1201 = vmul.f32 %v944, 0.5
        %v1202 = vmul.f32 %v1009, 0.5
        %v1203 = vmul.f32 %v1074, 0.5
        %v1204 = vmul.f32 %v1139, 0.5
        %v1205 = vmul.f32 %v899, 0.70710677
        %v1206 = vmul.f32 %v964, 0.70710677
        %v1207 = vmul.f32 %v1029, 0.70710677
        %v1208 = vmul.f32 %v1094, 0.70710677
        %v1209 = vmul.f32 %v902, 0.70710677
        %v1210 = vmul.f32 %v967, 0.70710677
        %v1211 = vmul.f32 %v1032, 0.70710677
        %v1212 = vmul.f32 %v1097, 0.70710677
        %v1213 = vmul.f32 %v905, 0.70710677
        %v1214 = vmul.f32 %v970, 0.70710677
        %v1215 = vmul.f32 %v1035, 0.70710677
        %v1216 = vmul.f32 %v1100, 0.70710677
        %v1217 = vmul.f32 %v908, 0.70710677
        %v1218 = vmul.f32 %v973, 0.70710677
        %v1219 = vmul.f32 %v1038, 0.70710677
        %v1220 = vmul.f32 %v1103, 0.70710677
        %v1221 = vmul.f32 %v911, 0.70710677
        %v1222 = vmul.f32 %v976, 0.70710677
        %v1223 = vmul.f32 %v1041, 0.70710677
        %v1224 = vmul.f32 %v1106, 0.70710677
        %v1225 = vmul.f32 %v914, 0.70710677
        %v1226 = vmul.f32 %v979, 0.70710677
        %v1227 = vmul.f32 %v1044, 0.70710677
        %v1228 = vmul.f32 %v1109, 0.70710677
        %v1229 = vmul.f32 %v917, 0.70710677
        %v1230 = vmul.f32 %v982, 0.70710677
        %v1231 = vmul.f32 %v1047, 0.70710677
        %v1232 = vmul.f32 %v1112, 0.70710677
        %v1233 = vmul.f32 %v920, 0.70710677
        %v1234 = vmul.f32 %v985, 0.70710677
        %v1235 = vmul.f32 %v1050, 0.70710677
        %v1236 = vmul.f32 %v1115, 0.70710677
        %v1237 = vmul.f32 %v923, 0.70710677
        %v1238 = vmul.f32 %v988, 0.70710677
        %v1239 = vmul.f32 %v1053, 0.70710677
        %v1240 = vmul.f32 %v1118, 0.70710677
        %v1241 = vmul.f32 %v926, 0.70710677
        %v1242 = vmul.f32 %v991, 0.70710677
        %v1243 = vmul.f32 %v1056, 0.70710677
        %v1244 = vmul.f32 %v1121, 0.70710677
        %v1245 = vmul.f32 %v929, 0.70710677
        %v1246 = vmul.f32 %v994, 0.70710677
        %v1247 = vmul.f32 %v1059, 0.70710677
        %v1248 = vmul.f32 %v1124, 0.70710677
        %v1249 = vmul.f32 %v932, 0.70710677
        %v1250 = vmul.f32 %v997, 0.70710677
        %v1251 = vmul.f32 %v1062, 0.70710677
        %v1252 = vmul.f32 %v1127, 0.70710677
        %v1253 = vmul.f32 %v935, 0.70710677
        %v1254 = vmul.f32 %v1000, 0.70710677
        %v1255 = vmul.f32 %v1065, 0.70710677
        %v1256 = vmul.f32 %v1130, 0.70710677
        %v1257 = vmul.f32 %v938, 0.70710677
        %v1258 = vmul.f32 %v1003, 0.70710677
        %v1259 = vmul.f32 %v1068, 0.70710677
        %v1260 = vmul.f32 %v1133, 0.70710677
        %v1261 = vmul.f32 %v941, 0.70710677
        %v1262 = vmul.f32 %v1006, 0.70710677
        %v1263 = vmul.f32 %v1071, 0.70710677
        %v1264 = vmul.f32 %v1136, 0.70710677
        %v1265 = vmul.f32 %v944, 0.70710677
        %v1266 = vmul.f32 %v1009, 0.70710677
        %v1267 = vmul.f32 %v1074, 0.70710677
        %v1268 = vmul.f32 %v1139, 0.70710677
        %v1269 = vmul.f32 %v1205, %v1205
        %v1270 = vmin.f32 16.0, %v1269
        %v1271 = vmul.f32 %v1270, 2.1237322e-06
        %v1272 = vadd.f32 %v1271, 0.00028619796
        %v1273 = vmul.f32 %v1270, %v1272
        %v1274 = vadd.f32 %v1273, 0.0036580483
        %v1275 = vmul.f32 %v1270, %v1274
        %v1276 = vadd.f32 %v1275, 0.05243302
        %v1277 = vmul.f32 %v1270, %v1276
        %v1278 = vadd.f32 %v1277, 0.18741608
        %v1279 = vmul.f32 %v1270, %v1278
        %v1280 = vadd.f32 %v1279, 1.1283791
        %v1281 = vmul.f32 %v1205, %v1280
        %v1282 = vmul.f32 %v1270, 3.8918573e-05
        %v1283 = vadd.f32 %v1282, 0.001143296
        %v1284 = vmul.f32 %v1270, %v1283
        %v1285 = vadd.f32 %v1284, 0.014752088
        %v1286 = vmul.f32 %v1270, %v1285
        %v1287 = vadd.f32 %v1286, 0.112945676
        %v1288 = vmul.f32 %v1270, %v1287
        %v1289 = vadd.f32 %v1288, 0.4994258
        %v1290 = vmul.f32 %v1270, %v1289
        %v1291 = vadd.f32 %v1290, 1.0
        %v1292 = vrcp.pop %v1291
        %v1293 = vmul.f32 %v1291, %v1292
        %v1294 = vsub.f32 1.0, %v1293
        %v1295 = vmul.f32 %v1292, %v1294
        %v1296 = vadd.f32 %v1292, %v1295
        %vm1297 = vweird.f32 %v1291
        %vm1298 = vweird.f32 %v1292
        %vm1299 = vmor %vm1297, %vm1298
        %v1300 = vsel %vm1299, %v1292, %v1296
        %v1301 = vand.u32 2147483647, %v1291
        %vm1302 = vcmp.eq.f32.partialorder %v1301, 8.507059e+37
        %v1303 = vand.u32 %v1291, 2147483648
        %v1304 = vor.u32 1.1754944e-38, %v1303
        %v1305 = vsel %vm1302, %v1304, %v1300
        %v1306 = vmul.f32 %v1281, %v1305
        %v1307 = vmin.f32 %v1306, 1.0
        %v1308 = vmax.f32 %v1307, -1.0
        %v1309 = vmul.f32 %v1206, %v1206
        %v1310 = vmin.f32 16.0, %v1309
        %v1311 = vmul.f32 %v1310, 2.1237322e-06
        %v1312 = vadd.f32 %v1311, 0.00028619796
        %v1313 = vmul.f32 %v1310, %v1312
        %v1314 = vadd.f32 %v1313, 0.0036580483
        %v1315 = vmul.f32 %v1310, %v1314
        %v1316 = vadd.f32 %v1315, 0.05243302
        %v1317 = vmul.f32 %v1310, %v1316
        %v1318 = vadd.f32 %v1317, 0.18741608
        %v1319 = vmul.f32 %v1310, %v1318
        %v1320 = vadd.f32 %v1319, 1.1283791
        %v1321 = vmul.f32 %v1206, %v1320
        %v1322 = vmul.f32 %v1310, 3.8918573e-05
        %v1323 = vadd.f32 %v1322, 0.001143296
        %v1324 = vmul.f32 %v1310, %v1323
        %v1325 = vadd.f32 %v1324, 0.014752088
        %v1326 = vmul.f32 %v1310, %v1325
        %v1327 = vadd.f32 %v1326, 0.112945676
        %v1328 = vmul.f32 %v1310, %v1327
        %v1329 = vadd.f32 %v1328, 0.4994258
        %v1330 = vmul.f32 %v1310, %v1329
        %v1331 = vadd.f32 %v1330, 1.0
        %v1332 = vrcp.pop %v1331
        %v1333 = vmul.f32 %v1331, %v1332
        %v1334 = vsub.f32 1.0, %v1333
        %v1335 = vmul.f32 %v1332, %v1334
        %v1336 = vadd.f32 %v1332, %v1335
        %vm1337 = vweird.f32 %v1331
        %vm1338 = vweird.f32 %v1332
        %vm1339 = vmor %vm1337, %vm1338
        %v1340 = vsel %vm1339, %v1332, %v1336
        %v1341 = vand.u32 2147483647, %v1331
        %vm1342 = vcmp.eq.f32.partialorder %v1341, 8.507059e+37
        %v1343 = vand.u32 %v1331, 2147483648
        %v1344 = vor.u32 1.1754944e-38, %v1343
        %v1345 = vsel %vm1342, %v1344, %v1340
        %v1346 = vmul.f32 %v1321, %v1345
        %v1347 = vmin.f32 %v1346, 1.0
        %v1348 = vmax.f32 %v1347, -1.0
        %v1349 = vmul.f32 %v1207, %v1207
        %v1350 = vmin.f32 16.0, %v1349
        %v1351 = vmul.f32 %v1350, 2.1237322e-06
        %v1352 = vadd.f32 %v1351, 0.00028619796
        %v1353 = vmul.f32 %v1350, %v1352
        %v1354 = vadd.f32 %v1353, 0.0036580483
        %v1355 = vmul.f32 %v1350, %v1354
        %v1356 = vadd.f32 %v1355, 0.05243302
        %v1357 = vmul.f32 %v1350, %v1356
        %v1358 = vadd.f32 %v1357, 0.18741608
        %v1359 = vmul.f32 %v1350, %v1358
        %v1360 = vadd.f32 %v1359, 1.1283791
        %v1361 = vmul.f32 %v1207, %v1360
        %v1362 = vmul.f32 %v1350, 3.8918573e-05
        %v1363 = vadd.f32 %v1362, 0.001143296
        %v1364 = vmul.f32 %v1350, %v1363
        %v1365 = vadd.f32 %v1364, 0.014752088
        %v1366 = vmul.f32 %v1350, %v1365
        %v1367 = vadd.f32 %v1366, 0.112945676
        %v1368 = vmul.f32 %v1350, %v1367
        %v1369 = vadd.f32 %v1368, 0.4994258
        %v1370 = vmul.f32 %v1350, %v1369
        %v1371 = vadd.f32 %v1370, 1.0
        %v1372 = vrcp.pop %v1371
        %v1373 = vmul.f32 %v1371, %v1372
        %v1374 = vsub.f32 1.0, %v1373
        %v1375 = vmul.f32 %v1372, %v1374
        %v1376 = vadd.f32 %v1372, %v1375
        %vm1377 = vweird.f32 %v1371
        %vm1378 = vweird.f32 %v1372
        %vm1379 = vmor %vm1377, %vm1378
        %v1380 = vsel %vm1379, %v1372, %v1376
        %v1381 = vand.u32 2147483647, %v1371
        %vm1382 = vcmp.eq.f32.partialorder %v1381, 8.507059e+37
        %v1383 = vand.u32 %v1371, 2147483648
        %v1384 = vor.u32 1.1754944e-38, %v1383
        %v1385 = vsel %vm1382, %v1384, %v1380
        %v1386 = vmul.f32 %v1361, %v1385
        %v1387 = vmin.f32 %v1386, 1.0
        %v1388 = vmax.f32 %v1387, -1.0
        %v1389 = vmul.f32 %v1208, %v1208
        %v1390 = vmin.f32 16.0, %v1389
        %v1391 = vmul.f32 %v1390, 2.1237322e-06
        %v1392 = vadd.f32 %v1391, 0.00028619796
        %v1393 = vmul.f32 %v1390, %v1392
        %v1394 = vadd.f32 %v1393, 0.0036580483
        %v1395 = vmul.f32 %v1390, %v1394
        %v1396 = vadd.f32 %v1395, 0.05243302
        %v1397 = vmul.f32 %v1390, %v1396
        %v1398 = vadd.f32 %v1397, 0.18741608
        %v1399 = vmul.f32 %v1390, %v1398
        %v1400 = vadd.f32 %v1399, 1.1283791
        %v1401 = vmul.f32 %v1208, %v1400
        %v1402 = vmul.f32 %v1390, 3.8918573e-05
        %v1403 = vadd.f32 %v1402, 0.001143296
        %v1404 = vmul.f32 %v1390, %v1403
        %v1405 = vadd.f32 %v1404, 0.014752088
        %v1406 = vmul.f32 %v1390, %v1405
        %v1407 = vadd.f32 %v1406, 0.112945676
        %v1408 = vmul.f32 %v1390, %v1407
        %v1409 = vadd.f32 %v1408, 0.4994258
        %v1410 = vmul.f32 %v1390, %v1409
        %v1411 = vadd.f32 %v1410, 1.0
        %v1412 = vrcp.pop %v1411
        %v1413 = vmul.f32 %v1411, %v1412
        %v1414 = vsub.f32 1.0, %v1413
        %v1415 = vmul.f32 %v1412, %v1414
        %v1416 = vadd.f32 %v1412, %v1415
        %vm1417 = vweird.f32 %v1411
        %vm1418 = vweird.f32 %v1412
        %vm1419 = vmor %vm1417, %vm1418
        %v1420 = vsel %vm1419, %v1412, %v1416
        %v1421 = vand.u32 2147483647, %v1411
        %vm1422 = vcmp.eq.f32.partialorder %v1421, 8.507059e+37
        %v1423 = vand.u32 %v1411, 2147483648
        %v1424 = vor.u32 1.1754944e-38, %v1423
        %v1425 = vsel %vm1422, %v1424, %v1420
        %v1426 = vmul.f32 %v1401, %v1425
        %v1427 = vmin.f32 %v1426, 1.0
        %v1428 = vmax.f32 %v1427, -1.0
        %v1429 = vmul.f32 %v1209, %v1209
        %v1430 = vmin.f32 16.0, %v1429
        %v1431 = vmul.f32 %v1430, 2.1237322e-06
        %v1432 = vadd.f32 %v1431, 0.00028619796
        %v1433 = vmul.f32 %v1430, %v1432
        %v1434 = vadd.f32 %v1433, 0.0036580483
        %v1435 = vmul.f32 %v1430, %v1434
        %v1436 = vadd.f32 %v1435, 0.05243302
        %v1437 = vmul.f32 %v1430, %v1436
        %v1438 = vadd.f32 %v1437, 0.18741608
        %v1439 = vmul.f32 %v1430, %v1438
        %v1440 = vadd.f32 %v1439, 1.1283791
        %v1441 = vmul.f32 %v1209, %v1440
        %v1442 = vmul.f32 %v1430, 3.8918573e-05
        %v1443 = vadd.f32 %v1442, 0.001143296
        %v1444 = vmul.f32 %v1430, %v1443
        %v1445 = vadd.f32 %v1444, 0.014752088
        %v1446 = vmul.f32 %v1430, %v1445
        %v1447 = vadd.f32 %v1446, 0.112945676
        %v1448 = vmul.f32 %v1430, %v1447
        %v1449 = vadd.f32 %v1448, 0.4994258
        %v1450 = vmul.f32 %v1430, %v1449
        %v1451 = vadd.f32 %v1450, 1.0
        %v1452 = vrcp.pop %v1451
        %v1453 = vmul.f32 %v1451, %v1452
        %v1454 = vsub.f32 1.0, %v1453
        %v1455 = vmul.f32 %v1452, %v1454
        %v1456 = vadd.f32 %v1452, %v1455
        %vm1457 = vweird.f32 %v1451
        %vm1458 = vweird.f32 %v1452
        %vm1459 = vmor %vm1457, %vm1458
        %v1460 = vsel %vm1459, %v1452, %v1456
        %v1461 = vand.u32 2147483647, %v1451
        %vm1462 = vcmp.eq.f32.partialorder %v1461, 8.507059e+37
        %v1463 = vand.u32 %v1451, 2147483648
        %v1464 = vor.u32 1.1754944e-38, %v1463
        %v1465 = vsel %vm1462, %v1464, %v1460
        %v1466 = vmul.f32 %v1441, %v1465
        %v1467 = vmin.f32 %v1466, 1.0
        %v1468 = vmax.f32 %v1467, -1.0
        %v1469 = vmul.f32 %v1210, %v1210
        %v1470 = vmin.f32 16.0, %v1469
        %v1471 = vmul.f32 %v1470, 2.1237322e-06
        %v1472 = vadd.f32 %v1471, 0.00028619796
        %v1473 = vmul.f32 %v1470, %v1472
        %v1474 = vadd.f32 %v1473, 0.0036580483
        %v1475 = vmul.f32 %v1470, %v1474
        %v1476 = vadd.f32 %v1475, 0.05243302
        %v1477 = vmul.f32 %v1470, %v1476
        %v1478 = vadd.f32 %v1477, 0.18741608
        %v1479 = vmul.f32 %v1470, %v1478
        %v1480 = vadd.f32 %v1479, 1.1283791
        %v1481 = vmul.f32 %v1210, %v1480
        %v1482 = vmul.f32 %v1470, 3.8918573e-05
        %v1483 = vadd.f32 %v1482, 0.001143296
        %v1484 = vmul.f32 %v1470, %v1483
        %v1485 = vadd.f32 %v1484, 0.014752088
        %v1486 = vmul.f32 %v1470, %v1485
        %v1487 = vadd.f32 %v1486, 0.112945676
        %v1488 = vmul.f32 %v1470, %v1487
        %v1489 = vadd.f32 %v1488, 0.4994258
        %v1490 = vmul.f32 %v1470, %v1489
        %v1491 = vadd.f32 %v1490, 1.0
        %v1492 = vrcp.pop %v1491
        %v1493 = vmul.f32 %v1491, %v1492
        %v1494 = vsub.f32 1.0, %v1493
        %v1495 = vmul.f32 %v1492, %v1494
        %v1496 = vadd.f32 %v1492, %v1495
        %vm1497 = vweird.f32 %v1491
        %vm1498 = vweird.f32 %v1492
        %vm1499 = vmor %vm1497, %vm1498
        %v1500 = vsel %vm1499, %v1492, %v1496
        %v1501 = vand.u32 2147483647, %v1491
        %vm1502 = vcmp.eq.f32.partialorder %v1501, 8.507059e+37
        %v1503 = vand.u32 %v1491, 2147483648
        %v1504 = vor.u32 1.1754944e-38, %v1503
        %v1505 = vsel %vm1502, %v1504, %v1500
        %v1506 = vmul.f32 %v1481, %v1505
        %v1507 = vmin.f32 %v1506, 1.0
        %v1508 = vmax.f32 %v1507, -1.0
        %v1509 = vmul.f32 %v1211, %v1211
        %v1510 = vmin.f32 16.0, %v1509
        %v1511 = vmul.f32 %v1510, 2.1237322e-06
        %v1512 = vadd.f32 %v1511, 0.00028619796
        %v1513 = vmul.f32 %v1510, %v1512
        %v1514 = vadd.f32 %v1513, 0.0036580483
        %v1515 = vmul.f32 %v1510, %v1514
        %v1516 = vadd.f32 %v1515, 0.05243302
        %v1517 = vmul.f32 %v1510, %v1516
        %v1518 = vadd.f32 %v1517, 0.18741608
        %v1519 = vmul.f32 %v1510, %v1518
        %v1520 = vadd.f32 %v1519, 1.1283791
        %v1521 = vmul.f32 %v1211, %v1520
        %v1522 = vmul.f32 %v1510, 3.8918573e-05
        %v1523 = vadd.f32 %v1522, 0.001143296
        %v1524 = vmul.f32 %v1510, %v1523
        %v1525 = vadd.f32 %v1524, 0.014752088
        %v1526 = vmul.f32 %v1510, %v1525
        %v1527 = vadd.f32 %v1526, 0.112945676
        %v1528 = vmul.f32 %v1510, %v1527
        %v1529 = vadd.f32 %v1528, 0.4994258
        %v1530 = vmul.f32 %v1510, %v1529
        %v1531 = vadd.f32 %v1530, 1.0
        %v1532 = vrcp.pop %v1531
        %v1533 = vmul.f32 %v1531, %v1532
        %v1534 = vsub.f32 1.0, %v1533
        %v1535 = vmul.f32 %v1532, %v1534
        %v1536 = vadd.f32 %v1532, %v1535
        %vm1537 = vweird.f32 %v1531
        %vm1538 = vweird.f32 %v1532
        %vm1539 = vmor %vm1537, %vm1538
        %v1540 = vsel %vm1539, %v1532, %v1536
        %v1541 = vand.u32 2147483647, %v1531
        %vm1542 = vcmp.eq.f32.partialorder %v1541, 8.507059e+37
        %v1543 = vand.u32 %v1531, 2147483648
        %v1544 = vor.u32 1.1754944e-38, %v1543
        %v1545 = vsel %vm1542, %v1544, %v1540
        %v1546 = vmul.f32 %v1521, %v1545
        %v1547 = vmin.f32 %v1546, 1.0
        %v1548 = vmax.f32 %v1547, -1.0
        %v1549 = vmul.f32 %v1212, %v1212
        %v1550 = vmin.f32 16.0, %v1549
        %v1551 = vmul.f32 %v1550, 2.1237322e-06
        %v1552 = vadd.f32 %v1551, 0.00028619796
        %v1553 = vmul.f32 %v1550, %v1552
        %v1554 = vadd.f32 %v1553, 0.0036580483
        %v1555 = vmul.f32 %v1550, %v1554
        %v1556 = vadd.f32 %v1555, 0.05243302
        %v1557 = vmul.f32 %v1550, %v1556
        %v1558 = vadd.f32 %v1557, 0.18741608
        %v1559 = vmul.f32 %v1550, %v1558
        %v1560 = vadd.f32 %v1559, 1.1283791
        %v1561 = vmul.f32 %v1212, %v1560
        %v1562 = vmul.f32 %v1550, 3.8918573e-05
        %v1563 = vadd.f32 %v1562, 0.001143296
        %v1564 = vmul.f32 %v1550, %v1563
        %v1565 = vadd.f32 %v1564, 0.014752088
        %v1566 = vmul.f32 %v1550, %v1565
        %v1567 = vadd.f32 %v1566, 0.112945676
        %v1568 = vmul.f32 %v1550, %v1567
        %v1569 = vadd.f32 %v1568, 0.4994258
        %v1570 = vmul.f32 %v1550, %v1569
        %v1571 = vadd.f32 %v1570, 1.0
        %v1572 = vrcp.pop %v1571
        %v1573 = vmul.f32 %v1571, %v1572
        %v1574 = vsub.f32 1.0, %v1573
        %v1575 = vmul.f32 %v1572, %v1574
        %v1576 = vadd.f32 %v1572, %v1575
        %vm1577 = vweird.f32 %v1571
        %vm1578 = vweird.f32 %v1572
        %vm1579 = vmor %vm1577, %vm1578
        %v1580 = vsel %vm1579, %v1572, %v1576
        %v1581 = vand.u32 2147483647, %v1571
        %vm1582 = vcmp.eq.f32.partialorder %v1581, 8.507059e+37
        %v1583 = vand.u32 %v1571, 2147483648
        %v1584 = vor.u32 1.1754944e-38, %v1583
        %v1585 = vsel %vm1582, %v1584, %v1580
        %v1586 = vmul.f32 %v1561, %v1585
        %v1587 = vmin.f32 %v1586, 1.0
        %v1588 = vmax.f32 %v1587, -1.0
        %v1589 = vmul.f32 %v1213, %v1213
        %v1590 = vmin.f32 16.0, %v1589
        %v1591 = vmul.f32 %v1590, 2.1237322e-06
        %v1592 = vadd.f32 %v1591, 0.00028619796
        %v1593 = vmul.f32 %v1590, %v1592
        %v1594 = vadd.f32 %v1593, 0.0036580483
        %v1595 = vmul.f32 %v1590, %v1594
        %v1596 = vadd.f32 %v1595, 0.05243302
        %v1597 = vmul.f32 %v1590, %v1596
        %v1598 = vadd.f32 %v1597, 0.18741608
        %v1599 = vmul.f32 %v1590, %v1598
        %v1600 = vadd.f32 %v1599, 1.1283791
        %v1601 = vmul.f32 %v1213, %v1600
        %v1602 = vmul.f32 %v1590, 3.8918573e-05
        %v1603 = vadd.f32 %v1602, 0.001143296
        %v1604 = vmul.f32 %v1590, %v1603
        %v1605 = vadd.f32 %v1604, 0.014752088
        %v1606 = vmul.f32 %v1590, %v1605
        %v1607 = vadd.f32 %v1606, 0.112945676
        %v1608 = vmul.f32 %v1590, %v1607
        %v1609 = vadd.f32 %v1608, 0.4994258
        %v1610 = vmul.f32 %v1590, %v1609
        %v1611 = vadd.f32 %v1610, 1.0
        %v1612 = vrcp.pop %v1611
        %v1613 = vmul.f32 %v1611, %v1612
        %v1614 = vsub.f32 1.0, %v1613
        %v1615 = vmul.f32 %v1612, %v1614
        %v1616 = vadd.f32 %v1612, %v1615
        %vm1617 = vweird.f32 %v1611
        %vm1618 = vweird.f32 %v1612
        %vm1619 = vmor %vm1617, %vm1618
        %v1620 = vsel %vm1619, %v1612, %v1616
        %v1621 = vand.u32 2147483647, %v1611
        %vm1622 = vcmp.eq.f32.partialorder %v1621, 8.507059e+37
        %v1623 = vand.u32 %v1611, 2147483648
        %v1624 = vor.u32 1.1754944e-38, %v1623
        %v1625 = vsel %vm1622, %v1624, %v1620
        %v1626 = vmul.f32 %v1601, %v1625
        %v1627 = vmin.f32 %v1626, 1.0
        %v1628 = vmax.f32 %v1627, -1.0
        %v1629 = vmul.f32 %v1214, %v1214
        %v1630 = vmin.f32 16.0, %v1629
        %v1631 = vmul.f32 %v1630, 2.1237322e-06
        %v1632 = vadd.f32 %v1631, 0.00028619796
        %v1633 = vmul.f32 %v1630, %v1632
        %v1634 = vadd.f32 %v1633, 0.0036580483
        %v1635 = vmul.f32 %v1630, %v1634
        %v1636 = vadd.f32 %v1635, 0.05243302
        %v1637 = vmul.f32 %v1630, %v1636
        %v1638 = vadd.f32 %v1637, 0.18741608
        %v1639 = vmul.f32 %v1630, %v1638
        %v1640 = vadd.f32 %v1639, 1.1283791
        %v1641 = vmul.f32 %v1214, %v1640
        %v1642 = vmul.f32 %v1630, 3.8918573e-05
        %v1643 = vadd.f32 %v1642, 0.001143296
        %v1644 = vmul.f32 %v1630, %v1643
        %v1645 = vadd.f32 %v1644, 0.014752088
        %v1646 = vmul.f32 %v1630, %v1645
        %v1647 = vadd.f32 %v1646, 0.112945676
        %v1648 = vmul.f32 %v1630, %v1647
        %v1649 = vadd.f32 %v1648, 0.4994258
        %v1650 = vmul.f32 %v1630, %v1649
        %v1651 = vadd.f32 %v1650, 1.0
        %v1652 = vrcp.pop %v1651
        %v1653 = vmul.f32 %v1651, %v1652
        %v1654 = vsub.f32 1.0, %v1653
        %v1655 = vmul.f32 %v1652, %v1654
        %v1656 = vadd.f32 %v1652, %v1655
        %vm1657 = vweird.f32 %v1651
        %vm1658 = vweird.f32 %v1652
        %vm1659 = vmor %vm1657, %vm1658
        %v1660 = vsel %vm1659, %v1652, %v1656
        %v1661 = vand.u32 2147483647, %v1651
        %vm1662 = vcmp.eq.f32.partialorder %v1661, 8.507059e+37
        %v1663 = vand.u32 %v1651, 2147483648
        %v1664 = vor.u32 1.1754944e-38, %v1663
        %v1665 = vsel %vm1662, %v1664, %v1660
        %v1666 = vmul.f32 %v1641, %v1665
        %v1667 = vmin.f32 %v1666, 1.0
        %v1668 = vmax.f32 %v1667, -1.0
        %v1669 = vmul.f32 %v1215, %v1215
        %v1670 = vmin.f32 16.0, %v1669
        %v1671 = vmul.f32 %v1670, 2.1237322e-06
        %v1672 = vadd.f32 %v1671, 0.00028619796
        %v1673 = vmul.f32 %v1670, %v1672
        %v1674 = vadd.f32 %v1673, 0.0036580483
        %v1675 = vmul.f32 %v1670, %v1674
        %v1676 = vadd.f32 %v1675, 0.05243302
        %v1677 = vmul.f32 %v1670, %v1676
        %v1678 = vadd.f32 %v1677, 0.18741608
        %v1679 = vmul.f32 %v1670, %v1678
        %v1680 = vadd.f32 %v1679, 1.1283791
        %v1681 = vmul.f32 %v1215, %v1680
        %v1682 = vmul.f32 %v1670, 3.8918573e-05
        %v1683 = vadd.f32 %v1682, 0.001143296
        %v1684 = vmul.f32 %v1670, %v1683
        %v1685 = vadd.f32 %v1684, 0.014752088
        %v1686 = vmul.f32 %v1670, %v1685
        %v1687 = vadd.f32 %v1686, 0.112945676
        %v1688 = vmul.f32 %v1670, %v1687
        %v1689 = vadd.f32 %v1688, 0.4994258
        %v1690 = vmul.f32 %v1670, %v1689
        %v1691 = vadd.f32 %v1690, 1.0
        %v1692 = vrcp.pop %v1691
        %v1693 = vmul.f32 %v1691, %v1692
        %v1694 = vsub.f32 1.0, %v1693
        %v1695 = vmul.f32 %v1692, %v1694
        %v1696 = vadd.f32 %v1692, %v1695
        %vm1697 = vweird.f32 %v1691
        %vm1698 = vweird.f32 %v1692
        %vm1699 = vmor %vm1697, %vm1698
        %v1700 = vsel %vm1699, %v1692, %v1696
        %v1701 = vand.u32 2147483647, %v1691
        %vm1702 = vcmp.eq.f32.partialorder %v1701, 8.507059e+37
        %v1703 = vand.u32 %v1691, 2147483648
        %v1704 = vor.u32 1.1754944e-38, %v1703
        %v1705 = vsel %vm1702, %v1704, %v1700
        %v1706 = vmul.f32 %v1681, %v1705
        %v1707 = vmin.f32 %v1706, 1.0
        %v1708 = vmax.f32 %v1707, -1.0
        %v1709 = vmul.f32 %v1216, %v1216
        %v1710 = vmin.f32 16.0, %v1709
        %v1711 = vmul.f32 %v1710, 2.1237322e-06
        %v1712 = vadd.f32 %v1711, 0.00028619796
        %v1713 = vmul.f32 %v1710, %v1712
        %v1714 = vadd.f32 %v1713, 0.0036580483
        %v1715 = vmul.f32 %v1710, %v1714
        %v1716 = vadd.f32 %v1715, 0.05243302
        %v1717 = vmul.f32 %v1710, %v1716
        %v1718 = vadd.f32 %v1717, 0.18741608
        %v1719 = vmul.f32 %v1710, %v1718
        %v1720 = vadd.f32 %v1719, 1.1283791
        %v1721 = vmul.f32 %v1216, %v1720
        %v1722 = vmul.f32 %v1710, 3.8918573e-05
        %v1723 = vadd.f32 %v1722, 0.001143296
        %v1724 = vmul.f32 %v1710, %v1723
        %v1725 = vadd.f32 %v1724, 0.014752088
        %v1726 = vmul.f32 %v1710, %v1725
        %v1727 = vadd.f32 %v1726, 0.112945676
        %v1728 = vmul.f32 %v1710, %v1727
        %v1729 = vadd.f32 %v1728, 0.4994258
        %v1730 = vmul.f32 %v1710, %v1729
        %v1731 = vadd.f32 %v1730, 1.0
        %v1732 = vrcp.pop %v1731
        %v1733 = vmul.f32 %v1731, %v1732
        %v1734 = vsub.f32 1.0, %v1733
        %v1735 = vmul.f32 %v1732, %v1734
        %v1736 = vadd.f32 %v1732, %v1735
        %vm1737 = vweird.f32 %v1731
        %vm1738 = vweird.f32 %v1732
        %vm1739 = vmor %vm1737, %vm1738
        %v1740 = vsel %vm1739, %v1732, %v1736
        %v1741 = vand.u32 2147483647, %v1731
        %vm1742 = vcmp.eq.f32.partialorder %v1741, 8.507059e+37
        %v1743 = vand.u32 %v1731, 2147483648
        %v1744 = vor.u32 1.1754944e-38, %v1743
        %v1745 = vsel %vm1742, %v1744, %v1740
        %v1746 = vmul.f32 %v1721, %v1745
        %v1747 = vmin.f32 %v1746, 1.0
        %v1748 = vmax.f32 %v1747, -1.0
        %v1749 = vmul.f32 %v1217, %v1217
        %v1750 = vmin.f32 16.0, %v1749
        %v1751 = vmul.f32 %v1750, 2.1237322e-06
        %v1752 = vadd.f32 %v1751, 0.00028619796
        %v1753 = vmul.f32 %v1750, %v1752
        %v1754 = vadd.f32 %v1753, 0.0036580483
        %v1755 = vmul.f32 %v1750, %v1754
        %v1756 = vadd.f32 %v1755, 0.05243302
        %v1757 = vmul.f32 %v1750, %v1756
        %v1758 = vadd.f32 %v1757, 0.18741608
        %v1759 = vmul.f32 %v1750, %v1758
        %v1760 = vadd.f32 %v1759, 1.1283791
        %v1761 = vmul.f32 %v1217, %v1760
        %v1762 = vmul.f32 %v1750, 3.8918573e-05
        %v1763 = vadd.f32 %v1762, 0.001143296
        %v1764 = vmul.f32 %v1750, %v1763
        %v1765 = vadd.f32 %v1764, 0.014752088
        %v1766 = vmul.f32 %v1750, %v1765
        %v1767 = vadd.f32 %v1766, 0.112945676
        %v1768 = vmul.f32 %v1750, %v1767
        %v1769 = vadd.f32 %v1768, 0.4994258
        %v1770 = vmul.f32 %v1750, %v1769
        %v1771 = vadd.f32 %v1770, 1.0
        %v1772 = vrcp.pop %v1771
        %v1773 = vmul.f32 %v1771, %v1772
        %v1774 = vsub.f32 1.0, %v1773
        %v1775 = vmul.f32 %v1772, %v1774
        %v1776 = vadd.f32 %v1772, %v1775
        %vm1777 = vweird.f32 %v1771
        %vm1778 = vweird.f32 %v1772
        %vm1779 = vmor %vm1777, %vm1778
        %v1780 = vsel %vm1779, %v1772, %v1776
        %v1781 = vand.u32 2147483647, %v1771
        %vm1782 = vcmp.eq.f32.partialorder %v1781, 8.507059e+37
        %v1783 = vand.u32 %v1771, 2147483648
        %v1784 = vor.u32 1.1754944e-38, %v1783
        %v1785 = vsel %vm1782, %v1784, %v1780
        %v1786 = vmul.f32 %v1761, %v1785
        %v1787 = vmin.f32 %v1786, 1.0
        %v1788 = vmax.f32 %v1787, -1.0
        %v1789 = vmul.f32 %v1218, %v1218
        %v1790 = vmin.f32 16.0, %v1789
        %v1791 = vmul.f32 %v1790, 2.1237322e-06
        %v1792 = vadd.f32 %v1791, 0.00028619796
        %v1793 = vmul.f32 %v1790, %v1792
        %v1794 = vadd.f32 %v1793, 0.0036580483
        %v1795 = vmul.f32 %v1790, %v1794
        %v1796 = vadd.f32 %v1795, 0.05243302
        %v1797 = vmul.f32 %v1790, %v1796
        %v1798 = vadd.f32 %v1797, 0.18741608
        %v1799 = vmul.f32 %v1790, %v1798
        %v1800 = vadd.f32 %v1799, 1.1283791
        %v1801 = vmul.f32 %v1218, %v1800
        %v1802 = vmul.f32 %v1790, 3.8918573e-05
        %v1803 = vadd.f32 %v1802, 0.001143296
        %v1804 = vmul.f32 %v1790, %v1803
        %v1805 = vadd.f32 %v1804, 0.014752088
        %v1806 = vmul.f32 %v1790, %v1805
        %v1807 = vadd.f32 %v1806, 0.112945676
        %v1808 = vmul.f32 %v1790, %v1807
        %v1809 = vadd.f32 %v1808, 0.4994258
        %v1810 = vmul.f32 %v1790, %v1809
        %v1811 = vadd.f32 %v1810, 1.0
        %v1812 = vrcp.pop %v1811
        %v1813 = vmul.f32 %v1811, %v1812
        %v1814 = vsub.f32 1.0, %v1813
        %v1815 = vmul.f32 %v1812, %v1814
        %v1816 = vadd.f32 %v1812, %v1815
        %vm1817 = vweird.f32 %v1811
        %vm1818 = vweird.f32 %v1812
        %vm1819 = vmor %vm1817, %vm1818
        %v1820 = vsel %vm1819, %v1812, %v1816
        %v1821 = vand.u32 2147483647, %v1811
        %vm1822 = vcmp.eq.f32.partialorder %v1821, 8.507059e+37
        %v1823 = vand.u32 %v1811, 2147483648
        %v1824 = vor.u32 1.1754944e-38, %v1823
        %v1825 = vsel %vm1822, %v1824, %v1820
        %v1826 = vmul.f32 %v1801, %v1825
        %v1827 = vmin.f32 %v1826, 1.0
        %v1828 = vmax.f32 %v1827, -1.0
        %v1829 = vmul.f32 %v1219, %v1219
        %v1830 = vmin.f32 16.0, %v1829
        %v1831 = vmul.f32 %v1830, 2.1237322e-06
        %v1832 = vadd.f32 %v1831, 0.00028619796
        %v1833 = vmul.f32 %v1830, %v1832
        %v1834 = vadd.f32 %v1833, 0.0036580483
        %v1835 = vmul.f32 %v1830, %v1834
        %v1836 = vadd.f32 %v1835, 0.05243302
        %v1837 = vmul.f32 %v1830, %v1836
        %v1838 = vadd.f32 %v1837, 0.18741608
        %v1839 = vmul.f32 %v1830, %v1838
        %v1840 = vadd.f32 %v1839, 1.1283791
        %v1841 = vmul.f32 %v1219, %v1840
        %v1842 = vmul.f32 %v1830, 3.8918573e-05
        %v1843 = vadd.f32 %v1842, 0.001143296
        %v1844 = vmul.f32 %v1830, %v1843
        %v1845 = vadd.f32 %v1844, 0.014752088
        %v1846 = vmul.f32 %v1830, %v1845
        %v1847 = vadd.f32 %v1846, 0.112945676
        %v1848 = vmul.f32 %v1830, %v1847
        %v1849 = vadd.f32 %v1848, 0.4994258
        %v1850 = vmul.f32 %v1830, %v1849
        %v1851 = vadd.f32 %v1850, 1.0
        %v1852 = vrcp.pop %v1851
        %v1853 = vmul.f32 %v1851, %v1852
        %v1854 = vsub.f32 1.0, %v1853
        %v1855 = vmul.f32 %v1852, %v1854
        %v1856 = vadd.f32 %v1852, %v1855
        %vm1857 = vweird.f32 %v1851
        %vm1858 = vweird.f32 %v1852
        %vm1859 = vmor %vm1857, %vm1858
        %v1860 = vsel %vm1859, %v1852, %v1856
        %v1861 = vand.u32 2147483647, %v1851
        %vm1862 = vcmp.eq.f32.partialorder %v1861, 8.507059e+37
        %v1863 = vand.u32 %v1851, 2147483648
        %v1864 = vor.u32 1.1754944e-38, %v1863
        %v1865 = vsel %vm1862, %v1864, %v1860
        %v1866 = vmul.f32 %v1841, %v1865
        %v1867 = vmin.f32 %v1866, 1.0
        %v1868 = vmax.f32 %v1867, -1.0
        %v1869 = vmul.f32 %v1220, %v1220
        %v1870 = vmin.f32 16.0, %v1869
        %v1871 = vmul.f32 %v1870, 2.1237322e-06
        %v1872 = vadd.f32 %v1871, 0.00028619796
        %v1873 = vmul.f32 %v1870, %v1872
        %v1874 = vadd.f32 %v1873, 0.0036580483
        %v1875 = vmul.f32 %v1870, %v1874
        %v1876 = vadd.f32 %v1875, 0.05243302
        %v1877 = vmul.f32 %v1870, %v1876
        %v1878 = vadd.f32 %v1877, 0.18741608
        %v1879 = vmul.f32 %v1870, %v1878
        %v1880 = vadd.f32 %v1879, 1.1283791
        %v1881 = vmul.f32 %v1220, %v1880
        %v1882 = vmul.f32 %v1870, 3.8918573e-05
        %v1883 = vadd.f32 %v1882, 0.001143296
        %v1884 = vmul.f32 %v1870, %v1883
        %v1885 = vadd.f32 %v1884, 0.014752088
        %v1886 = vmul.f32 %v1870, %v1885
        %v1887 = vadd.f32 %v1886, 0.112945676
        %v1888 = vmul.f32 %v1870, %v1887
        %v1889 = vadd.f32 %v1888, 0.4994258
        %v1890 = vmul.f32 %v1870, %v1889
        %v1891 = vadd.f32 %v1890, 1.0
        %v1892 = vrcp.pop %v1891
        %v1893 = vmul.f32 %v1891, %v1892
        %v1894 = vsub.f32 1.0, %v1893
        %v1895 = vmul.f32 %v1892, %v1894
        %v1896 = vadd.f32 %v1892, %v1895
        %vm1897 = vweird.f32 %v1891
        %vm1898 = vweird.f32 %v1892
        %vm1899 = vmor %vm1897, %vm1898
        %v1900 = vsel %vm1899, %v1892, %v1896
        %v1901 = vand.u32 2147483647, %v1891
        %vm1902 = vcmp.eq.f32.partialorder %v1901, 8.507059e+37
        %v1903 = vand.u32 %v1891, 2147483648
        %v1904 = vor.u32 1.1754944e-38, %v1903
        %v1905 = vsel %vm1902, %v1904, %v1900
        %v1906 = vmul.f32 %v1881, %v1905
        %v1907 = vmin.f32 %v1906, 1.0
        %v1908 = vmax.f32 %v1907, -1.0
        %v1909 = vmul.f32 %v1221, %v1221
        %v1910 = vmin.f32 16.0, %v1909
        %v1911 = vmul.f32 %v1910, 2.1237322e-06
        %v1912 = vadd.f32 %v1911, 0.00028619796
        %v1913 = vmul.f32 %v1910, %v1912
        %v1914 = vadd.f32 %v1913, 0.0036580483
        %v1915 = vmul.f32 %v1910, %v1914
        %v1916 = vadd.f32 %v1915, 0.05243302
        %v1917 = vmul.f32 %v1910, %v1916
        %v1918 = vadd.f32 %v1917, 0.18741608
        %v1919 = vmul.f32 %v1910, %v1918
        %v1920 = vadd.f32 %v1919, 1.1283791
        %v1921 = vmul.f32 %v1221, %v1920
        %v1922 = vmul.f32 %v1910, 3.8918573e-05
        %v1923 = vadd.f32 %v1922, 0.001143296
        %v1924 = vmul.f32 %v1910, %v1923
        %v1925 = vadd.f32 %v1924, 0.014752088
        %v1926 = vmul.f32 %v1910, %v1925
        %v1927 = vadd.f32 %v1926, 0.112945676
        %v1928 = vmul.f32 %v1910, %v1927
        %v1929 = vadd.f32 %v1928, 0.4994258
        %v1930 = vmul.f32 %v1910, %v1929
        %v1931 = vadd.f32 %v1930, 1.0
        %v1932 = vrcp.pop %v1931
        %v1933 = vmul.f32 %v1931, %v1932
        %v1934 = vsub.f32 1.0, %v1933
        %v1935 = vmul.f32 %v1932, %v1934
        %v1936 = vadd.f32 %v1932, %v1935
        %vm1937 = vweird.f32 %v1931
        %vm1938 = vweird.f32 %v1932
        %vm1939 = vmor %vm1937, %vm1938
        %v1940 = vsel %vm1939, %v1932, %v1936
        %v1941 = vand.u32 2147483647, %v1931
        %vm1942 = vcmp.eq.f32.partialorder %v1941, 8.507059e+37
        %v1943 = vand.u32 %v1931, 2147483648
        %v1944 = vor.u32 1.1754944e-38, %v1943
        %v1945 = vsel %vm1942, %v1944, %v1940
        %v1946 = vmul.f32 %v1921, %v1945
        %v1947 = vmin.f32 %v1946, 1.0
        %v1948 = vmax.f32 %v1947, -1.0
        %v1949 = vmul.f32 %v1222, %v1222
        %v1950 = vmin.f32 16.0, %v1949
        %v1951 = vmul.f32 %v1950, 2.1237322e-06
        %v1952 = vadd.f32 %v1951, 0.00028619796
        %v1953 = vmul.f32 %v1950, %v1952
        %v1954 = vadd.f32 %v1953, 0.0036580483
        %v1955 = vmul.f32 %v1950, %v1954
        %v1956 = vadd.f32 %v1955, 0.05243302
        %v1957 = vmul.f32 %v1950, %v1956
        %v1958 = vadd.f32 %v1957, 0.18741608
        %v1959 = vmul.f32 %v1950, %v1958
        %v1960 = vadd.f32 %v1959, 1.1283791
        %v1961 = vmul.f32 %v1222, %v1960
        %v1962 = vmul.f32 %v1950, 3.8918573e-05
        %v1963 = vadd.f32 %v1962, 0.001143296
        %v1964 = vmul.f32 %v1950, %v1963
        %v1965 = vadd.f32 %v1964, 0.014752088
        %v1966 = vmul.f32 %v1950, %v1965
        %v1967 = vadd.f32 %v1966, 0.112945676
        %v1968 = vmul.f32 %v1950, %v1967
        %v1969 = vadd.f32 %v1968, 0.4994258
        %v1970 = vmul.f32 %v1950, %v1969
        %v1971 = vadd.f32 %v1970, 1.0
        %v1972 = vrcp.pop %v1971
        %v1973 = vmul.f32 %v1971, %v1972
        %v1974 = vsub.f32 1.0, %v1973
        %v1975 = vmul.f32 %v1972, %v1974
        %v1976 = vadd.f32 %v1972, %v1975
        %vm1977 = vweird.f32 %v1971
        %vm1978 = vweird.f32 %v1972
        %vm1979 = vmor %vm1977, %vm1978
        %v1980 = vsel %vm1979, %v1972, %v1976
        %v1981 = vand.u32 2147483647, %v1971
        %vm1982 = vcmp.eq.f32.partialorder %v1981, 8.507059e+37
        %v1983 = vand.u32 %v1971, 2147483648
        %v1984 = vor.u32 1.1754944e-38, %v1983
        %v1985 = vsel %vm1982, %v1984, %v1980
        %v1986 = vmul.f32 %v1961, %v1985
        %v1987 = vmin.f32 %v1986, 1.0
        %v1988 = vmax.f32 %v1987, -1.0
        %v1989 = vmul.f32 %v1223, %v1223
        %v1990 = vmin.f32 16.0, %v1989
        %v1991 = vmul.f32 %v1990, 2.1237322e-06
        %v1992 = vadd.f32 %v1991, 0.00028619796
        %v1993 = vmul.f32 %v1990, %v1992
        %v1994 = vadd.f32 %v1993, 0.0036580483
        %v1995 = vmul.f32 %v1990, %v1994
        %v1996 = vadd.f32 %v1995, 0.05243302
        %v1997 = vmul.f32 %v1990, %v1996
        %v1998 = vadd.f32 %v1997, 0.18741608
        %v1999 = vmul.f32 %v1990, %v1998
        %v2000 = vadd.f32 %v1999, 1.1283791
        %v2001 = vmul.f32 %v1223, %v2000
        %v2002 = vmul.f32 %v1990, 3.8918573e-05
        %v2003 = vadd.f32 %v2002, 0.001143296
        %v2004 = vmul.f32 %v1990, %v2003
        %v2005 = vadd.f32 %v2004, 0.014752088
        %v2006 = vmul.f32 %v1990, %v2005
        %v2007 = vadd.f32 %v2006, 0.112945676
        %v2008 = vmul.f32 %v1990, %v2007
        %v2009 = vadd.f32 %v2008, 0.4994258
        %v2010 = vmul.f32 %v1990, %v2009
        %v2011 = vadd.f32 %v2010, 1.0
        %v2012 = vrcp.pop %v2011
        %v2013 = vmul.f32 %v2011, %v2012
        %v2014 = vsub.f32 1.0, %v2013
        %v2015 = vmul.f32 %v2012, %v2014
        %v2016 = vadd.f32 %v2012, %v2015
        %vm2017 = vweird.f32 %v2011
        %vm2018 = vweird.f32 %v2012
        %vm2019 = vmor %vm2017, %vm2018
        %v2020 = vsel %vm2019, %v2012, %v2016
        %v2021 = vand.u32 2147483647, %v2011
        %vm2022 = vcmp.eq.f32.partialorder %v2021, 8.507059e+37
        %v2023 = vand.u32 %v2011, 2147483648
        %v2024 = vor.u32 1.1754944e-38, %v2023
        %v2025 = vsel %vm2022, %v2024, %v2020
        %v2026 = vmul.f32 %v2001, %v2025
        %v2027 = vmin.f32 %v2026, 1.0
        %v2028 = vmax.f32 %v2027, -1.0
        %v2029 = vmul.f32 %v1224, %v1224
        %v2030 = vmin.f32 16.0, %v2029
        %v2031 = vmul.f32 %v2030, 2.1237322e-06
        %v2032 = vadd.f32 %v2031, 0.00028619796
        %v2033 = vmul.f32 %v2030, %v2032
        %v2034 = vadd.f32 %v2033, 0.0036580483
        %v2035 = vmul.f32 %v2030, %v2034
        %v2036 = vadd.f32 %v2035, 0.05243302
        %v2037 = vmul.f32 %v2030, %v2036
        %v2038 = vadd.f32 %v2037, 0.18741608
        %v2039 = vmul.f32 %v2030, %v2038
        %v2040 = vadd.f32 %v2039, 1.1283791
        %v2041 = vmul.f32 %v1224, %v2040
        %v2042 = vmul.f32 %v2030, 3.8918573e-05
        %v2043 = vadd.f32 %v2042, 0.001143296
        %v2044 = vmul.f32 %v2030, %v2043
        %v2045 = vadd.f32 %v2044, 0.014752088
        %v2046 = vmul.f32 %v2030, %v2045
        %v2047 = vadd.f32 %v2046, 0.112945676
        %v2048 = vmul.f32 %v2030, %v2047
        %v2049 = vadd.f32 %v2048, 0.4994258
        %v2050 = vmul.f32 %v2030, %v2049
        %v2051 = vadd.f32 %v2050, 1.0
        %v2052 = vrcp.pop %v2051
        %v2053 = vmul.f32 %v2051, %v2052
        %v2054 = vsub.f32 1.0, %v2053
        %v2055 = vmul.f32 %v2052, %v2054
        %v2056 = vadd.f32 %v2052, %v2055
        %vm2057 = vweird.f32 %v2051
        %vm2058 = vweird.f32 %v2052
        %vm2059 = vmor %vm2057, %vm2058
        %v2060 = vsel %vm2059, %v2052, %v2056
        %v2061 = vand.u32 2147483647, %v2051
        %vm2062 = vcmp.eq.f32.partialorder %v2061, 8.507059e+37
        %v2063 = vand.u32 %v2051, 2147483648
        %v2064 = vor.u32 1.1754944e-38, %v2063
        %v2065 = vsel %vm2062, %v2064, %v2060
        %v2066 = vmul.f32 %v2041, %v2065
        %v2067 = vmin.f32 %v2066, 1.0
        %v2068 = vmax.f32 %v2067, -1.0
        %v2069 = vmul.f32 %v1225, %v1225
        %v2070 = vmin.f32 16.0, %v2069
        %v2071 = vmul.f32 %v2070, 2.1237322e-06
        %v2072 = vadd.f32 %v2071, 0.00028619796
        %v2073 = vmul.f32 %v2070, %v2072
        %v2074 = vadd.f32 %v2073, 0.0036580483
        %v2075 = vmul.f32 %v2070, %v2074
        %v2076 = vadd.f32 %v2075, 0.05243302
        %v2077 = vmul.f32 %v2070, %v2076
        %v2078 = vadd.f32 %v2077, 0.18741608
        %v2079 = vmul.f32 %v2070, %v2078
        %v2080 = vadd.f32 %v2079, 1.1283791
        %v2081 = vmul.f32 %v1225, %v2080
        %v2082 = vmul.f32 %v2070, 3.8918573e-05
        %v2083 = vadd.f32 %v2082, 0.001143296
        %v2084 = vmul.f32 %v2070, %v2083
        %v2085 = vadd.f32 %v2084, 0.014752088
        %v2086 = vmul.f32 %v2070, %v2085
        %v2087 = vadd.f32 %v2086, 0.112945676
        %v2088 = vmul.f32 %v2070, %v2087
        %v2089 = vadd.f32 %v2088, 0.4994258
        %v2090 = vmul.f32 %v2070, %v2089
        %v2091 = vadd.f32 %v2090, 1.0
        %v2092 = vrcp.pop %v2091
        %v2093 = vmul.f32 %v2091, %v2092
        %v2094 = vsub.f32 1.0, %v2093
        %v2095 = vmul.f32 %v2092, %v2094
        %v2096 = vadd.f32 %v2092, %v2095
        %vm2097 = vweird.f32 %v2091
        %vm2098 = vweird.f32 %v2092
        %vm2099 = vmor %vm2097, %vm2098
        %v2100 = vsel %vm2099, %v2092, %v2096
        %v2101 = vand.u32 2147483647, %v2091
        %vm2102 = vcmp.eq.f32.partialorder %v2101, 8.507059e+37
        %v2103 = vand.u32 %v2091, 2147483648
        %v2104 = vor.u32 1.1754944e-38, %v2103
        %v2105 = vsel %vm2102, %v2104, %v2100
        %v2106 = vmul.f32 %v2081, %v2105
        %v2107 = vmin.f32 %v2106, 1.0
        %v2108 = vmax.f32 %v2107, -1.0
        %v2109 = vmul.f32 %v1226, %v1226
        %v2110 = vmin.f32 16.0, %v2109
        %v2111 = vmul.f32 %v2110, 2.1237322e-06
        %v2112 = vadd.f32 %v2111, 0.00028619796
        %v2113 = vmul.f32 %v2110, %v2112
        %v2114 = vadd.f32 %v2113, 0.0036580483
        %v2115 = vmul.f32 %v2110, %v2114
        %v2116 = vadd.f32 %v2115, 0.05243302
        %v2117 = vmul.f32 %v2110, %v2116
        %v2118 = vadd.f32 %v2117, 0.18741608
        %v2119 = vmul.f32 %v2110, %v2118
        %v2120 = vadd.f32 %v2119, 1.1283791
        %v2121 = vmul.f32 %v1226, %v2120
        %v2122 = vmul.f32 %v2110, 3.8918573e-05
        %v2123 = vadd.f32 %v2122, 0.001143296
        %v2124 = vmul.f32 %v2110, %v2123
        %v2125 = vadd.f32 %v2124, 0.014752088
        %v2126 = vmul.f32 %v2110, %v2125
        %v2127 = vadd.f32 %v2126, 0.112945676
        %v2128 = vmul.f32 %v2110, %v2127
        %v2129 = vadd.f32 %v2128, 0.4994258
        %v2130 = vmul.f32 %v2110, %v2129
        %v2131 = vadd.f32 %v2130, 1.0
        %v2132 = vrcp.pop %v2131
        %v2133 = vmul.f32 %v2131, %v2132
        %v2134 = vsub.f32 1.0, %v2133
        %v2135 = vmul.f32 %v2132, %v2134
        %v2136 = vadd.f32 %v2132, %v2135
        %vm2137 = vweird.f32 %v2131
        %vm2138 = vweird.f32 %v2132
        %vm2139 = vmor %vm2137, %vm2138
        %v2140 = vsel %vm2139, %v2132, %v2136
        %v2141 = vand.u32 2147483647, %v2131
        %vm2142 = vcmp.eq.f32.partialorder %v2141, 8.507059e+37
        %v2143 = vand.u32 %v2131, 2147483648
        %v2144 = vor.u32 1.1754944e-38, %v2143
        %v2145 = vsel %vm2142, %v2144, %v2140
        %v2146 = vmul.f32 %v2121, %v2145
        %v2147 = vmin.f32 %v2146, 1.0
        %v2148 = vmax.f32 %v2147, -1.0
        %v2149 = vmul.f32 %v1227, %v1227
        %v2150 = vmin.f32 16.0, %v2149
        %v2151 = vmul.f32 %v2150, 2.1237322e-06
        %v2152 = vadd.f32 %v2151, 0.00028619796
        %v2153 = vmul.f32 %v2150, %v2152
        %v2154 = vadd.f32 %v2153, 0.0036580483
        %v2155 = vmul.f32 %v2150, %v2154
        %v2156 = vadd.f32 %v2155, 0.05243302
        %v2157 = vmul.f32 %v2150, %v2156
        %v2158 = vadd.f32 %v2157, 0.18741608
        %v2159 = vmul.f32 %v2150, %v2158
        %v2160 = vadd.f32 %v2159, 1.1283791
        %v2161 = vmul.f32 %v1227, %v2160
        %v2162 = vmul.f32 %v2150, 3.8918573e-05
        %v2163 = vadd.f32 %v2162, 0.001143296
        %v2164 = vmul.f32 %v2150, %v2163
        %v2165 = vadd.f32 %v2164, 0.014752088
        %v2166 = vmul.f32 %v2150, %v2165
        %v2167 = vadd.f32 %v2166, 0.112945676
        %v2168 = vmul.f32 %v2150, %v2167
        %v2169 = vadd.f32 %v2168, 0.4994258
        %v2170 = vmul.f32 %v2150, %v2169
        %v2171 = vadd.f32 %v2170, 1.0
        %v2172 = vrcp.pop %v2171
        %v2173 = vmul.f32 %v2171, %v2172
        %v2174 = vsub.f32 1.0, %v2173
        %v2175 = vmul.f32 %v2172, %v2174
        %v2176 = vadd.f32 %v2172, %v2175
        %vm2177 = vweird.f32 %v2171
        %vm2178 = vweird.f32 %v2172
        %vm2179 = vmor %vm2177, %vm2178
        %v2180 = vsel %vm2179, %v2172, %v2176
        %v2181 = vand.u32 2147483647, %v2171
        %vm2182 = vcmp.eq.f32.partialorder %v2181, 8.507059e+37
        %v2183 = vand.u32 %v2171, 2147483648
        %v2184 = vor.u32 1.1754944e-38, %v2183
        %v2185 = vsel %vm2182, %v2184, %v2180
        %v2186 = vmul.f32 %v2161, %v2185
        %v2187 = vmin.f32 %v2186, 1.0
        %v2188 = vmax.f32 %v2187, -1.0
        %v2189 = vmul.f32 %v1228, %v1228
        %v2190 = vmin.f32 16.0, %v2189
        %v2191 = vmul.f32 %v2190, 2.1237322e-06
        %v2192 = vadd.f32 %v2191, 0.00028619796
        %v2193 = vmul.f32 %v2190, %v2192
        %v2194 = vadd.f32 %v2193, 0.0036580483
        %v2195 = vmul.f32 %v2190, %v2194
        %v2196 = vadd.f32 %v2195, 0.05243302
        %v2197 = vmul.f32 %v2190, %v2196
        %v2198 = vadd.f32 %v2197, 0.18741608
        %v2199 = vmul.f32 %v2190, %v2198
        %v2200 = vadd.f32 %v2199, 1.1283791
        %v2201 = vmul.f32 %v1228, %v2200
        %v2202 = vmul.f32 %v2190, 3.8918573e-05
        %v2203 = vadd.f32 %v2202, 0.001143296
        %v2204 = vmul.f32 %v2190, %v2203
        %v2205 = vadd.f32 %v2204, 0.014752088
        %v2206 = vmul.f32 %v2190, %v2205
        %v2207 = vadd.f32 %v2206, 0.112945676
        %v2208 = vmul.f32 %v2190, %v2207
        %v2209 = vadd.f32 %v2208, 0.4994258
        %v2210 = vmul.f32 %v2190, %v2209
        %v2211 = vadd.f32 %v2210, 1.0
        %v2212 = vrcp.pop %v2211
        %v2213 = vmul.f32 %v2211, %v2212
        %v2214 = vsub.f32 1.0, %v2213
        %v2215 = vmul.f32 %v2212, %v2214
        %v2216 = vadd.f32 %v2212, %v2215
        %vm2217 = vweird.f32 %v2211
        %vm2218 = vweird.f32 %v2212
        %vm2219 = vmor %vm2217, %vm2218
        %v2220 = vsel %vm2219, %v2212, %v2216
        %v2221 = vand.u32 2147483647, %v2211
        %vm2222 = vcmp.eq.f32.partialorder %v2221, 8.507059e+37
        %v2223 = vand.u32 %v2211, 2147483648
        %v2224 = vor.u32 1.1754944e-38, %v2223
        %v2225 = vsel %vm2222, %v2224, %v2220
        %v2226 = vmul.f32 %v2201, %v2225
        %v2227 = vmin.f32 %v2226, 1.0
        %v2228 = vmax.f32 %v2227, -1.0
        %v2229 = vmul.f32 %v1229, %v1229
        %v2230 = vmin.f32 16.0, %v2229
        %v2231 = vmul.f32 %v2230, 2.1237322e-06
        %v2232 = vadd.f32 %v2231, 0.00028619796
        %v2233 = vmul.f32 %v2230, %v2232
        %v2234 = vadd.f32 %v2233, 0.0036580483
        %v2235 = vmul.f32 %v2230, %v2234
        %v2236 = vadd.f32 %v2235, 0.05243302
        %v2237 = vmul.f32 %v2230, %v2236
        %v2238 = vadd.f32 %v2237, 0.18741608
        %v2239 = vmul.f32 %v2230, %v2238
        %v2240 = vadd.f32 %v2239, 1.1283791
        %v2241 = vmul.f32 %v1229, %v2240
        %v2242 = vmul.f32 %v2230, 3.8918573e-05
        %v2243 = vadd.f32 %v2242, 0.001143296
        %v2244 = vmul.f32 %v2230, %v2243
        %v2245 = vadd.f32 %v2244, 0.014752088
        %v2246 = vmul.f32 %v2230, %v2245
        %v2247 = vadd.f32 %v2246, 0.112945676
        %v2248 = vmul.f32 %v2230, %v2247
        %v2249 = vadd.f32 %v2248, 0.4994258
        %v2250 = vmul.f32 %v2230, %v2249
        %v2251 = vadd.f32 %v2250, 1.0
        %v2252 = vrcp.pop %v2251
        %v2253 = vmul.f32 %v2251, %v2252
        %v2254 = vsub.f32 1.0, %v2253
        %v2255 = vmul.f32 %v2252, %v2254
        %v2256 = vadd.f32 %v2252, %v2255
        %vm2257 = vweird.f32 %v2251
        %vm2258 = vweird.f32 %v2252
        %vm2259 = vmor %vm2257, %vm2258
        %v2260 = vsel %vm2259, %v2252, %v2256
        %v2261 = vand.u32 2147483647, %v2251
        %vm2262 = vcmp.eq.f32.partialorder %v2261, 8.507059e+37
        %v2263 = vand.u32 %v2251, 2147483648
        %v2264 = vor.u32 1.1754944e-38, %v2263
        %v2265 = vsel %vm2262, %v2264, %v2260
        %v2266 = vmul.f32 %v2241, %v2265
        %v2267 = vmin.f32 %v2266, 1.0
        %v2268 = vmax.f32 %v2267, -1.0
        %v2269 = vmul.f32 %v1230, %v1230
        %v2270 = vmin.f32 16.0, %v2269
        %v2271 = vmul.f32 %v2270, 2.1237322e-06
        %v2272 = vadd.f32 %v2271, 0.00028619796
        %v2273 = vmul.f32 %v2270, %v2272
        %v2274 = vadd.f32 %v2273, 0.0036580483
        %v2275 = vmul.f32 %v2270, %v2274
        %v2276 = vadd.f32 %v2275, 0.05243302
        %v2277 = vmul.f32 %v2270, %v2276
        %v2278 = vadd.f32 %v2277, 0.18741608
        %v2279 = vmul.f32 %v2270, %v2278
        %v2280 = vadd.f32 %v2279, 1.1283791
        %v2281 = vmul.f32 %v1230, %v2280
        %v2282 = vmul.f32 %v2270, 3.8918573e-05
        %v2283 = vadd.f32 %v2282, 0.001143296
        %v2284 = vmul.f32 %v2270, %v2283
        %v2285 = vadd.f32 %v2284, 0.014752088
        %v2286 = vmul.f32 %v2270, %v2285
        %v2287 = vadd.f32 %v2286, 0.112945676
        %v2288 = vmul.f32 %v2270, %v2287
        %v2289 = vadd.f32 %v2288, 0.4994258
        %v2290 = vmul.f32 %v2270, %v2289
        %v2291 = vadd.f32 %v2290, 1.0
        %v2292 = vrcp.pop %v2291
        %v2293 = vmul.f32 %v2291, %v2292
        %v2294 = vsub.f32 1.0, %v2293
        %v2295 = vmul.f32 %v2292, %v2294
        %v2296 = vadd.f32 %v2292, %v2295
        %vm2297 = vweird.f32 %v2291
        %vm2298 = vweird.f32 %v2292
        %vm2299 = vmor %vm2297, %vm2298
        %v2300 = vsel %vm2299, %v2292, %v2296
        %v2301 = vand.u32 2147483647, %v2291
        %vm2302 = vcmp.eq.f32.partialorder %v2301, 8.507059e+37
        %v2303 = vand.u32 %v2291, 2147483648
        %v2304 = vor.u32 1.1754944e-38, %v2303
        %v2305 = vsel %vm2302, %v2304, %v2300
        %v2306 = vmul.f32 %v2281, %v2305
        %v2307 = vmin.f32 %v2306, 1.0
        %v2308 = vmax.f32 %v2307, -1.0
        %v2309 = vmul.f32 %v1231, %v1231
        %v2310 = vmin.f32 16.0, %v2309
        %v2311 = vmul.f32 %v2310, 2.1237322e-06
        %v2312 = vadd.f32 %v2311, 0.00028619796
        %v2313 = vmul.f32 %v2310, %v2312
        %v2314 = vadd.f32 %v2313, 0.0036580483
        %v2315 = vmul.f32 %v2310, %v2314
        %v2316 = vadd.f32 %v2315, 0.05243302
        %v2317 = vmul.f32 %v2310, %v2316
        %v2318 = vadd.f32 %v2317, 0.18741608
        %v2319 = vmul.f32 %v2310, %v2318
        %v2320 = vadd.f32 %v2319, 1.1283791
        %v2321 = vmul.f32 %v1231, %v2320
        %v2322 = vmul.f32 %v2310, 3.8918573e-05
        %v2323 = vadd.f32 %v2322, 0.001143296
        %v2324 = vmul.f32 %v2310, %v2323
        %v2325 = vadd.f32 %v2324, 0.014752088
        %v2326 = vmul.f32 %v2310, %v2325
        %v2327 = vadd.f32 %v2326, 0.112945676
        %v2328 = vmul.f32 %v2310, %v2327
        %v2329 = vadd.f32 %v2328, 0.4994258
        %v2330 = vmul.f32 %v2310, %v2329
        %v2331 = vadd.f32 %v2330, 1.0
        %v2332 = vrcp.pop %v2331
        %v2333 = vmul.f32 %v2331, %v2332
        %v2334 = vsub.f32 1.0, %v2333
        %v2335 = vmul.f32 %v2332, %v2334
        %v2336 = vadd.f32 %v2332, %v2335
        %vm2337 = vweird.f32 %v2331
        %vm2338 = vweird.f32 %v2332
        %vm2339 = vmor %vm2337, %vm2338
        %v2340 = vsel %vm2339, %v2332, %v2336
        %v2341 = vand.u32 2147483647, %v2331
        %vm2342 = vcmp.eq.f32.partialorder %v2341, 8.507059e+37
        %v2343 = vand.u32 %v2331, 2147483648
        %v2344 = vor.u32 1.1754944e-38, %v2343
        %v2345 = vsel %vm2342, %v2344, %v2340
        %v2346 = vmul.f32 %v2321, %v2345
        %v2347 = vmin.f32 %v2346, 1.0
        %v2348 = vmax.f32 %v2347, -1.0
        %v2349 = vmul.f32 %v1232, %v1232
        %v2350 = vmin.f32 16.0, %v2349
        %v2351 = vmul.f32 %v2350, 2.1237322e-06
        %v2352 = vadd.f32 %v2351, 0.00028619796
        %v2353 = vmul.f32 %v2350, %v2352
        %v2354 = vadd.f32 %v2353, 0.0036580483
        %v2355 = vmul.f32 %v2350, %v2354
        %v2356 = vadd.f32 %v2355, 0.05243302
        %v2357 = vmul.f32 %v2350, %v2356
        %v2358 = vadd.f32 %v2357, 0.18741608
        %v2359 = vmul.f32 %v2350, %v2358
        %v2360 = vadd.f32 %v2359, 1.1283791
        %v2361 = vmul.f32 %v1232, %v2360
        %v2362 = vmul.f32 %v2350, 3.8918573e-05
        %v2363 = vadd.f32 %v2362, 0.001143296
        %v2364 = vmul.f32 %v2350, %v2363
        %v2365 = vadd.f32 %v2364, 0.014752088
        %v2366 = vmul.f32 %v2350, %v2365
        %v2367 = vadd.f32 %v2366, 0.112945676
        %v2368 = vmul.f32 %v2350, %v2367
        %v2369 = vadd.f32 %v2368, 0.4994258
        %v2370 = vmul.f32 %v2350, %v2369
        %v2371 = vadd.f32 %v2370, 1.0
        %v2372 = vrcp.pop %v2371
        %v2373 = vmul.f32 %v2371, %v2372
        %v2374 = vsub.f32 1.0, %v2373
        %v2375 = vmul.f32 %v2372, %v2374
        %v2376 = vadd.f32 %v2372, %v2375
        %vm2377 = vweird.f32 %v2371
        %vm2378 = vweird.f32 %v2372
        %vm2379 = vmor %vm2377, %vm2378
        %v2380 = vsel %vm2379, %v2372, %v2376
        %v2381 = vand.u32 2147483647, %v2371
        %vm2382 = vcmp.eq.f32.partialorder %v2381, 8.507059e+37
        %v2383 = vand.u32 %v2371, 2147483648
        %v2384 = vor.u32 1.1754944e-38, %v2383
        %v2385 = vsel %vm2382, %v2384, %v2380
        %v2386 = vmul.f32 %v2361, %v2385
        %v2387 = vmin.f32 %v2386, 1.0
        %v2388 = vmax.f32 %v2387, -1.0
        %v2389 = vmul.f32 %v1233, %v1233
        %v2390 = vmin.f32 16.0, %v2389
        %v2391 = vmul.f32 %v2390, 2.1237322e-06
        %v2392 = vadd.f32 %v2391, 0.00028619796
        %v2393 = vmul.f32 %v2390, %v2392
        %v2394 = vadd.f32 %v2393, 0.0036580483
        %v2395 = vmul.f32 %v2390, %v2394
        %v2396 = vadd.f32 %v2395, 0.05243302
        %v2397 = vmul.f32 %v2390, %v2396
        %v2398 = vadd.f32 %v2397, 0.18741608
        %v2399 = vmul.f32 %v2390, %v2398
        %v2400 = vadd.f32 %v2399, 1.1283791
        %v2401 = vmul.f32 %v1233, %v2400
        %v2402 = vmul.f32 %v2390, 3.8918573e-05
        %v2403 = vadd.f32 %v2402, 0.001143296
        %v2404 = vmul.f32 %v2390, %v2403
        %v2405 = vadd.f32 %v2404, 0.014752088
        %v2406 = vmul.f32 %v2390, %v2405
        %v2407 = vadd.f32 %v2406, 0.112945676
        %v2408 = vmul.f32 %v2390, %v2407
        %v2409 = vadd.f32 %v2408, 0.4994258
        %v2410 = vmul.f32 %v2390, %v2409
        %v2411 = vadd.f32 %v2410, 1.0
        %v2412 = vrcp.pop %v2411
        %v2413 = vmul.f32 %v2411, %v2412
        %v2414 = vsub.f32 1.0, %v2413
        %v2415 = vmul.f32 %v2412, %v2414
        %v2416 = vadd.f32 %v2412, %v2415
        %vm2417 = vweird.f32 %v2411
        %vm2418 = vweird.f32 %v2412
        %vm2419 = vmor %vm2417, %vm2418
        %v2420 = vsel %vm2419, %v2412, %v2416
        %v2421 = vand.u32 2147483647, %v2411
        %vm2422 = vcmp.eq.f32.partialorder %v2421, 8.507059e+37
        %v2423 = vand.u32 %v2411, 2147483648
        %v2424 = vor.u32 1.1754944e-38, %v2423
        %v2425 = vsel %vm2422, %v2424, %v2420
        %v2426 = vmul.f32 %v2401, %v2425
        %v2427 = vmin.f32 %v2426, 1.0
        %v2428 = vmax.f32 %v2427, -1.0
        %v2429 = vmul.f32 %v1234, %v1234
        %v2430 = vmin.f32 16.0, %v2429
        %v2431 = vmul.f32 %v2430, 2.1237322e-06
        %v2432 = vadd.f32 %v2431, 0.00028619796
        %v2433 = vmul.f32 %v2430, %v2432
        %v2434 = vadd.f32 %v2433, 0.0036580483
        %v2435 = vmul.f32 %v2430, %v2434
        %v2436 = vadd.f32 %v2435, 0.05243302
        %v2437 = vmul.f32 %v2430, %v2436
        %v2438 = vadd.f32 %v2437, 0.18741608
        %v2439 = vmul.f32 %v2430, %v2438
        %v2440 = vadd.f32 %v2439, 1.1283791
        %v2441 = vmul.f32 %v1234, %v2440
        %v2442 = vmul.f32 %v2430, 3.8918573e-05
        %v2443 = vadd.f32 %v2442, 0.001143296
        %v2444 = vmul.f32 %v2430, %v2443
        %v2445 = vadd.f32 %v2444, 0.014752088
        %v2446 = vmul.f32 %v2430, %v2445
        %v2447 = vadd.f32 %v2446, 0.112945676
        %v2448 = vmul.f32 %v2430, %v2447
        %v2449 = vadd.f32 %v2448, 0.4994258
        %v2450 = vmul.f32 %v2430, %v2449
        %v2451 = vadd.f32 %v2450, 1.0
        %v2452 = vrcp.pop %v2451
        %v2453 = vmul.f32 %v2451, %v2452
        %v2454 = vsub.f32 1.0, %v2453
        %v2455 = vmul.f32 %v2452, %v2454
        %v2456 = vadd.f32 %v2452, %v2455
        %vm2457 = vweird.f32 %v2451
        %vm2458 = vweird.f32 %v2452
        %vm2459 = vmor %vm2457, %vm2458
        %v2460 = vsel %vm2459, %v2452, %v2456
        %v2461 = vand.u32 2147483647, %v2451
        %vm2462 = vcmp.eq.f32.partialorder %v2461, 8.507059e+37
        %v2463 = vand.u32 %v2451, 2147483648
        %v2464 = vor.u32 1.1754944e-38, %v2463
        %v2465 = vsel %vm2462, %v2464, %v2460
        %v2466 = vmul.f32 %v2441, %v2465
        %v2467 = vmin.f32 %v2466, 1.0
        %v2468 = vmax.f32 %v2467, -1.0
        %v2469 = vmul.f32 %v1235, %v1235
        %v2470 = vmin.f32 16.0, %v2469
        %v2471 = vmul.f32 %v2470, 2.1237322e-06
        %v2472 = vadd.f32 %v2471, 0.00028619796
        %v2473 = vmul.f32 %v2470, %v2472
        %v2474 = vadd.f32 %v2473, 0.0036580483
        %v2475 = vmul.f32 %v2470, %v2474
        %v2476 = vadd.f32 %v2475, 0.05243302
        %v2477 = vmul.f32 %v2470, %v2476
        %v2478 = vadd.f32 %v2477, 0.18741608
        %v2479 = vmul.f32 %v2470, %v2478
        %v2480 = vadd.f32 %v2479, 1.1283791
        %v2481 = vmul.f32 %v1235, %v2480
        %v2482 = vmul.f32 %v2470, 3.8918573e-05
        %v2483 = vadd.f32 %v2482, 0.001143296
        %v2484 = vmul.f32 %v2470, %v2483
        %v2485 = vadd.f32 %v2484, 0.014752088
        %v2486 = vmul.f32 %v2470, %v2485
        %v2487 = vadd.f32 %v2486, 0.112945676
        %v2488 = vmul.f32 %v2470, %v2487
        %v2489 = vadd.f32 %v2488, 0.4994258
        %v2490 = vmul.f32 %v2470, %v2489
        %v2491 = vadd.f32 %v2490, 1.0
        %v2492 = vrcp.pop %v2491
        %v2493 = vmul.f32 %v2491, %v2492
        %v2494 = vsub.f32 1.0, %v2493
        %v2495 = vmul.f32 %v2492, %v2494
        %v2496 = vadd.f32 %v2492, %v2495
        %vm2497 = vweird.f32 %v2491
        %vm2498 = vweird.f32 %v2492
        %vm2499 = vmor %vm2497, %vm2498
        %v2500 = vsel %vm2499, %v2492, %v2496
        %v2501 = vand.u32 2147483647, %v2491
        %vm2502 = vcmp.eq.f32.partialorder %v2501, 8.507059e+37
        %v2503 = vand.u32 %v2491, 2147483648
        %v2504 = vor.u32 1.1754944e-38, %v2503
        %v2505 = vsel %vm2502, %v2504, %v2500
        %v2506 = vmul.f32 %v2481, %v2505
        %v2507 = vmin.f32 %v2506, 1.0
        %v2508 = vmax.f32 %v2507, -1.0
        %v2509 = vmul.f32 %v1236, %v1236
        %v2510 = vmin.f32 16.0, %v2509
        %v2511 = vmul.f32 %v2510, 2.1237322e-06
        %v2512 = vadd.f32 %v2511, 0.00028619796
        %v2513 = vmul.f32 %v2510, %v2512
        %v2514 = vadd.f32 %v2513, 0.0036580483
        %v2515 = vmul.f32 %v2510, %v2514
        %v2516 = vadd.f32 %v2515, 0.05243302
        %v2517 = vmul.f32 %v2510, %v2516
        %v2518 = vadd.f32 %v2517, 0.18741608
        %v2519 = vmul.f32 %v2510, %v2518
        %v2520 = vadd.f32 %v2519, 1.1283791
        %v2521 = vmul.f32 %v1236, %v2520
        %v2522 = vmul.f32 %v2510, 3.8918573e-05
        %v2523 = vadd.f32 %v2522, 0.001143296
        %v2524 = vmul.f32 %v2510, %v2523
        %v2525 = vadd.f32 %v2524, 0.014752088
        %v2526 = vmul.f32 %v2510, %v2525
        %v2527 = vadd.f32 %v2526, 0.112945676
        %v2528 = vmul.f32 %v2510, %v2527
        %v2529 = vadd.f32 %v2528, 0.4994258
        %v2530 = vmul.f32 %v2510, %v2529
        %v2531 = vadd.f32 %v2530, 1.0
        %v2532 = vrcp.pop %v2531
        %v2533 = vmul.f32 %v2531, %v2532
        %v2534 = vsub.f32 1.0, %v2533
        %v2535 = vmul.f32 %v2532, %v2534
        %v2536 = vadd.f32 %v2532, %v2535
        %vm2537 = vweird.f32 %v2531
        %vm2538 = vweird.f32 %v2532
        %vm2539 = vmor %vm2537, %vm2538
        %v2540 = vsel %vm2539, %v2532, %v2536
        %v2541 = vand.u32 2147483647, %v2531
        %vm2542 = vcmp.eq.f32.partialorder %v2541, 8.507059e+37
        %v2543 = vand.u32 %v2531, 2147483648
        %v2544 = vor.u32 1.1754944e-38, %v2543
        %v2545 = vsel %vm2542, %v2544, %v2540
        %v2546 = vmul.f32 %v2521, %v2545
        %v2547 = vmin.f32 %v2546, 1.0
        %v2548 = vmax.f32 %v2547, -1.0
        %v2549 = vmul.f32 %v1237, %v1237
        %v2550 = vmin.f32 16.0, %v2549
        %v2551 = vmul.f32 %v2550, 2.1237322e-06
        %v2552 = vadd.f32 %v2551, 0.00028619796
        %v2553 = vmul.f32 %v2550, %v2552
        %v2554 = vadd.f32 %v2553, 0.0036580483
        %v2555 = vmul.f32 %v2550, %v2554
        %v2556 = vadd.f32 %v2555, 0.05243302
        %v2557 = vmul.f32 %v2550, %v2556
        %v2558 = vadd.f32 %v2557, 0.18741608
        %v2559 = vmul.f32 %v2550, %v2558
        %v2560 = vadd.f32 %v2559, 1.1283791
        %v2561 = vmul.f32 %v1237, %v2560
        %v2562 = vmul.f32 %v2550, 3.8918573e-05
        %v2563 = vadd.f32 %v2562, 0.001143296
        %v2564 = vmul.f32 %v2550, %v2563
        %v2565 = vadd.f32 %v2564, 0.014752088
        %v2566 = vmul.f32 %v2550, %v2565
        %v2567 = vadd.f32 %v2566, 0.112945676
        %v2568 = vmul.f32 %v2550, %v2567
        %v2569 = vadd.f32 %v2568, 0.4994258
        %v2570 = vmul.f32 %v2550, %v2569
        %v2571 = vadd.f32 %v2570, 1.0
        %v2572 = vrcp.pop %v2571
        %v2573 = vmul.f32 %v2571, %v2572
        %v2574 = vsub.f32 1.0, %v2573
        %v2575 = vmul.f32 %v2572, %v2574
        %v2576 = vadd.f32 %v2572, %v2575
        %vm2577 = vweird.f32 %v2571
        %vm2578 = vweird.f32 %v2572
        %vm2579 = vmor %vm2577, %vm2578
        %v2580 = vsel %vm2579, %v2572, %v2576
        %v2581 = vand.u32 2147483647, %v2571
        %vm2582 = vcmp.eq.f32.partialorder %v2581, 8.507059e+37
        %v2583 = vand.u32 %v2571, 2147483648
        %v2584 = vor.u32 1.1754944e-38, %v2583
        %v2585 = vsel %vm2582, %v2584, %v2580
        %v2586 = vmul.f32 %v2561, %v2585
        %v2587 = vmin.f32 %v2586, 1.0
        %v2588 = vmax.f32 %v2587, -1.0
        %v2589 = vmul.f32 %v1238, %v1238
        %v2590 = vmin.f32 16.0, %v2589
        %v2591 = vmul.f32 %v2590, 2.1237322e-06
        %v2592 = vadd.f32 %v2591, 0.00028619796
        %v2593 = vmul.f32 %v2590, %v2592
        %v2594 = vadd.f32 %v2593, 0.0036580483
        %v2595 = vmul.f32 %v2590, %v2594
        %v2596 = vadd.f32 %v2595, 0.05243302
        %v2597 = vmul.f32 %v2590, %v2596
        %v2598 = vadd.f32 %v2597, 0.18741608
        %v2599 = vmul.f32 %v2590, %v2598
        %v2600 = vadd.f32 %v2599, 1.1283791
        %v2601 = vmul.f32 %v1238, %v2600
        %v2602 = vmul.f32 %v2590, 3.8918573e-05
        %v2603 = vadd.f32 %v2602, 0.001143296
        %v2604 = vmul.f32 %v2590, %v2603
        %v2605 = vadd.f32 %v2604, 0.014752088
        %v2606 = vmul.f32 %v2590, %v2605
        %v2607 = vadd.f32 %v2606, 0.112945676
        %v2608 = vmul.f32 %v2590, %v2607
        %v2609 = vadd.f32 %v2608, 0.4994258
        %v2610 = vmul.f32 %v2590, %v2609
        %v2611 = vadd.f32 %v2610, 1.0
        %v2612 = vrcp.pop %v2611
        %v2613 = vmul.f32 %v2611, %v2612
        %v2614 = vsub.f32 1.0, %v2613
        %v2615 = vmul.f32 %v2612, %v2614
        %v2616 = vadd.f32 %v2612, %v2615
        %vm2617 = vweird.f32 %v2611
        %vm2618 = vweird.f32 %v2612
        %vm2619 = vmor %vm2617, %vm2618
        %v2620 = vsel %vm2619, %v2612, %v2616
        %v2621 = vand.u32 2147483647, %v2611
        %vm2622 = vcmp.eq.f32.partialorder %v2621, 8.507059e+37
        %v2623 = vand.u32 %v2611, 2147483648
        %v2624 = vor.u32 1.1754944e-38, %v2623
        %v2625 = vsel %vm2622, %v2624, %v2620
        %v2626 = vmul.f32 %v2601, %v2625
        %v2627 = vmin.f32 %v2626, 1.0
        %v2628 = vmax.f32 %v2627, -1.0
        %v2629 = vmul.f32 %v1239, %v1239
        %v2630 = vmin.f32 16.0, %v2629
        %v2631 = vmul.f32 %v2630, 2.1237322e-06
        %v2632 = vadd.f32 %v2631, 0.00028619796
        %v2633 = vmul.f32 %v2630, %v2632
        %v2634 = vadd.f32 %v2633, 0.0036580483
        %v2635 = vmul.f32 %v2630, %v2634
        %v2636 = vadd.f32 %v2635, 0.05243302
        %v2637 = vmul.f32 %v2630, %v2636
        %v2638 = vadd.f32 %v2637, 0.18741608
        %v2639 = vmul.f32 %v2630, %v2638
        %v2640 = vadd.f32 %v2639, 1.1283791
        %v2641 = vmul.f32 %v1239, %v2640
        %v2642 = vmul.f32 %v2630, 3.8918573e-05
        %v2643 = vadd.f32 %v2642, 0.001143296
        %v2644 = vmul.f32 %v2630, %v2643
        %v2645 = vadd.f32 %v2644, 0.014752088
        %v2646 = vmul.f32 %v2630, %v2645
        %v2647 = vadd.f32 %v2646, 0.112945676
        %v2648 = vmul.f32 %v2630, %v2647
        %v2649 = vadd.f32 %v2648, 0.4994258
        %v2650 = vmul.f32 %v2630, %v2649
        %v2651 = vadd.f32 %v2650, 1.0
        %v2652 = vrcp.pop %v2651
        %v2653 = vmul.f32 %v2651, %v2652
        %v2654 = vsub.f32 1.0, %v2653
        %v2655 = vmul.f32 %v2652, %v2654
        %v2656 = vadd.f32 %v2652, %v2655
        %vm2657 = vweird.f32 %v2651
        %vm2658 = vweird.f32 %v2652
        %vm2659 = vmor %vm2657, %vm2658
        %v2660 = vsel %vm2659, %v2652, %v2656
        %v2661 = vand.u32 2147483647, %v2651
        %vm2662 = vcmp.eq.f32.partialorder %v2661, 8.507059e+37
        %v2663 = vand.u32 %v2651, 2147483648
        %v2664 = vor.u32 1.1754944e-38, %v2663
        %v2665 = vsel %vm2662, %v2664, %v2660
        %v2666 = vmul.f32 %v2641, %v2665
        %v2667 = vmin.f32 %v2666, 1.0
        %v2668 = vmax.f32 %v2667, -1.0
        %v2669 = vmul.f32 %v1240, %v1240
        %v2670 = vmin.f32 16.0, %v2669
        %v2671 = vmul.f32 %v2670, 2.1237322e-06
        %v2672 = vadd.f32 %v2671, 0.00028619796
        %v2673 = vmul.f32 %v2670, %v2672
        %v2674 = vadd.f32 %v2673, 0.0036580483
        %v2675 = vmul.f32 %v2670, %v2674
        %v2676 = vadd.f32 %v2675, 0.05243302
        %v2677 = vmul.f32 %v2670, %v2676
        %v2678 = vadd.f32 %v2677, 0.18741608
        %v2679 = vmul.f32 %v2670, %v2678
        %v2680 = vadd.f32 %v2679, 1.1283791
        %v2681 = vmul.f32 %v1240, %v2680
        %v2682 = vmul.f32 %v2670, 3.8918573e-05
        %v2683 = vadd.f32 %v2682, 0.001143296
        %v2684 = vmul.f32 %v2670, %v2683
        %v2685 = vadd.f32 %v2684, 0.014752088
        %v2686 = vmul.f32 %v2670, %v2685
        %v2687 = vadd.f32 %v2686, 0.112945676
        %v2688 = vmul.f32 %v2670, %v2687
        %v2689 = vadd.f32 %v2688, 0.4994258
        %v2690 = vmul.f32 %v2670, %v2689
        %v2691 = vadd.f32 %v2690, 1.0
        %v2692 = vrcp.pop %v2691
        %v2693 = vmul.f32 %v2691, %v2692
        %v2694 = vsub.f32 1.0, %v2693
        %v2695 = vmul.f32 %v2692, %v2694
        %v2696 = vadd.f32 %v2692, %v2695
        %vm2697 = vweird.f32 %v2691
        %vm2698 = vweird.f32 %v2692
        %vm2699 = vmor %vm2697, %vm2698
        %v2700 = vsel %vm2699, %v2692, %v2696
        %v2701 = vand.u32 2147483647, %v2691
        %vm2702 = vcmp.eq.f32.partialorder %v2701, 8.507059e+37
        %v2703 = vand.u32 %v2691, 2147483648
        %v2704 = vor.u32 1.1754944e-38, %v2703
        %v2705 = vsel %vm2702, %v2704, %v2700
        %v2706 = vmul.f32 %v2681, %v2705
        %v2707 = vmin.f32 %v2706, 1.0
        %v2708 = vmax.f32 %v2707, -1.0
        %v2709 = vmul.f32 %v1241, %v1241
        %v2710 = vmin.f32 16.0, %v2709
        %v2711 = vmul.f32 %v2710, 2.1237322e-06
        %v2712 = vadd.f32 %v2711, 0.00028619796
        %v2713 = vmul.f32 %v2710, %v2712
        %v2714 = vadd.f32 %v2713, 0.0036580483
        %v2715 = vmul.f32 %v2710, %v2714
        %v2716 = vadd.f32 %v2715, 0.05243302
        %v2717 = vmul.f32 %v2710, %v2716
        %v2718 = vadd.f32 %v2717, 0.18741608
        %v2719 = vmul.f32 %v2710, %v2718
        %v2720 = vadd.f32 %v2719, 1.1283791
        %v2721 = vmul.f32 %v1241, %v2720
        %v2722 = vmul.f32 %v2710, 3.8918573e-05
        %v2723 = vadd.f32 %v2722, 0.001143296
        %v2724 = vmul.f32 %v2710, %v2723
        %v2725 = vadd.f32 %v2724, 0.014752088
        %v2726 = vmul.f32 %v2710, %v2725
        %v2727 = vadd.f32 %v2726, 0.112945676
        %v2728 = vmul.f32 %v2710, %v2727
        %v2729 = vadd.f32 %v2728, 0.4994258
        %v2730 = vmul.f32 %v2710, %v2729
        %v2731 = vadd.f32 %v2730, 1.0
        %v2732 = vrcp.pop %v2731
        %v2733 = vmul.f32 %v2731, %v2732
        %v2734 = vsub.f32 1.0, %v2733
        %v2735 = vmul.f32 %v2732, %v2734
        %v2736 = vadd.f32 %v2732, %v2735
        %vm2737 = vweird.f32 %v2731
        %vm2738 = vweird.f32 %v2732
        %vm2739 = vmor %vm2737, %vm2738
        %v2740 = vsel %vm2739, %v2732, %v2736
        %v2741 = vand.u32 2147483647, %v2731
        %vm2742 = vcmp.eq.f32.partialorder %v2741, 8.507059e+37
        %v2743 = vand.u32 %v2731, 2147483648
        %v2744 = vor.u32 1.1754944e-38, %v2743
        %v2745 = vsel %vm2742, %v2744, %v2740
        %v2746 = vmul.f32 %v2721, %v2745
        %v2747 = vmin.f32 %v2746, 1.0
        %v2748 = vmax.f32 %v2747, -1.0
        %v2749 = vmul.f32 %v1242, %v1242
        %v2750 = vmin.f32 16.0, %v2749
        %v2751 = vmul.f32 %v2750, 2.1237322e-06
        %v2752 = vadd.f32 %v2751, 0.00028619796
        %v2753 = vmul.f32 %v2750, %v2752
        %v2754 = vadd.f32 %v2753, 0.0036580483
        %v2755 = vmul.f32 %v2750, %v2754
        %v2756 = vadd.f32 %v2755, 0.05243302
        %v2757 = vmul.f32 %v2750, %v2756
        %v2758 = vadd.f32 %v2757, 0.18741608
        %v2759 = vmul.f32 %v2750, %v2758
        %v2760 = vadd.f32 %v2759, 1.1283791
        %v2761 = vmul.f32 %v1242, %v2760
        %v2762 = vmul.f32 %v2750, 3.8918573e-05
        %v2763 = vadd.f32 %v2762, 0.001143296
        %v2764 = vmul.f32 %v2750, %v2763
        %v2765 = vadd.f32 %v2764, 0.014752088
        %v2766 = vmul.f32 %v2750, %v2765
        %v2767 = vadd.f32 %v2766, 0.112945676
        %v2768 = vmul.f32 %v2750, %v2767
        %v2769 = vadd.f32 %v2768, 0.4994258
        %v2770 = vmul.f32 %v2750, %v2769
        %v2771 = vadd.f32 %v2770, 1.0
        %v2772 = vrcp.pop %v2771
        %v2773 = vmul.f32 %v2771, %v2772
        %v2774 = vsub.f32 1.0, %v2773
        %v2775 = vmul.f32 %v2772, %v2774
        %v2776 = vadd.f32 %v2772, %v2775
        %vm2777 = vweird.f32 %v2771
        %vm2778 = vweird.f32 %v2772
        %vm2779 = vmor %vm2777, %vm2778
        %v2780 = vsel %vm2779, %v2772, %v2776
        %v2781 = vand.u32 2147483647, %v2771
        %vm2782 = vcmp.eq.f32.partialorder %v2781, 8.507059e+37
        %v2783 = vand.u32 %v2771, 2147483648
        %v2784 = vor.u32 1.1754944e-38, %v2783
        %v2785 = vsel %vm2782, %v2784, %v2780
        %v2786 = vmul.f32 %v2761, %v2785
        %v2787 = vmin.f32 %v2786, 1.0
        %v2788 = vmax.f32 %v2787, -1.0
        %v2789 = vmul.f32 %v1243, %v1243
        %v2790 = vmin.f32 16.0, %v2789
        %v2791 = vmul.f32 %v2790, 2.1237322e-06
        %v2792 = vadd.f32 %v2791, 0.00028619796
        %v2793 = vmul.f32 %v2790, %v2792
        %v2794 = vadd.f32 %v2793, 0.0036580483
        %v2795 = vmul.f32 %v2790, %v2794
        %v2796 = vadd.f32 %v2795, 0.05243302
        %v2797 = vmul.f32 %v2790, %v2796
        %v2798 = vadd.f32 %v2797, 0.18741608
        %v2799 = vmul.f32 %v2790, %v2798
        %v2800 = vadd.f32 %v2799, 1.1283791
        %v2801 = vmul.f32 %v1243, %v2800
        %v2802 = vmul.f32 %v2790, 3.8918573e-05
        %v2803 = vadd.f32 %v2802, 0.001143296
        %v2804 = vmul.f32 %v2790, %v2803
        %v2805 = vadd.f32 %v2804, 0.014752088
        %v2806 = vmul.f32 %v2790, %v2805
        %v2807 = vadd.f32 %v2806, 0.112945676
        %v2808 = vmul.f32 %v2790, %v2807
        %v2809 = vadd.f32 %v2808, 0.4994258
        %v2810 = vmul.f32 %v2790, %v2809
        %v2811 = vadd.f32 %v2810, 1.0
        %v2812 = vrcp.pop %v2811
        %v2813 = vmul.f32 %v2811, %v2812
        %v2814 = vsub.f32 1.0, %v2813
        %v2815 = vmul.f32 %v2812, %v2814
        %v2816 = vadd.f32 %v2812, %v2815
        %vm2817 = vweird.f32 %v2811
        %vm2818 = vweird.f32 %v2812
        %vm2819 = vmor %vm2817, %vm2818
        %v2820 = vsel %vm2819, %v2812, %v2816
        %v2821 = vand.u32 2147483647, %v2811
        %vm2822 = vcmp.eq.f32.partialorder %v2821, 8.507059e+37
        %v2823 = vand.u32 %v2811, 2147483648
        %v2824 = vor.u32 1.1754944e-38, %v2823
        %v2825 = vsel %vm2822, %v2824, %v2820
        %v2826 = vmul.f32 %v2801, %v2825
        %v2827 = vmin.f32 %v2826, 1.0
        %v2828 = vmax.f32 %v2827, -1.0
        %v2829 = vmul.f32 %v1244, %v1244
        %v2830 = vmin.f32 16.0, %v2829
        %v2831 = vmul.f32 %v2830, 2.1237322e-06
        %v2832 = vadd.f32 %v2831, 0.00028619796
        %v2833 = vmul.f32 %v2830, %v2832
        %v2834 = vadd.f32 %v2833, 0.0036580483
        %v2835 = vmul.f32 %v2830, %v2834
        %v2836 = vadd.f32 %v2835, 0.05243302
        %v2837 = vmul.f32 %v2830, %v2836
        %v2838 = vadd.f32 %v2837, 0.18741608
        %v2839 = vmul.f32 %v2830, %v2838
        %v2840 = vadd.f32 %v2839, 1.1283791
        %v2841 = vmul.f32 %v1244, %v2840
        %v2842 = vmul.f32 %v2830, 3.8918573e-05
        %v2843 = vadd.f32 %v2842, 0.001143296
        %v2844 = vmul.f32 %v2830, %v2843
        %v2845 = vadd.f32 %v2844, 0.014752088
        %v2846 = vmul.f32 %v2830, %v2845
        %v2847 = vadd.f32 %v2846, 0.112945676
        %v2848 = vmul.f32 %v2830, %v2847
        %v2849 = vadd.f32 %v2848, 0.4994258
        %v2850 = vmul.f32 %v2830, %v2849
        %v2851 = vadd.f32 %v2850, 1.0
        %v2852 = vrcp.pop %v2851
        %v2853 = vmul.f32 %v2851, %v2852
        %v2854 = vsub.f32 1.0, %v2853
        %v2855 = vmul.f32 %v2852, %v2854
        %v2856 = vadd.f32 %v2852, %v2855
        %vm2857 = vweird.f32 %v2851
        %vm2858 = vweird.f32 %v2852
        %vm2859 = vmor %vm2857, %vm2858
        %v2860 = vsel %vm2859, %v2852, %v2856
        %v2861 = vand.u32 2147483647, %v2851
        %vm2862 = vcmp.eq.f32.partialorder %v2861, 8.507059e+37
        %v2863 = vand.u32 %v2851, 2147483648
        %v2864 = vor.u32 1.1754944e-38, %v2863
        %v2865 = vsel %vm2862, %v2864, %v2860
        %v2866 = vmul.f32 %v2841, %v2865
        %v2867 = vmin.f32 %v2866, 1.0
        %v2868 = vmax.f32 %v2867, -1.0
        %v2869 = vmul.f32 %v1245, %v1245
        %v2870 = vmin.f32 16.0, %v2869
        %v2871 = vmul.f32 %v2870, 2.1237322e-06
        %v2872 = vadd.f32 %v2871, 0.00028619796
        %v2873 = vmul.f32 %v2870, %v2872
        %v2874 = vadd.f32 %v2873, 0.0036580483
        %v2875 = vmul.f32 %v2870, %v2874
        %v2876 = vadd.f32 %v2875, 0.05243302
        %v2877 = vmul.f32 %v2870, %v2876
        %v2878 = vadd.f32 %v2877, 0.18741608
        %v2879 = vmul.f32 %v2870, %v2878
        %v2880 = vadd.f32 %v2879, 1.1283791
        %v2881 = vmul.f32 %v1245, %v2880
        %v2882 = vmul.f32 %v2870, 3.8918573e-05
        %v2883 = vadd.f32 %v2882, 0.001143296
        %v2884 = vmul.f32 %v2870, %v2883
        %v2885 = vadd.f32 %v2884, 0.014752088
        %v2886 = vmul.f32 %v2870, %v2885
        %v2887 = vadd.f32 %v2886, 0.112945676
        %v2888 = vmul.f32 %v2870, %v2887
        %v2889 = vadd.f32 %v2888, 0.4994258
        %v2890 = vmul.f32 %v2870, %v2889
        %v2891 = vadd.f32 %v2890, 1.0
        %v2892 = vrcp.pop %v2891
        %v2893 = vmul.f32 %v2891, %v2892
        %v2894 = vsub.f32 1.0, %v2893
        %v2895 = vmul.f32 %v2892, %v2894
        %v2896 = vadd.f32 %v2892, %v2895
        %vm2897 = vweird.f32 %v2891
        %vm2898 = vweird.f32 %v2892
        %vm2899 = vmor %vm2897, %vm2898
        %v2900 = vsel %vm2899, %v2892, %v2896
        %v2901 = vand.u32 2147483647, %v2891
        %vm2902 = vcmp.eq.f32.partialorder %v2901, 8.507059e+37
        %v2903 = vand.u32 %v2891, 2147483648
        %v2904 = vor.u32 1.1754944e-38, %v2903
        %v2905 = vsel %vm2902, %v2904, %v2900
        %v2906 = vmul.f32 %v2881, %v2905
        %v2907 = vmin.f32 %v2906, 1.0
        %v2908 = vmax.f32 %v2907, -1.0
        %v2909 = vmul.f32 %v1246, %v1246
        %v2910 = vmin.f32 16.0, %v2909
        %v2911 = vmul.f32 %v2910, 2.1237322e-06
        %v2912 = vadd.f32 %v2911, 0.00028619796
        %v2913 = vmul.f32 %v2910, %v2912
        %v2914 = vadd.f32 %v2913, 0.0036580483
        %v2915 = vmul.f32 %v2910, %v2914
        %v2916 = vadd.f32 %v2915, 0.05243302
        %v2917 = vmul.f32 %v2910, %v2916
        %v2918 = vadd.f32 %v2917, 0.18741608
        %v2919 = vmul.f32 %v2910, %v2918
        %v2920 = vadd.f32 %v2919, 1.1283791
        %v2921 = vmul.f32 %v1246, %v2920
        %v2922 = vmul.f32 %v2910, 3.8918573e-05
        %v2923 = vadd.f32 %v2922, 0.001143296
        %v2924 = vmul.f32 %v2910, %v2923
        %v2925 = vadd.f32 %v2924, 0.014752088
        %v2926 = vmul.f32 %v2910, %v2925
        %v2927 = vadd.f32 %v2926, 0.112945676
        %v2928 = vmul.f32 %v2910, %v2927
        %v2929 = vadd.f32 %v2928, 0.4994258
        %v2930 = vmul.f32 %v2910, %v2929
        %v2931 = vadd.f32 %v2930, 1.0
        %v2932 = vrcp.pop %v2931
        %v2933 = vmul.f32 %v2931, %v2932
        %v2934 = vsub.f32 1.0, %v2933
        %v2935 = vmul.f32 %v2932, %v2934
        %v2936 = vadd.f32 %v2932, %v2935
        %vm2937 = vweird.f32 %v2931
        %vm2938 = vweird.f32 %v2932
        %vm2939 = vmor %vm2937, %vm2938
        %v2940 = vsel %vm2939, %v2932, %v2936
        %v2941 = vand.u32 2147483647, %v2931
        %vm2942 = vcmp.eq.f32.partialorder %v2941, 8.507059e+37
        %v2943 = vand.u32 %v2931, 2147483648
        %v2944 = vor.u32 1.1754944e-38, %v2943
        %v2945 = vsel %vm2942, %v2944, %v2940
        %v2946 = vmul.f32 %v2921, %v2945
        %v2947 = vmin.f32 %v2946, 1.0
        %v2948 = vmax.f32 %v2947, -1.0
        %v2949 = vmul.f32 %v1247, %v1247
        %v2950 = vmin.f32 16.0, %v2949
        %v2951 = vmul.f32 %v2950, 2.1237322e-06
        %v2952 = vadd.f32 %v2951, 0.00028619796
        %v2953 = vmul.f32 %v2950, %v2952
        %v2954 = vadd.f32 %v2953, 0.0036580483
        %v2955 = vmul.f32 %v2950, %v2954
        %v2956 = vadd.f32 %v2955, 0.05243302
        %v2957 = vmul.f32 %v2950, %v2956
        %v2958 = vadd.f32 %v2957, 0.18741608
        %v2959 = vmul.f32 %v2950, %v2958
        %v2960 = vadd.f32 %v2959, 1.1283791
        %v2961 = vmul.f32 %v1247, %v2960
        %v2962 = vmul.f32 %v2950, 3.8918573e-05
        %v2963 = vadd.f32 %v2962, 0.001143296
        %v2964 = vmul.f32 %v2950, %v2963
        %v2965 = vadd.f32 %v2964, 0.014752088
        %v2966 = vmul.f32 %v2950, %v2965
        %v2967 = vadd.f32 %v2966, 0.112945676
        %v2968 = vmul.f32 %v2950, %v2967
        %v2969 = vadd.f32 %v2968, 0.4994258
        %v2970 = vmul.f32 %v2950, %v2969
        %v2971 = vadd.f32 %v2970, 1.0
        %v2972 = vrcp.pop %v2971
        %v2973 = vmul.f32 %v2971, %v2972
        %v2974 = vsub.f32 1.0, %v2973
        %v2975 = vmul.f32 %v2972, %v2974
        %v2976 = vadd.f32 %v2972, %v2975
        %vm2977 = vweird.f32 %v2971
        %vm2978 = vweird.f32 %v2972
        %vm2979 = vmor %vm2977, %vm2978
        %v2980 = vsel %vm2979, %v2972, %v2976
        %v2981 = vand.u32 2147483647, %v2971
        %vm2982 = vcmp.eq.f32.partialorder %v2981, 8.507059e+37
        %v2983 = vand.u32 %v2971, 2147483648
        %v2984 = vor.u32 1.1754944e-38, %v2983
        %v2985 = vsel %vm2982, %v2984, %v2980
        %v2986 = vmul.f32 %v2961, %v2985
        %v2987 = vmin.f32 %v2986, 1.0
        %v2988 = vmax.f32 %v2987, -1.0
        %v2989 = vmul.f32 %v1248, %v1248
        %v2990 = vmin.f32 16.0, %v2989
        %v2991 = vmul.f32 %v2990, 2.1237322e-06
        %v2992 = vadd.f32 %v2991, 0.00028619796
        %v2993 = vmul.f32 %v2990, %v2992
        %v2994 = vadd.f32 %v2993, 0.0036580483
        %v2995 = vmul.f32 %v2990, %v2994
        %v2996 = vadd.f32 %v2995, 0.05243302
        %v2997 = vmul.f32 %v2990, %v2996
        %v2998 = vadd.f32 %v2997, 0.18741608
        %v2999 = vmul.f32 %v2990, %v2998
        %v3000 = vadd.f32 %v2999, 1.1283791
        %v3001 = vmul.f32 %v1248, %v3000
        %v3002 = vmul.f32 %v2990, 3.8918573e-05
        %v3003 = vadd.f32 %v3002, 0.001143296
        %v3004 = vmul.f32 %v2990, %v3003
        %v3005 = vadd.f32 %v3004, 0.014752088
        %v3006 = vmul.f32 %v2990, %v3005
        %v3007 = vadd.f32 %v3006, 0.112945676
        %v3008 = vmul.f32 %v2990, %v3007
        %v3009 = vadd.f32 %v3008, 0.4994258
        %v3010 = vmul.f32 %v2990, %v3009
        %v3011 = vadd.f32 %v3010, 1.0
        %v3012 = vrcp.pop %v3011
        %v3013 = vmul.f32 %v3011, %v3012
        %v3014 = vsub.f32 1.0, %v3013
        %v3015 = vmul.f32 %v3012, %v3014
        %v3016 = vadd.f32 %v3012, %v3015
        %vm3017 = vweird.f32 %v3011
        %vm3018 = vweird.f32 %v3012
        %vm3019 = vmor %vm3017, %vm3018
        %v3020 = vsel %vm3019, %v3012, %v3016
        %v3021 = vand.u32 2147483647, %v3011
        %vm3022 = vcmp.eq.f32.partialorder %v3021, 8.507059e+37
        %v3023 = vand.u32 %v3011, 2147483648
        %v3024 = vor.u32 1.1754944e-38, %v3023
        %v3025 = vsel %vm3022, %v3024, %v3020
        %v3026 = vmul.f32 %v3001, %v3025
        %v3027 = vmin.f32 %v3026, 1.0
        %v3028 = vmax.f32 %v3027, -1.0
        %v3029 = vmul.f32 %v1249, %v1249
        %v3030 = vmin.f32 16.0, %v3029
        %v3031 = vmul.f32 %v3030, 2.1237322e-06
        %v3032 = vadd.f32 %v3031, 0.00028619796
        %v3033 = vmul.f32 %v3030, %v3032
        %v3034 = vadd.f32 %v3033, 0.0036580483
        %v3035 = vmul.f32 %v3030, %v3034
        %v3036 = vadd.f32 %v3035, 0.05243302
        %v3037 = vmul.f32 %v3030, %v3036
        %v3038 = vadd.f32 %v3037, 0.18741608
        %v3039 = vmul.f32 %v3030, %v3038
        %v3040 = vadd.f32 %v3039, 1.1283791
        %v3041 = vmul.f32 %v1249, %v3040
        %v3042 = vmul.f32 %v3030, 3.8918573e-05
        %v3043 = vadd.f32 %v3042, 0.001143296
        %v3044 = vmul.f32 %v3030, %v3043
        %v3045 = vadd.f32 %v3044, 0.014752088
        %v3046 = vmul.f32 %v3030, %v3045
        %v3047 = vadd.f32 %v3046, 0.112945676
        %v3048 = vmul.f32 %v3030, %v3047
        %v3049 = vadd.f32 %v3048, 0.4994258
        %v3050 = vmul.f32 %v3030, %v3049
        %v3051 = vadd.f32 %v3050, 1.0
        %v3052 = vrcp.pop %v3051
        %v3053 = vmul.f32 %v3051, %v3052
        %v3054 = vsub.f32 1.0, %v3053
        %v3055 = vmul.f32 %v3052, %v3054
        %v3056 = vadd.f32 %v3052, %v3055
        %vm3057 = vweird.f32 %v3051
        %vm3058 = vweird.f32 %v3052
        %vm3059 = vmor %vm3057, %vm3058
        %v3060 = vsel %vm3059, %v3052, %v3056
        %v3061 = vand.u32 2147483647, %v3051
        %vm3062 = vcmp.eq.f32.partialorder %v3061, 8.507059e+37
        %v3063 = vand.u32 %v3051, 2147483648
        %v3064 = vor.u32 1.1754944e-38, %v3063
        %v3065 = vsel %vm3062, %v3064, %v3060
        %v3066 = vmul.f32 %v3041, %v3065
        %v3067 = vmin.f32 %v3066, 1.0
        %v3068 = vmax.f32 %v3067, -1.0
        %v3069 = vmul.f32 %v1250, %v1250
        %v3070 = vmin.f32 16.0, %v3069
        %v3071 = vmul.f32 %v3070, 2.1237322e-06
        %v3072 = vadd.f32 %v3071, 0.00028619796
        %v3073 = vmul.f32 %v3070, %v3072
        %v3074 = vadd.f32 %v3073, 0.0036580483
        %v3075 = vmul.f32 %v3070, %v3074
        %v3076 = vadd.f32 %v3075, 0.05243302
        %v3077 = vmul.f32 %v3070, %v3076
        %v3078 = vadd.f32 %v3077, 0.18741608
        %v3079 = vmul.f32 %v3070, %v3078
        %v3080 = vadd.f32 %v3079, 1.1283791
        %v3081 = vmul.f32 %v1250, %v3080
        %v3082 = vmul.f32 %v3070, 3.8918573e-05
        %v3083 = vadd.f32 %v3082, 0.001143296
        %v3084 = vmul.f32 %v3070, %v3083
        %v3085 = vadd.f32 %v3084, 0.014752088
        %v3086 = vmul.f32 %v3070, %v3085
        %v3087 = vadd.f32 %v3086, 0.112945676
        %v3088 = vmul.f32 %v3070, %v3087
        %v3089 = vadd.f32 %v3088, 0.4994258
        %v3090 = vmul.f32 %v3070, %v3089
        %v3091 = vadd.f32 %v3090, 1.0
        %v3092 = vrcp.pop %v3091
        %v3093 = vmul.f32 %v3091, %v3092
        %v3094 = vsub.f32 1.0, %v3093
        %v3095 = vmul.f32 %v3092, %v3094
        %v3096 = vadd.f32 %v3092, %v3095
        %vm3097 = vweird.f32 %v3091
        %vm3098 = vweird.f32 %v3092
        %vm3099 = vmor %vm3097, %vm3098
        %v3100 = vsel %vm3099, %v3092, %v3096
        %v3101 = vand.u32 2147483647, %v3091
        %vm3102 = vcmp.eq.f32.partialorder %v3101, 8.507059e+37
        %v3103 = vand.u32 %v3091, 2147483648
        %v3104 = vor.u32 1.1754944e-38, %v3103
        %v3105 = vsel %vm3102, %v3104, %v3100
        %v3106 = vmul.f32 %v3081, %v3105
        %v3107 = vmin.f32 %v3106, 1.0
        %v3108 = vmax.f32 %v3107, -1.0
        %v3109 = vmul.f32 %v1251, %v1251
        %v3110 = vmin.f32 16.0, %v3109
        %v3111 = vmul.f32 %v3110, 2.1237322e-06
        %v3112 = vadd.f32 %v3111, 0.00028619796
        %v3113 = vmul.f32 %v3110, %v3112
        %v3114 = vadd.f32 %v3113, 0.0036580483
        %v3115 = vmul.f32 %v3110, %v3114
        %v3116 = vadd.f32 %v3115, 0.05243302
        %v3117 = vmul.f32 %v3110, %v3116
        %v3118 = vadd.f32 %v3117, 0.18741608
        %v3119 = vmul.f32 %v3110, %v3118
        %v3120 = vadd.f32 %v3119, 1.1283791
        %v3121 = vmul.f32 %v1251, %v3120
        %v3122 = vmul.f32 %v3110, 3.8918573e-05
        %v3123 = vadd.f32 %v3122, 0.001143296
        %v3124 = vmul.f32 %v3110, %v3123
        %v3125 = vadd.f32 %v3124, 0.014752088
        %v3126 = vmul.f32 %v3110, %v3125
        %v3127 = vadd.f32 %v3126, 0.112945676
        %v3128 = vmul.f32 %v3110, %v3127
        %v3129 = vadd.f32 %v3128, 0.4994258
        %v3130 = vmul.f32 %v3110, %v3129
        %v3131 = vadd.f32 %v3130, 1.0
        %v3132 = vrcp.pop %v3131
        %v3133 = vmul.f32 %v3131, %v3132
        %v3134 = vsub.f32 1.0, %v3133
        %v3135 = vmul.f32 %v3132, %v3134
        %v3136 = vadd.f32 %v3132, %v3135
        %vm3137 = vweird.f32 %v3131
        %vm3138 = vweird.f32 %v3132
        %vm3139 = vmor %vm3137, %vm3138
        %v3140 = vsel %vm3139, %v3132, %v3136
        %v3141 = vand.u32 2147483647, %v3131
        %vm3142 = vcmp.eq.f32.partialorder %v3141, 8.507059e+37
        %v3143 = vand.u32 %v3131, 2147483648
        %v3144 = vor.u32 1.1754944e-38, %v3143
        %v3145 = vsel %vm3142, %v3144, %v3140
        %v3146 = vmul.f32 %v3121, %v3145
        %v3147 = vmin.f32 %v3146, 1.0
        %v3148 = vmax.f32 %v3147, -1.0
        %v3149 = vmul.f32 %v1252, %v1252
        %v3150 = vmin.f32 16.0, %v3149
        %v3151 = vmul.f32 %v3150, 2.1237322e-06
        %v3152 = vadd.f32 %v3151, 0.00028619796
        %v3153 = vmul.f32 %v3150, %v3152
        %v3154 = vadd.f32 %v3153, 0.0036580483
        %v3155 = vmul.f32 %v3150, %v3154
        %v3156 = vadd.f32 %v3155, 0.05243302
        %v3157 = vmul.f32 %v3150, %v3156
        %v3158 = vadd.f32 %v3157, 0.18741608
        %v3159 = vmul.f32 %v3150, %v3158
        %v3160 = vadd.f32 %v3159, 1.1283791
        %v3161 = vmul.f32 %v1252, %v3160
        %v3162 = vmul.f32 %v3150, 3.8918573e-05
        %v3163 = vadd.f32 %v3162, 0.001143296
        %v3164 = vmul.f32 %v3150, %v3163
        %v3165 = vadd.f32 %v3164, 0.014752088
        %v3166 = vmul.f32 %v3150, %v3165
        %v3167 = vadd.f32 %v3166, 0.112945676
        %v3168 = vmul.f32 %v3150, %v3167
        %v3169 = vadd.f32 %v3168, 0.4994258
        %v3170 = vmul.f32 %v3150, %v3169
        %v3171 = vadd.f32 %v3170, 1.0
        %v3172 = vrcp.pop %v3171
        %v3173 = vmul.f32 %v3171, %v3172
        %v3174 = vsub.f32 1.0, %v3173
        %v3175 = vmul.f32 %v3172, %v3174
        %v3176 = vadd.f32 %v3172, %v3175
        %vm3177 = vweird.f32 %v3171
        %vm3178 = vweird.f32 %v3172
        %vm3179 = vmor %vm3177, %vm3178
        %v3180 = vsel %vm3179, %v3172, %v3176
        %v3181 = vand.u32 2147483647, %v3171
        %vm3182 = vcmp.eq.f32.partialorder %v3181, 8.507059e+37
        %v3183 = vand.u32 %v3171, 2147483648
        %v3184 = vor.u32 1.1754944e-38, %v3183
        %v3185 = vsel %vm3182, %v3184, %v3180
        %v3186 = vmul.f32 %v3161, %v3185
        %v3187 = vmin.f32 %v3186, 1.0
        %v3188 = vmax.f32 %v3187, -1.0
        %v3189 = vmul.f32 %v1253, %v1253
        %v3190 = vmin.f32 16.0, %v3189
        %v3191 = vmul.f32 %v3190, 2.1237322e-06
        %v3192 = vadd.f32 %v3191, 0.00028619796
        %v3193 = vmul.f32 %v3190, %v3192
        %v3194 = vadd.f32 %v3193, 0.0036580483
        %v3195 = vmul.f32 %v3190, %v3194
        %v3196 = vadd.f32 %v3195, 0.05243302
        %v3197 = vmul.f32 %v3190, %v3196
        %v3198 = vadd.f32 %v3197, 0.18741608
        %v3199 = vmul.f32 %v3190, %v3198
        %v3200 = vadd.f32 %v3199, 1.1283791
        %v3201 = vmul.f32 %v1253, %v3200
        %v3202 = vmul.f32 %v3190, 3.8918573e-05
        %v3203 = vadd.f32 %v3202, 0.001143296
        %v3204 = vmul.f32 %v3190, %v3203
        %v3205 = vadd.f32 %v3204, 0.014752088
        %v3206 = vmul.f32 %v3190, %v3205
        %v3207 = vadd.f32 %v3206, 0.112945676
        %v3208 = vmul.f32 %v3190, %v3207
        %v3209 = vadd.f32 %v3208, 0.4994258
        %v3210 = vmul.f32 %v3190, %v3209
        %v3211 = vadd.f32 %v3210, 1.0
        %v3212 = vrcp.pop %v3211
        %v3213 = vmul.f32 %v3211, %v3212
        %v3214 = vsub.f32 1.0, %v3213
        %v3215 = vmul.f32 %v3212, %v3214
        %v3216 = vadd.f32 %v3212, %v3215
        %vm3217 = vweird.f32 %v3211
        %vm3218 = vweird.f32 %v3212
        %vm3219 = vmor %vm3217, %vm3218
        %v3220 = vsel %vm3219, %v3212, %v3216
        %v3221 = vand.u32 2147483647, %v3211
        %vm3222 = vcmp.eq.f32.partialorder %v3221, 8.507059e+37
        %v3223 = vand.u32 %v3211, 2147483648
        %v3224 = vor.u32 1.1754944e-38, %v3223
        %v3225 = vsel %vm3222, %v3224, %v3220
        %v3226 = vmul.f32 %v3201, %v3225
        %v3227 = vmin.f32 %v3226, 1.0
        %v3228 = vmax.f32 %v3227, -1.0
        %v3229 = vmul.f32 %v1254, %v1254
        %v3230 = vmin.f32 16.0, %v3229
        %v3231 = vmul.f32 %v3230, 2.1237322e-06
        %v3232 = vadd.f32 %v3231, 0.00028619796
        %v3233 = vmul.f32 %v3230, %v3232
        %v3234 = vadd.f32 %v3233, 0.0036580483
        %v3235 = vmul.f32 %v3230, %v3234
        %v3236 = vadd.f32 %v3235, 0.05243302
        %v3237 = vmul.f32 %v3230, %v3236
        %v3238 = vadd.f32 %v3237, 0.18741608
        %v3239 = vmul.f32 %v3230, %v3238
        %v3240 = vadd.f32 %v3239, 1.1283791
        %v3241 = vmul.f32 %v1254, %v3240
        %v3242 = vmul.f32 %v3230, 3.8918573e-05
        %v3243 = vadd.f32 %v3242, 0.001143296
        %v3244 = vmul.f32 %v3230, %v3243
        %v3245 = vadd.f32 %v3244, 0.014752088
        %v3246 = vmul.f32 %v3230, %v3245
        %v3247 = vadd.f32 %v3246, 0.112945676
        %v3248 = vmul.f32 %v3230, %v3247
        %v3249 = vadd.f32 %v3248, 0.4994258
        %v3250 = vmul.f32 %v3230, %v3249
        %v3251 = vadd.f32 %v3250, 1.0
        %v3252 = vrcp.pop %v3251
        %v3253 = vmul.f32 %v3251, %v3252
        %v3254 = vsub.f32 1.0, %v3253
        %v3255 = vmul.f32 %v3252, %v3254
        %v3256 = vadd.f32 %v3252, %v3255
        %vm3257 = vweird.f32 %v3251
        %vm3258 = vweird.f32 %v3252
        %vm3259 = vmor %vm3257, %vm3258
        %v3260 = vsel %vm3259, %v3252, %v3256
        %v3261 = vand.u32 2147483647, %v3251
        %vm3262 = vcmp.eq.f32.partialorder %v3261, 8.507059e+37
        %v3263 = vand.u32 %v3251, 2147483648
        %v3264 = vor.u32 1.1754944e-38, %v3263
        %v3265 = vsel %vm3262, %v3264, %v3260
        %v3266 = vmul.f32 %v3241, %v3265
        %v3267 = vmin.f32 %v3266, 1.0
        %v3268 = vmax.f32 %v3267, -1.0
        %v3269 = vmul.f32 %v1255, %v1255
        %v3270 = vmin.f32 16.0, %v3269
        %v3271 = vmul.f32 %v3270, 2.1237322e-06
        %v3272 = vadd.f32 %v3271, 0.00028619796
        %v3273 = vmul.f32 %v3270, %v3272
        %v3274 = vadd.f32 %v3273, 0.0036580483
        %v3275 = vmul.f32 %v3270, %v3274
        %v3276 = vadd.f32 %v3275, 0.05243302
        %v3277 = vmul.f32 %v3270, %v3276
        %v3278 = vadd.f32 %v3277, 0.18741608
        %v3279 = vmul.f32 %v3270, %v3278
        %v3280 = vadd.f32 %v3279, 1.1283791
        %v3281 = vmul.f32 %v1255, %v3280
        %v3282 = vmul.f32 %v3270, 3.8918573e-05
        %v3283 = vadd.f32 %v3282, 0.001143296
        %v3284 = vmul.f32 %v3270, %v3283
        %v3285 = vadd.f32 %v3284, 0.014752088
        %v3286 = vmul.f32 %v3270, %v3285
        %v3287 = vadd.f32 %v3286, 0.112945676
        %v3288 = vmul.f32 %v3270, %v3287
        %v3289 = vadd.f32 %v3288, 0.4994258
        %v3290 = vmul.f32 %v3270, %v3289
        %v3291 = vadd.f32 %v3290, 1.0
        %v3292 = vrcp.pop %v3291
        %v3293 = vmul.f32 %v3291, %v3292
        %v3294 = vsub.f32 1.0, %v3293
        %v3295 = vmul.f32 %v3292, %v3294
        %v3296 = vadd.f32 %v3292, %v3295
        %vm3297 = vweird.f32 %v3291
        %vm3298 = vweird.f32 %v3292
        %vm3299 = vmor %vm3297, %vm3298
        %v3300 = vsel %vm3299, %v3292, %v3296
        %v3301 = vand.u32 2147483647, %v3291
        %vm3302 = vcmp.eq.f32.partialorder %v3301, 8.507059e+37
        %v3303 = vand.u32 %v3291, 2147483648
        %v3304 = vor.u32 1.1754944e-38, %v3303
        %v3305 = vsel %vm3302, %v3304, %v3300
        %v3306 = vmul.f32 %v3281, %v3305
        %v3307 = vmin.f32 %v3306, 1.0
        %v3308 = vmax.f32 %v3307, -1.0
        %v3309 = vmul.f32 %v1256, %v1256
        %v3310 = vmin.f32 16.0, %v3309
        %v3311 = vmul.f32 %v3310, 2.1237322e-06
        %v3312 = vadd.f32 %v3311, 0.00028619796
        %v3313 = vmul.f32 %v3310, %v3312
        %v3314 = vadd.f32 %v3313, 0.0036580483
        %v3315 = vmul.f32 %v3310, %v3314
        %v3316 = vadd.f32 %v3315, 0.05243302
        %v3317 = vmul.f32 %v3310, %v3316
        %v3318 = vadd.f32 %v3317, 0.18741608
        %v3319 = vmul.f32 %v3310, %v3318
        %v3320 = vadd.f32 %v3319, 1.1283791
        %v3321 = vmul.f32 %v1256, %v3320
        %v3322 = vmul.f32 %v3310, 3.8918573e-05
        %v3323 = vadd.f32 %v3322, 0.001143296
        %v3324 = vmul.f32 %v3310, %v3323
        %v3325 = vadd.f32 %v3324, 0.014752088
        %v3326 = vmul.f32 %v3310, %v3325
        %v3327 = vadd.f32 %v3326, 0.112945676
        %v3328 = vmul.f32 %v3310, %v3327
        %v3329 = vadd.f32 %v3328, 0.4994258
        %v3330 = vmul.f32 %v3310, %v3329
        %v3331 = vadd.f32 %v3330, 1.0
        %v3332 = vrcp.pop %v3331
        %v3333 = vmul.f32 %v3331, %v3332
        %v3334 = vsub.f32 1.0, %v3333
        %v3335 = vmul.f32 %v3332, %v3334
        %v3336 = vadd.f32 %v3332, %v3335
        %vm3337 = vweird.f32 %v3331
        %vm3338 = vweird.f32 %v3332
        %vm3339 = vmor %vm3337, %vm3338
        %v3340 = vsel %vm3339, %v3332, %v3336
        %v3341 = vand.u32 2147483647, %v3331
        %vm3342 = vcmp.eq.f32.partialorder %v3341, 8.507059e+37
        %v3343 = vand.u32 %v3331, 2147483648
        %v3344 = vor.u32 1.1754944e-38, %v3343
        %v3345 = vsel %vm3342, %v3344, %v3340
        %v3346 = vmul.f32 %v3321, %v3345
        %v3347 = vmin.f32 %v3346, 1.0
        %v3348 = vmax.f32 %v3347, -1.0
        %v3349 = vmul.f32 %v1257, %v1257
        %v3350 = vmin.f32 16.0, %v3349
        %v3351 = vmul.f32 %v3350, 2.1237322e-06
        %v3352 = vadd.f32 %v3351, 0.00028619796
        %v3353 = vmul.f32 %v3350, %v3352
        %v3354 = vadd.f32 %v3353, 0.0036580483
        %v3355 = vmul.f32 %v3350, %v3354
        %v3356 = vadd.f32 %v3355, 0.05243302
        %v3357 = vmul.f32 %v3350, %v3356
        %v3358 = vadd.f32 %v3357, 0.18741608
        %v3359 = vmul.f32 %v3350, %v3358
        %v3360 = vadd.f32 %v3359, 1.1283791
        %v3361 = vmul.f32 %v1257, %v3360
        %v3362 = vmul.f32 %v3350, 3.8918573e-05
        %v3363 = vadd.f32 %v3362, 0.001143296
        %v3364 = vmul.f32 %v3350, %v3363
        %v3365 = vadd.f32 %v3364, 0.014752088
        %v3366 = vmul.f32 %v3350, %v3365
        %v3367 = vadd.f32 %v3366, 0.112945676
        %v3368 = vmul.f32 %v3350, %v3367
        %v3369 = vadd.f32 %v3368, 0.4994258
        %v3370 = vmul.f32 %v3350, %v3369
        %v3371 = vadd.f32 %v3370, 1.0
        %v3372 = vrcp.pop %v3371
        %v3373 = vmul.f32 %v3371, %v3372
        %v3374 = vsub.f32 1.0, %v3373
        %v3375 = vmul.f32 %v3372, %v3374
        %v3376 = vadd.f32 %v3372, %v3375
        %vm3377 = vweird.f32 %v3371
        %vm3378 = vweird.f32 %v3372
        %vm3379 = vmor %vm3377, %vm3378
        %v3380 = vsel %vm3379, %v3372, %v3376
        %v3381 = vand.u32 2147483647, %v3371
        %vm3382 = vcmp.eq.f32.partialorder %v3381, 8.507059e+37
        %v3383 = vand.u32 %v3371, 2147483648
        %v3384 = vor.u32 1.1754944e-38, %v3383
        %v3385 = vsel %vm3382, %v3384, %v3380
        %v3386 = vmul.f32 %v3361, %v3385
        %v3387 = vmin.f32 %v3386, 1.0
        %v3388 = vmax.f32 %v3387, -1.0
        %v3389 = vmul.f32 %v1258, %v1258
        %v3390 = vmin.f32 16.0, %v3389
        %v3391 = vmul.f32 %v3390, 2.1237322e-06
        %v3392 = vadd.f32 %v3391, 0.00028619796
        %v3393 = vmul.f32 %v3390, %v3392
        %v3394 = vadd.f32 %v3393, 0.0036580483
        %v3395 = vmul.f32 %v3390, %v3394
        %v3396 = vadd.f32 %v3395, 0.05243302
        %v3397 = vmul.f32 %v3390, %v3396
        %v3398 = vadd.f32 %v3397, 0.18741608
        %v3399 = vmul.f32 %v3390, %v3398
        %v3400 = vadd.f32 %v3399, 1.1283791
        %v3401 = vmul.f32 %v1258, %v3400
        %v3402 = vmul.f32 %v3390, 3.8918573e-05
        %v3403 = vadd.f32 %v3402, 0.001143296
        %v3404 = vmul.f32 %v3390, %v3403
        %v3405 = vadd.f32 %v3404, 0.014752088
        %v3406 = vmul.f32 %v3390, %v3405
        %v3407 = vadd.f32 %v3406, 0.112945676
        %v3408 = vmul.f32 %v3390, %v3407
        %v3409 = vadd.f32 %v3408, 0.4994258
        %v3410 = vmul.f32 %v3390, %v3409
        %v3411 = vadd.f32 %v3410, 1.0
        %v3412 = vrcp.pop %v3411
        %v3413 = vmul.f32 %v3411, %v3412
        %v3414 = vsub.f32 1.0, %v3413
        %v3415 = vmul.f32 %v3412, %v3414
        %v3416 = vadd.f32 %v3412, %v3415
        %vm3417 = vweird.f32 %v3411
        %vm3418 = vweird.f32 %v3412
        %vm3419 = vmor %vm3417, %vm3418
        %v3420 = vsel %vm3419, %v3412, %v3416
        %v3421 = vand.u32 2147483647, %v3411
        %vm3422 = vcmp.eq.f32.partialorder %v3421, 8.507059e+37
        %v3423 = vand.u32 %v3411, 2147483648
        %v3424 = vor.u32 1.1754944e-38, %v3423
        %v3425 = vsel %vm3422, %v3424, %v3420
        %v3426 = vmul.f32 %v3401, %v3425
        %v3427 = vmin.f32 %v3426, 1.0
        %v3428 = vmax.f32 %v3427, -1.0
        %v3429 = vmul.f32 %v1259, %v1259
        %v3430 = vmin.f32 16.0, %v3429
        %v3431 = vmul.f32 %v3430, 2.1237322e-06
        %v3432 = vadd.f32 %v3431, 0.00028619796
        %v3433 = vmul.f32 %v3430, %v3432
        %v3434 = vadd.f32 %v3433, 0.0036580483
        %v3435 = vmul.f32 %v3430, %v3434
        %v3436 = vadd.f32 %v3435, 0.05243302
        %v3437 = vmul.f32 %v3430, %v3436
        %v3438 = vadd.f32 %v3437, 0.18741608
        %v3439 = vmul.f32 %v3430, %v3438
        %v3440 = vadd.f32 %v3439, 1.1283791
        %v3441 = vmul.f32 %v1259, %v3440
        %v3442 = vmul.f32 %v3430, 3.8918573e-05
        %v3443 = vadd.f32 %v3442, 0.001143296
        %v3444 = vmul.f32 %v3430, %v3443
        %v3445 = vadd.f32 %v3444, 0.014752088
        %v3446 = vmul.f32 %v3430, %v3445
        %v3447 = vadd.f32 %v3446, 0.112945676
        %v3448 = vmul.f32 %v3430, %v3447
        %v3449 = vadd.f32 %v3448, 0.4994258
        %v3450 = vmul.f32 %v3430, %v3449
        %v3451 = vadd.f32 %v3450, 1.0
        %v3452 = vrcp.pop %v3451
        %v3453 = vmul.f32 %v3451, %v3452
        %v3454 = vsub.f32 1.0, %v3453
        %v3455 = vmul.f32 %v3452, %v3454
        %v3456 = vadd.f32 %v3452, %v3455
        %vm3457 = vweird.f32 %v3451
        %vm3458 = vweird.f32 %v3452
        %vm3459 = vmor %vm3457, %vm3458
        %v3460 = vsel %vm3459, %v3452, %v3456
        %v3461 = vand.u32 2147483647, %v3451
        %vm3462 = vcmp.eq.f32.partialorder %v3461, 8.507059e+37
        %v3463 = vand.u32 %v3451, 2147483648
        %v3464 = vor.u32 1.1754944e-38, %v3463
        %v3465 = vsel %vm3462, %v3464, %v3460
        %v3466 = vmul.f32 %v3441, %v3465
        %v3467 = vmin.f32 %v3466, 1.0
        %v3468 = vmax.f32 %v3467, -1.0
        %v3469 = vmul.f32 %v1260, %v1260
        %v3470 = vmin.f32 16.0, %v3469
        %v3471 = vmul.f32 %v3470, 2.1237322e-06
        %v3472 = vadd.f32 %v3471, 0.00028619796
        %v3473 = vmul.f32 %v3470, %v3472
        %v3474 = vadd.f32 %v3473, 0.0036580483
        %v3475 = vmul.f32 %v3470, %v3474
        %v3476 = vadd.f32 %v3475, 0.05243302
        %v3477 = vmul.f32 %v3470, %v3476
        %v3478 = vadd.f32 %v3477, 0.18741608
        %v3479 = vmul.f32 %v3470, %v3478
        %v3480 = vadd.f32 %v3479, 1.1283791
        %v3481 = vmul.f32 %v1260, %v3480
        %v3482 = vmul.f32 %v3470, 3.8918573e-05
        %v3483 = vadd.f32 %v3482, 0.001143296
        %v3484 = vmul.f32 %v3470, %v3483
        %v3485 = vadd.f32 %v3484, 0.014752088
        %v3486 = vmul.f32 %v3470, %v3485
        %v3487 = vadd.f32 %v3486, 0.112945676
        %v3488 = vmul.f32 %v3470, %v3487
        %v3489 = vadd.f32 %v3488, 0.4994258
        %v3490 = vmul.f32 %v3470, %v3489
        %v3491 = vadd.f32 %v3490, 1.0
        %v3492 = vrcp.pop %v3491
        %v3493 = vmul.f32 %v3491, %v3492
        %v3494 = vsub.f32 1.0, %v3493
        %v3495 = vmul.f32 %v3492, %v3494
        %v3496 = vadd.f32 %v3492, %v3495
        %vm3497 = vweird.f32 %v3491
        %vm3498 = vweird.f32 %v3492
        %vm3499 = vmor %vm3497, %vm3498
        %v3500 = vsel %vm3499, %v3492, %v3496
        %v3501 = vand.u32 2147483647, %v3491
        %vm3502 = vcmp.eq.f32.partialorder %v3501, 8.507059e+37
        %v3503 = vand.u32 %v3491, 2147483648
        %v3504 = vor.u32 1.1754944e-38, %v3503
        %v3505 = vsel %vm3502, %v3504, %v3500
        %v3506 = vmul.f32 %v3481, %v3505
        %v3507 = vmin.f32 %v3506, 1.0
        %v3508 = vmax.f32 %v3507, -1.0
        %v3509 = vmul.f32 %v1261, %v1261
        %v3510 = vmin.f32 16.0, %v3509
        %v3511 = vmul.f32 %v3510, 2.1237322e-06
        %v3512 = vadd.f32 %v3511, 0.00028619796
        %v3513 = vmul.f32 %v3510, %v3512
        %v3514 = vadd.f32 %v3513, 0.0036580483
        %v3515 = vmul.f32 %v3510, %v3514
        %v3516 = vadd.f32 %v3515, 0.05243302
        %v3517 = vmul.f32 %v3510, %v3516
        %v3518 = vadd.f32 %v3517, 0.18741608
        %v3519 = vmul.f32 %v3510, %v3518
        %v3520 = vadd.f32 %v3519, 1.1283791
        %v3521 = vmul.f32 %v1261, %v3520
        %v3522 = vmul.f32 %v3510, 3.8918573e-05
        %v3523 = vadd.f32 %v3522, 0.001143296
        %v3524 = vmul.f32 %v3510, %v3523
        %v3525 = vadd.f32 %v3524, 0.014752088
        %v3526 = vmul.f32 %v3510, %v3525
        %v3527 = vadd.f32 %v3526, 0.112945676
        %v3528 = vmul.f32 %v3510, %v3527
        %v3529 = vadd.f32 %v3528, 0.4994258
        %v3530 = vmul.f32 %v3510, %v3529
        %v3531 = vadd.f32 %v3530, 1.0
        %v3532 = vrcp.pop %v3531
        %v3533 = vmul.f32 %v3531, %v3532
        %v3534 = vsub.f32 1.0, %v3533
        %v3535 = vmul.f32 %v3532, %v3534
        %v3536 = vadd.f32 %v3532, %v3535
        %vm3537 = vweird.f32 %v3531
        %vm3538 = vweird.f32 %v3532
        %vm3539 = vmor %vm3537, %vm3538
        %v3540 = vsel %vm3539, %v3532, %v3536
        %v3541 = vand.u32 2147483647, %v3531
        %vm3542 = vcmp.eq.f32.partialorder %v3541, 8.507059e+37
        %v3543 = vand.u32 %v3531, 2147483648
        %v3544 = vor.u32 1.1754944e-38, %v3543
        %v3545 = vsel %vm3542, %v3544, %v3540
        %v3546 = vmul.f32 %v3521, %v3545
        %v3547 = vmin.f32 %v3546, 1.0
        %v3548 = vmax.f32 %v3547, -1.0
        %v3549 = vmul.f32 %v1262, %v1262
        %v3550 = vmin.f32 16.0, %v3549
        %v3551 = vmul.f32 %v3550, 2.1237322e-06
        %v3552 = vadd.f32 %v3551, 0.00028619796
        %v3553 = vmul.f32 %v3550, %v3552
        %v3554 = vadd.f32 %v3553, 0.0036580483
        %v3555 = vmul.f32 %v3550, %v3554
        %v3556 = vadd.f32 %v3555, 0.05243302
        %v3557 = vmul.f32 %v3550, %v3556
        %v3558 = vadd.f32 %v3557, 0.18741608
        %v3559 = vmul.f32 %v3550, %v3558
        %v3560 = vadd.f32 %v3559, 1.1283791
        %v3561 = vmul.f32 %v1262, %v3560
        %v3562 = vmul.f32 %v3550, 3.8918573e-05
        %v3563 = vadd.f32 %v3562, 0.001143296
        %v3564 = vmul.f32 %v3550, %v3563
        %v3565 = vadd.f32 %v3564, 0.014752088
        %v3566 = vmul.f32 %v3550, %v3565
        %v3567 = vadd.f32 %v3566, 0.112945676
        %v3568 = vmul.f32 %v3550, %v3567
        %v3569 = vadd.f32 %v3568, 0.4994258
        %v3570 = vmul.f32 %v3550, %v3569
        %v3571 = vadd.f32 %v3570, 1.0
        %v3572 = vrcp.pop %v3571
        %v3573 = vmul.f32 %v3571, %v3572
        %v3574 = vsub.f32 1.0, %v3573
        %v3575 = vmul.f32 %v3572, %v3574
        %v3576 = vadd.f32 %v3572, %v3575
        %vm3577 = vweird.f32 %v3571
        %vm3578 = vweird.f32 %v3572
        %vm3579 = vmor %vm3577, %vm3578
        %v3580 = vsel %vm3579, %v3572, %v3576
        %v3581 = vand.u32 2147483647, %v3571
        %vm3582 = vcmp.eq.f32.partialorder %v3581, 8.507059e+37
        %v3583 = vand.u32 %v3571, 2147483648
        %v3584 = vor.u32 1.1754944e-38, %v3583
        %v3585 = vsel %vm3582, %v3584, %v3580
        %v3586 = vmul.f32 %v3561, %v3585
        %v3587 = vmin.f32 %v3586, 1.0
        %v3588 = vmax.f32 %v3587, -1.0
        %v3589 = vmul.f32 %v1263, %v1263
        %v3590 = vmin.f32 16.0, %v3589
        %v3591 = vmul.f32 %v3590, 2.1237322e-06
        %v3592 = vadd.f32 %v3591, 0.00028619796
        %v3593 = vmul.f32 %v3590, %v3592
        %v3594 = vadd.f32 %v3593, 0.0036580483
        %v3595 = vmul.f32 %v3590, %v3594
        %v3596 = vadd.f32 %v3595, 0.05243302
        %v3597 = vmul.f32 %v3590, %v3596
        %v3598 = vadd.f32 %v3597, 0.18741608
        %v3599 = vmul.f32 %v3590, %v3598
        %v3600 = vadd.f32 %v3599, 1.1283791
        %v3601 = vmul.f32 %v1263, %v3600
        %v3602 = vmul.f32 %v3590, 3.8918573e-05
        %v3603 = vadd.f32 %v3602, 0.001143296
        %v3604 = vmul.f32 %v3590, %v3603
        %v3605 = vadd.f32 %v3604, 0.014752088
        %v3606 = vmul.f32 %v3590, %v3605
        %v3607 = vadd.f32 %v3606, 0.112945676
        %v3608 = vmul.f32 %v3590, %v3607
        %v3609 = vadd.f32 %v3608, 0.4994258
        %v3610 = vmul.f32 %v3590, %v3609
        %v3611 = vadd.f32 %v3610, 1.0
        %v3612 = vrcp.pop %v3611
        %v3613 = vmul.f32 %v3611, %v3612
        %v3614 = vsub.f32 1.0, %v3613
        %v3615 = vmul.f32 %v3612, %v3614
        %v3616 = vadd.f32 %v3612, %v3615
        %vm3617 = vweird.f32 %v3611
        %vm3618 = vweird.f32 %v3612
        %vm3619 = vmor %vm3617, %vm3618
        %v3620 = vsel %vm3619, %v3612, %v3616
        %v3621 = vand.u32 2147483647, %v3611
        %vm3622 = vcmp.eq.f32.partialorder %v3621, 8.507059e+37
        %v3623 = vand.u32 %v3611, 2147483648
        %v3624 = vor.u32 1.1754944e-38, %v3623
        %v3625 = vsel %vm3622, %v3624, %v3620
        %v3626 = vmul.f32 %v3601, %v3625
        %v3627 = vmin.f32 %v3626, 1.0
        %v3628 = vmax.f32 %v3627, -1.0
        %v3629 = vmul.f32 %v1264, %v1264
        %v3630 = vmin.f32 16.0, %v3629
        %v3631 = vmul.f32 %v3630, 2.1237322e-06
        %v3632 = vadd.f32 %v3631, 0.00028619796
        %v3633 = vmul.f32 %v3630, %v3632
        %v3634 = vadd.f32 %v3633, 0.0036580483
        %v3635 = vmul.f32 %v3630, %v3634
        %v3636 = vadd.f32 %v3635, 0.05243302
        %v3637 = vmul.f32 %v3630, %v3636
        %v3638 = vadd.f32 %v3637, 0.18741608
        %v3639 = vmul.f32 %v3630, %v3638
        %v3640 = vadd.f32 %v3639, 1.1283791
        %v3641 = vmul.f32 %v1264, %v3640
        %v3642 = vmul.f32 %v3630, 3.8918573e-05
        %v3643 = vadd.f32 %v3642, 0.001143296
        %v3644 = vmul.f32 %v3630, %v3643
        %v3645 = vadd.f32 %v3644, 0.014752088
        %v3646 = vmul.f32 %v3630, %v3645
        %v3647 = vadd.f32 %v3646, 0.112945676
        %v3648 = vmul.f32 %v3630, %v3647
        %v3649 = vadd.f32 %v3648, 0.4994258
        %v3650 = vmul.f32 %v3630, %v3649
        %v3651 = vadd.f32 %v3650, 1.0
        %v3652 = vrcp.pop %v3651
        %v3653 = vmul.f32 %v3651, %v3652
        %v3654 = vsub.f32 1.0, %v3653
        %v3655 = vmul.f32 %v3652, %v3654
        %v3656 = vadd.f32 %v3652, %v3655
        %vm3657 = vweird.f32 %v3651
        %vm3658 = vweird.f32 %v3652
        %vm3659 = vmor %vm3657, %vm3658
        %v3660 = vsel %vm3659, %v3652, %v3656
        %v3661 = vand.u32 2147483647, %v3651
        %vm3662 = vcmp.eq.f32.partialorder %v3661, 8.507059e+37
        %v3663 = vand.u32 %v3651, 2147483648
        %v3664 = vor.u32 1.1754944e-38, %v3663
        %v3665 = vsel %vm3662, %v3664, %v3660
        %v3666 = vmul.f32 %v3641, %v3665
        %v3667 = vmin.f32 %v3666, 1.0
        %v3668 = vmax.f32 %v3667, -1.0
        %v3669 = vmul.f32 %v1265, %v1265
        %v3670 = vmin.f32 16.0, %v3669
        %v3671 = vmul.f32 %v3670, 2.1237322e-06
        %v3672 = vadd.f32 %v3671, 0.00028619796
        %v3673 = vmul.f32 %v3670, %v3672
        %v3674 = vadd.f32 %v3673, 0.0036580483
        %v3675 = vmul.f32 %v3670, %v3674
        %v3676 = vadd.f32 %v3675, 0.05243302
        %v3677 = vmul.f32 %v3670, %v3676
        %v3678 = vadd.f32 %v3677, 0.18741608
        %v3679 = vmul.f32 %v3670, %v3678
        %v3680 = vadd.f32 %v3679, 1.1283791
        %v3681 = vmul.f32 %v1265, %v3680
        %v3682 = vmul.f32 %v3670, 3.8918573e-05
        %v3683 = vadd.f32 %v3682, 0.001143296
        %v3684 = vmul.f32 %v3670, %v3683
        %v3685 = vadd.f32 %v3684, 0.014752088
        %v3686 = vmul.f32 %v3670, %v3685
        %v3687 = vadd.f32 %v3686, 0.112945676
        %v3688 = vmul.f32 %v3670, %v3687
        %v3689 = vadd.f32 %v3688, 0.4994258
        %v3690 = vmul.f32 %v3670, %v3689
        %v3691 = vadd.f32 %v3690, 1.0
        %v3692 = vrcp.pop %v3691
        %v3693 = vmul.f32 %v3691, %v3692
        %v3694 = vsub.f32 1.0, %v3693
        %v3695 = vmul.f32 %v3692, %v3694
        %v3696 = vadd.f32 %v3692, %v3695
        %vm3697 = vweird.f32 %v3691
        %vm3698 = vweird.f32 %v3692
        %vm3699 = vmor %vm3697, %vm3698
        %v3700 = vsel %vm3699, %v3692, %v3696
        %v3701 = vand.u32 2147483647, %v3691
        %vm3702 = vcmp.eq.f32.partialorder %v3701, 8.507059e+37
        %v3703 = vand.u32 %v3691, 2147483648
        %v3704 = vor.u32 1.1754944e-38, %v3703
        %v3705 = vsel %vm3702, %v3704, %v3700
        %v3706 = vmul.f32 %v3681, %v3705
        %v3707 = vmin.f32 %v3706, 1.0
        %v3708 = vmax.f32 %v3707, -1.0
        %v3709 = vmul.f32 %v1266, %v1266
        %v3710 = vmin.f32 16.0, %v3709
        %v3711 = vmul.f32 %v3710, 2.1237322e-06
        %v3712 = vadd.f32 %v3711, 0.00028619796
        %v3713 = vmul.f32 %v3710, %v3712
        %v3714 = vadd.f32 %v3713, 0.0036580483
        %v3715 = vmul.f32 %v3710, %v3714
        %v3716 = vadd.f32 %v3715, 0.05243302
        %v3717 = vmul.f32 %v3710, %v3716
        %v3718 = vadd.f32 %v3717, 0.18741608
        %v3719 = vmul.f32 %v3710, %v3718
        %v3720 = vadd.f32 %v3719, 1.1283791
        %v3721 = vmul.f32 %v1266, %v3720
        %v3722 = vmul.f32 %v3710, 3.8918573e-05
        %v3723 = vadd.f32 %v3722, 0.001143296
        %v3724 = vmul.f32 %v3710, %v3723
        %v3725 = vadd.f32 %v3724, 0.014752088
        %v3726 = vmul.f32 %v3710, %v3725
        %v3727 = vadd.f32 %v3726, 0.112945676
        %v3728 = vmul.f32 %v3710, %v3727
        %v3729 = vadd.f32 %v3728, 0.4994258
        %v3730 = vmul.f32 %v3710, %v3729
        %v3731 = vadd.f32 %v3730, 1.0
        %v3732 = vrcp.pop %v3731
        %v3733 = vmul.f32 %v3731, %v3732
        %v3734 = vsub.f32 1.0, %v3733
        %v3735 = vmul.f32 %v3732, %v3734
        %v3736 = vadd.f32 %v3732, %v3735
        %vm3737 = vweird.f32 %v3731
        %vm3738 = vweird.f32 %v3732
        %vm3739 = vmor %vm3737, %vm3738
        %v3740 = vsel %vm3739, %v3732, %v3736
        %v3741 = vand.u32 2147483647, %v3731
        %vm3742 = vcmp.eq.f32.partialorder %v3741, 8.507059e+37
        %v3743 = vand.u32 %v3731, 2147483648
        %v3744 = vor.u32 1.1754944e-38, %v3743
        %v3745 = vsel %vm3742, %v3744, %v3740
        %v3746 = vmul.f32 %v3721, %v3745
        %v3747 = vmin.f32 %v3746, 1.0
        %v3748 = vmax.f32 %v3747, -1.0
        %v3749 = vmul.f32 %v1267, %v1267
        %v3750 = vmin.f32 16.0, %v3749
        %v3751 = vmul.f32 %v3750, 2.1237322e-06
        %v3752 = vadd.f32 %v3751, 0.00028619796
        %v3753 = vmul.f32 %v3750, %v3752
        %v3754 = vadd.f32 %v3753, 0.0036580483
        %v3755 = vmul.f32 %v3750, %v3754
        %v3756 = vadd.f32 %v3755, 0.05243302
        %v3757 = vmul.f32 %v3750, %v3756
        %v3758 = vadd.f32 %v3757, 0.18741608
        %v3759 = vmul.f32 %v3750, %v3758
        %v3760 = vadd.f32 %v3759, 1.1283791
        %v3761 = vmul.f32 %v1267, %v3760
        %v3762 = vmul.f32 %v3750, 3.8918573e-05
        %v3763 = vadd.f32 %v3762, 0.001143296
        %v3764 = vmul.f32 %v3750, %v3763
        %v3765 = vadd.f32 %v3764, 0.014752088
        %v3766 = vmul.f32 %v3750, %v3765
        %v3767 = vadd.f32 %v3766, 0.112945676
        %v3768 = vmul.f32 %v3750, %v3767
        %v3769 = vadd.f32 %v3768, 0.4994258
        %v3770 = vmul.f32 %v3750, %v3769
        %v3771 = vadd.f32 %v3770, 1.0
        %v3772 = vrcp.pop %v3771
        %v3773 = vmul.f32 %v3771, %v3772
        %v3774 = vsub.f32 1.0, %v3773
        %v3775 = vmul.f32 %v3772, %v3774
        %v3776 = vadd.f32 %v3772, %v3775
        %vm3777 = vweird.f32 %v3771
        %vm3778 = vweird.f32 %v3772
        %vm3779 = vmor %vm3777, %vm3778
        %v3780 = vsel %vm3779, %v3772, %v3776
        %v3781 = vand.u32 2147483647, %v3771
        %vm3782 = vcmp.eq.f32.partialorder %v3781, 8.507059e+37
        %v3783 = vand.u32 %v3771, 2147483648
        %v3784 = vor.u32 1.1754944e-38, %v3783
        %v3785 = vsel %vm3782, %v3784, %v3780
        %v3786 = vmul.f32 %v3761, %v3785
        %v3787 = vmin.f32 %v3786, 1.0
        %v3788 = vmax.f32 %v3787, -1.0
        %v3789 = vmul.f32 %v1268, %v1268
        %v3790 = vmin.f32 16.0, %v3789
        %v3791 = vmul.f32 %v3790, 2.1237322e-06
        %v3792 = vadd.f32 %v3791, 0.00028619796
        %v3793 = vmul.f32 %v3790, %v3792
        %v3794 = vadd.f32 %v3793, 0.0036580483
        %v3795 = vmul.f32 %v3790, %v3794
        %v3796 = vadd.f32 %v3795, 0.05243302
        %v3797 = vmul.f32 %v3790, %v3796
        %v3798 = vadd.f32 %v3797, 0.18741608
        %v3799 = vmul.f32 %v3790, %v3798
        %v3800 = vadd.f32 %v3799, 1.1283791
        %v3801 = vmul.f32 %v1268, %v3800
        %v3802 = vmul.f32 %v3790, 3.8918573e-05
        %v3803 = vadd.f32 %v3802, 0.001143296
        %v3804 = vmul.f32 %v3790, %v3803
        %v3805 = vadd.f32 %v3804, 0.014752088
        %v3806 = vmul.f32 %v3790, %v3805
        %v3807 = vadd.f32 %v3806, 0.112945676
        %v3808 = vmul.f32 %v3790, %v3807
        %v3809 = vadd.f32 %v3808, 0.4994258
        %v3810 = vmul.f32 %v3790, %v3809
        %v3811 = vadd.f32 %v3810, 1.0
        %v3812 = vrcp.pop %v3811
        %v3813 = vmul.f32 %v3811, %v3812
        %v3814 = vsub.f32 1.0, %v3813
        %v3815 = vmul.f32 %v3812, %v3814
        %v3816 = vadd.f32 %v3812, %v3815
        %vm3817 = vweird.f32 %v3811
        %vm3818 = vweird.f32 %v3812
        %vm3819 = vmor %vm3817, %vm3818
        %v3820 = vsel %vm3819, %v3812, %v3816
        %v3821 = vand.u32 2147483647, %v3811
        %vm3822 = vcmp.eq.f32.partialorder %v3821, 8.507059e+37
        %v3823 = vand.u32 %v3811, 2147483648
        %v3824 = vor.u32 1.1754944e-38, %v3823
        %v3825 = vsel %vm3822, %v3824, %v3820
        %v3826 = vmul.f32 %v3801, %v3825
        %v3827 = vmin.f32 %v3826, 1.0
        %v3828 = vmax.f32 %v3827, -1.0
        %v3829 = vadd.f32 %v1308, 1.0
        %v3830 = vadd.f32 %v1348, 1.0
        %v3831 = vadd.f32 %v1388, 1.0
        %v3832 = vadd.f32 %v1428, 1.0
        %v3833 = vadd.f32 %v1468, 1.0
        %v3834 = vadd.f32 %v1508, 1.0
        %v3835 = vadd.f32 %v1548, 1.0
        %v3836 = vadd.f32 %v1588, 1.0
        %v3837 = vadd.f32 %v1628, 1.0
        %v3838 = vadd.f32 %v1668, 1.0
        %v3839 = vadd.f32 %v1708, 1.0
        %v3840 = vadd.f32 %v1748, 1.0
        %v3841 = vadd.f32 %v1788, 1.0
        %v3842 = vadd.f32 %v1828, 1.0
        %v3843 = vadd.f32 %v1868, 1.0
        %v3844 = vadd.f32 %v1908, 1.0
        %v3845 = vadd.f32 %v1948, 1.0
        %v3846 = vadd.f32 %v1988, 1.0
        %v3847 = vadd.f32 %v2028, 1.0
        %v3848 = vadd.f32 %v2068, 1.0
        %v3849 = vadd.f32 %v2108, 1.0
        %v3850 = vadd.f32 %v2148, 1.0
        %v3851 = vadd.f32 %v2188, 1.0
        %v3852 = vadd.f32 %v2228, 1.0
        %v3853 = vadd.f32 %v2268, 1.0
        %v3854 = vadd.f32 %v2308, 1.0
        %v3855 = vadd.f32 %v2348, 1.0
        %v3856 = vadd.f32 %v2388, 1.0
        %v3857 = vadd.f32 %v2428, 1.0
        %v3858 = vadd.f32 %v2468, 1.0
        %v3859 = vadd.f32 %v2508, 1.0
        %v3860 = vadd.f32 %v2548, 1.0
        %v3861 = vadd.f32 %v2588, 1.0
        %v3862 = vadd.f32 %v2628, 1.0
        %v3863 = vadd.f32 %v2668, 1.0
        %v3864 = vadd.f32 %v2708, 1.0
        %v3865 = vadd.f32 %v2748, 1.0
        %v3866 = vadd.f32 %v2788, 1.0
        %v3867 = vadd.f32 %v2828, 1.0
        %v3868 = vadd.f32 %v2868, 1.0
        %v3869 = vadd.f32 %v2908, 1.0
        %v3870 = vadd.f32 %v2948, 1.0
        %v3871 = vadd.f32 %v2988, 1.0
        %v3872 = vadd.f32 %v3028, 1.0
        %v3873 = vadd.f32 %v3068, 1.0
        %v3874 = vadd.f32 %v3108, 1.0
        %v3875 = vadd.f32 %v3148, 1.0
        %v3876 = vadd.f32 %v3188, 1.0
        %v3877 = vadd.f32 %v3228, 1.0
        %v3878 = vadd.f32 %v3268, 1.0
        %v3879 = vadd.f32 %v3308, 1.0
        %v3880 = vadd.f32 %v3348, 1.0
        %v3881 = vadd.f32 %v3388, 1.0
        %v3882 = vadd.f32 %v3428, 1.0
        %v3883 = vadd.f32 %v3468, 1.0
        %v3884 = vadd.f32 %v3508, 1.0
        %v3885 = vadd.f32 %v3548, 1.0
        %v3886 = vadd.f32 %v3588, 1.0
        %v3887 = vadd.f32 %v3628, 1.0
        %v3888 = vadd.f32 %v3668, 1.0
        %v3889 = vadd.f32 %v3708, 1.0
        %v3890 = vadd.f32 %v3748, 1.0
        %v3891 = vadd.f32 %v3788, 1.0
        %v3892 = vadd.f32 %v3828, 1.0
        %v3893 = vmul.f32 %v1141, %v3829
        %v3894 = vmul.f32 %v1142, %v3830
        %v3895 = vmul.f32 %v1143, %v3831
        %v3896 = vmul.f32 %v1144, %v3832
        %v3897 = vmul.f32 %v1145, %v3833
        %v3898 = vmul.f32 %v1146, %v3834
        %v3899 = vmul.f32 %v1147, %v3835
        %v3900 = vmul.f32 %v1148, %v3836
        %v3901 = vmul.f32 %v1149, %v3837
        %v3902 = vmul.f32 %v1150, %v3838
        %v3903 = vmul.f32 %v1151, %v3839
        %v3904 = vmul.f32 %v1152, %v3840
        %v3905 = vmul.f32 %v1153, %v3841
        %v3906 = vmul.f32 %v1154, %v3842
        %v3907 = vmul.f32 %v1155, %v3843
        %v3908 = vmul.f32 %v1156, %v3844
        %v3909 = vmul.f32 %v1157, %v3845
        %v3910 = vmul.f32 %v1158, %v3846
        %v3911 = vmul.f32 %v1159, %v3847
        %v3912 = vmul.f32 %v1160, %v3848
        %v3913 = vmul.f32 %v1161, %v3849
        %v3914 = vmul.f32 %v1162, %v3850
        %v3915 = vmul.f32 %v1163, %v3851
        %v3916 = vmul.f32 %v1164, %v3852
        %v3917 = vmul.f32 %v1165, %v3853
        %v3918 = vmul.f32 %v1166, %v3854
        %v3919 = vmul.f32 %v1167, %v3855
        %v3920 = vmul.f32 %v1168, %v3856
        %v3921 = vmul.f32 %v1169, %v3857
        %v3922 = vmul.f32 %v1170, %v3858
        %v3923 = vmul.f32 %v1171, %v3859
        %v3924 = vmul.f32 %v1172, %v3860
        %v3925 = vmul.f32 %v1173, %v3861
        %v3926 = vmul.f32 %v1174, %v3862
        %v3927 = vmul.f32 %v1175, %v3863
        %v3928 = vmul.f32 %v1176, %v3864
        %v3929 = vmul.f32 %v1177, %v3865
        %v3930 = vmul.f32 %v1178, %v3866
        %v3931 = vmul.f32 %v1179, %v3867
        %v3932 = vmul.f32 %v1180, %v3868
        %v3933 = vmul.f32 %v1181, %v3869
        %v3934 = vmul.f32 %v1182, %v3870
        %v3935 = vmul.f32 %v1183, %v3871
        %v3936 = vmul.f32 %v1184, %v3872
        %v3937 = vmul.f32 %v1185, %v3873
        %v3938 = vmul.f32 %v1186, %v3874
        %v3939 = vmul.f32 %v1187, %v3875
        %v3940 = vmul.f32 %v1188, %v3876
        %v3941 = vmul.f32 %v1189, %v3877
        %v3942 = vmul.f32 %v1190, %v3878
        %v3943 = vmul.f32 %v1191, %v3879
        %v3944 = vmul.f32 %v1192, %v3880
        %v3945 = vmul.f32 %v1193, %v3881
        %v3946 = vmul.f32 %v1194, %v3882
        %v3947 = vmul.f32 %v1195, %v3883
        %v3948 = vmul.f32 %v1196, %v3884
        %v3949 = vmul.f32 %v1197, %v3885
        %v3950 = vmul.f32 %v1198, %v3886
        %v3951 = vmul.f32 %v1199, %v3887
        %v3952 = vmul.f32 %v1200, %v3888
        %v3953 = vmul.f32 %v1201, %v3889
        %v3954 = vmul.f32 %v1202, %v3890
        %v3955 = vmul.f32 %v1203, %v3891
        %v3956 = vmul.f32 %v1204, %v3892
        %v3957 = vld [vmem:[%s4] sm:$0xff]
        %v3958 = vld [vmem:[%s4 + $0x8] sm:$0xff]
        %v3959 = vld [vmem:[%s4 + $0x10] sm:$0xff]
        %v3960 = vld [vmem:[%s4 + $0x18] sm:$0xff]
        %v3961 = vld [vmem:[%s5] sm:$0xff]
        %v3962 = vld [vmem:[%s5 + $0x8] sm:$0xff]
        %v3963 = vld [vmem:[%s5 + $0x10] sm:$0xff]
        %v3964 = vld [vmem:[%s5 + $0x18] sm:$0xff]
        %3966 = vset.pattern.permute.xlu0 0
        %3967 = vperm.xlu0 %3966, %v3961
        %v3968 = vpop.permute.xlu0 %3967
        %3971 = vset.pattern.permute.xlu0 0
        %3972 = vperm.xlu0 %3971, %v3962
        %v3973 = vpop.permute.xlu0 %3972
        %3976 = vset.pattern.permute.xlu0 0
        %3977 = vperm.xlu0 %3976, %v3963
        %v3978 = vpop.permute.xlu0 %3977
        %3981 = vset.pattern.permute.xlu0 0
        %3982 = vperm.xlu0 %3981, %v3964
        %v3983 = vpop.permute.xlu0 %3982
        %3985 = vmatpush.msra.mxu0 %v3953
        %3986 = vmatpush.msra.mxu0 %v3949
        %3987 = vmatpush.msra.mxu0 %v3945
        %3988 = vmatpush.msra.mxu0 %v3941
        %3989 = vmatpush.msra.mxu0 %v3937
        %3990 = vmatpush.msra.mxu0 %v3933
        %3991 = vmatpush.msra.mxu0 %v3929
        %3992 = vmatpush.msra.mxu0 %v3925
        %3993 = vmatpush.msra.mxu0 %v3921
        %3994 = vmatpush.msra.mxu0 %v3917
        %3995 = vmatpush.msra.mxu0 %v3913
        %3996 = vmatpush.msra.mxu0 %v3909
        %3997 = vmatpush.msra.mxu0 %v3905
        %3998 = vmatpush.msra.mxu0 %v3901
        %3999 = vmatpush.msra.mxu0 %v3897
        %4000 = vmatpush.msra.mxu0 %v3893
        %4001 = vmatmul.f32.gmra.mxu0 %v3957
        %v4002 = vpop.f32.mrf.mxu0
        %v4003 = vadd.f32 %v3968, %v4002
        %4004 = vmatmul.f32.gmra.mxu0 %v3958
        %v4005 = vpop.f32.mrf.mxu0
        %v4006 = vadd.f32 %v3973, %v4005
        %4007 = vmatmul.f32.gmra.mxu0 %v3959
        %v4008 = vpop.f32.mrf.mxu0
        %v4009 = vadd.f32 %v3978, %v4008
        %4010 = vmatmul.f32.gmra.mxu0 %v3960
        %v4011 = vpop.f32.mrf.mxu0
        %v4012 = vadd.f32 %v3983, %v4011
        %4013 = vdwg.mxu0
        %4014 = vmatpush.msra.mxu0 %v3954
        %4015 = vmatpush.msra.mxu0 %v3950
        %4016 = vmatpush.msra.mxu0 %v3946
        %4017 = vmatpush.msra.mxu0 %v3942
        %4018 = vmatpush.msra.mxu0 %v3938
        %4019 = vmatpush.msra.mxu0 %v3934
        %4020 = vmatpush.msra.mxu0 %v3930
        %4021 = vmatpush.msra.mxu0 %v3926
        %4022 = vmatpush.msra.mxu0 %v3922
        %4023 = vmatpush.msra.mxu0 %v3918
        %4024 = vmatpush.msra.mxu0 %v3914
        %4025 = vmatpush.msra.mxu0 %v3910
        %4026 = vmatpush.msra.mxu0 %v3906
        %4027 = vmatpush.msra.mxu0 %v3902
        %4028 = vmatpush.msra.mxu0 %v3898
        %4029 = vmatpush.msra.mxu0 %v3894
        %4030 = vmatmul.f32.gmra.mxu0 %v3957
        %v4031 = vpop.f32.mrf.mxu0
        %v4032 = vadd.f32 %v3968, %v4031
        %4033 = vmatmul.f32.gmra.mxu0 %v3958
        %v4034 = vpop.f32.mrf.mxu0
        %v4035 = vadd.f32 %v3973, %v4034
        %4036 = vmatmul.f32.gmra.mxu0 %v3959
        %v4037 = vpop.f32.mrf.mxu0
        %v4038 = vadd.f32 %v3978, %v4037
        %4039 = vmatmul.f32.gmra.mxu0 %v3960
        %v4040 = vpop.f32.mrf.mxu0
        %v4041 = vadd.f32 %v3983, %v4040
        %4042 = vdwg.mxu0
        %4043 = vmatpush.msra.mxu0 %v3955
        %4044 = vmatpush.msra.mxu0 %v3951
        %4045 = vmatpush.msra.mxu0 %v3947
        %4046 = vmatpush.msra.mxu0 %v3943
        %4047 = vmatpush.msra.mxu0 %v3939
        %4048 = vmatpush.msra.mxu0 %v3935
        %4049 = vmatpush.msra.mxu0 %v3931
        %4050 = vmatpush.msra.mxu0 %v3927
        %4051 = vmatpush.msra.mxu0 %v3923
        %4052 = vmatpush.msra.mxu0 %v3919
        %4053 = vmatpush.msra.mxu0 %v3915
        %4054 = vmatpush.msra.mxu0 %v3911
        %4055 = vmatpush.msra.mxu0 %v3907
        %4056 = vmatpush.msra.mxu0 %v3903
        %4057 = vmatpush.msra.mxu0 %v3899
        %4058 = vmatpush.msra.mxu0 %v3895
        %4059 = vmatmul.f32.gmra.mxu0 %v3957
        %v4060 = vpop.f32.mrf.mxu0
        %v4061 = vadd.f32 %v3968, %v4060
        %4062 = vmatmul.f32.gmra.mxu0 %v3958
        %v4063 = vpop.f32.mrf.mxu0
        %v4064 = vadd.f32 %v3973, %v4063
        %4065 = vmatmul.f32.gmra.mxu0 %v3959
        %v4066 = vpop.f32.mrf.mxu0
        %v4067 = vadd.f32 %v3978, %v4066
        %4068 = vmatmul.f32.gmra.mxu0 %v3960
        %v4069 = vpop.f32.mrf.mxu0
        %v4070 = vadd.f32 %v3983, %v4069
        %4071 = vdwg.mxu0
        %4072 = vmatpush.msra.mxu0 %v3956
        %4073 = vmatpush.msra.mxu0 %v3952
        %4074 = vmatpush.msra.mxu0 %v3948
        %4075 = vmatpush.msra.mxu0 %v3944
        %4076 = vmatpush.msra.mxu0 %v3940
        %4077 = vmatpush.msra.mxu0 %v3936
        %4078 = vmatpush.msra.mxu0 %v3932
        %4079 = vmatpush.msra.mxu0 %v3928
        %4080 = vmatpush.msra.mxu0 %v3924
        %4081 = vmatpush.msra.mxu0 %v3920
        %4082 = vmatpush.msra.mxu0 %v3916
        %4083 = vmatpush.msra.mxu0 %v3912
        %4084 = vmatpush.msra.mxu0 %v3908
        %4085 = vmatpush.msra.mxu0 %v3904
        %4086 = vmatpush.msra.mxu0 %v3900
        %4087 = vmatpush.msra.mxu0 %v3896
        %4088 = vmatmul.f32.gmra.mxu0 %v3957
        %v4089 = vpop.f32.mrf.mxu0
        %v4090 = vadd.f32 %v3968, %v4089
        %4091 = vmatmul.f32.gmra.mxu0 %v3958
        %v4092 = vpop.f32.mrf.mxu0
        %v4093 = vadd.f32 %v3973, %v4092
        %4094 = vmatmul.f32.gmra.mxu0 %v3959
        %v4095 = vpop.f32.mrf.mxu0
        %v4096 = vadd.f32 %v3978, %v4095
        %4097 = vmatmul.f32.gmra.mxu0 %v3960
        %v4098 = vpop.f32.mrf.mxu0
        %v4099 = vadd.f32 %v3983, %v4098
        %4100 = vdwg.mxu0
        %v4101 = vadd.f32 %v525, %v4003
        %v4102 = vadd.f32 %v526, %v4032
        %v4103 = vadd.f32 %v527, %v4061
        %v4104 = vadd.f32 %v528, %v4090
        %v4105 = vadd.f32 %v529, %v4006
        %v4106 = vadd.f32 %v530, %v4035
        %v4107 = vadd.f32 %v531, %v4064
        %v4108 = vadd.f32 %v532, %v4093
        %v4109 = vadd.f32 %v533, %v4009
        %v4110 = vadd.f32 %v534, %v4038
        %v4111 = vadd.f32 %v535, %v4067
        %v4112 = vadd.f32 %v536, %v4096
        %v4113 = vadd.f32 %v537, %v4012
        %v4114 = vadd.f32 %v538, %v4041
        %v4115 = vadd.f32 %v539, %v4070
        %v4116 = vadd.f32 %v540, %v4099
        %4117 = vst [vmem:[%s295] sm:$0xff] %v4101
        %4118 = vst [vmem:[%s295 + $0x8] sm:$0xff] %v4102
        %4119 = vst [vmem:[%s295 + $0x10] sm:$0xff] %v4103
        %4120 = vst [vmem:[%s295 + $0x18] sm:$0xff] %v4104
        %4121 = vst [vmem:[%s295 + $0x20] sm:$0xff] %v4105
        %4122 = vst [vmem:[%s295 + $0x28] sm:$0xff] %v4106
        %4123 = vst [vmem:[%s295 + $0x30] sm:$0xff] %v4107
        %4124 = vst [vmem:[%s295 + $0x38] sm:$0xff] %v4108
        %4125 = vst [vmem:[%s295 + $0x40] sm:$0xff] %v4109
        %4126 = vst [vmem:[%s295 + $0x48] sm:$0xff] %v4110
        %4127 = vst [vmem:[%s295 + $0x50] sm:$0xff] %v4111
        %4128 = vst [vmem:[%s295 + $0x58] sm:$0xff] %v4112
        %4129 = vst [vmem:[%s295 + $0x60] sm:$0xff] %v4113
        %4130 = vst [vmem:[%s295 + $0x68] sm:$0xff] %v4114
        %4131 = vst [vmem:[%s295 + $0x70] sm:$0xff] %v4115
        %4132 = vst [vmem:[%s295 + $0x78] sm:$0xff] %v4116
        %s4133 = sand.u32 %s182, 1
        %s4134 = scalar_lea.sflag [#allocation3], %s4133
        %s4135 = sand.u32 %s182, 1
        %s4136 = smul.addr %s4135, 128
        %s4137 = scalar_lea.vmem [#allocation2], %s4136
        // Predicated region
        $region45: #{tpu_custom_call.1} parent=43 // pred_check
          %p4138 = pneg %p192
        $region46: #{tpu_custom_call.1} parent=43 // pred_check_branch
          %4140 = sbr.rel (%p4138) target = $region48
        $region47: #{tpu_custom_call.1} parent=43 // pred_region
          %s4141 = smul.u32 4, %s25
          %4143 = vsyncadd %s4134, 0
          %s4144 = smul.addr %s24, 16
          %s4145 = sadd.s32 %s4141, %s4144
          %s4146 = smul.addr %s4145, 8
          %s4147 = scalar_lea.hbm %s6, %s4146
          %s4148 = sshll.u32 %s4137, 4
          %s4149 = int_to_ptr.vmem [resolvable:$true] %s4148
          %s4150 = sshll.u32 %s4147, 4
          %s4151 = int_to_ptr.hbm [resolvable:$true] %s4150
          %4156 = dma.vmem_to_hbm [thread:$0]  %s4149, 2048, %s4151, %s4134, 512, 512, 32
        $region48: #{tpu_custom_call.1} parent=43 // pred_fallthru
          _
      $region44: #{tpu_custom_call.1} parent=5 // pred_fallthru
        _
      %p4157 = scmp.le.s32.totalorder 2, %s15
      // Predicated region
      $region49: #{tpu_custom_call.1} parent=5 // pred_check
        %p4158 = pneg %p4157
      $region50: #{tpu_custom_call.1} parent=5 // pred_check_branch
        %4160 = sbr.rel (%p4158) target = $region52
      $region51: #{tpu_custom_call.1} parent=5 // pred_region
        %s4161 = ssub.s32 %s15, 2
        // Predicated region
        $region53: #{tpu_custom_call.1} parent=51 // pred_check
          %p4162 = pneg %p198
        $region54: #{tpu_custom_call.1} parent=51 // pred_check_branch
          %4164 = sbr.rel (%p4162) target = $region56
        $region55: #{tpu_custom_call.1} parent=51 // pred_region
          %s4165 = sand.u32 %s183, 1
          %s4166 = scalar_lea.sflag [#allocation3], %s4165
          %s4167 = sand.u32 %s183, 1
          %s4168 = smul.addr %s4167, 128
          %s4169 = scalar_lea.vmem [#allocation2], %s4168
          %4171 = dma.done %s4166, 2048
        $region56: #{tpu_custom_call.1} parent=51 // pred_fallthru
          _
      $region52: #{tpu_custom_call.1} parent=5 // pred_fallthru
        _
    $region6: #{tpu_custom_call.1} parent=1 // loop_footer
      %s19 = sadd.s32 1, %s15
    $region7: #{tpu_custom_call.1} parent=1 // loop_footer_branch
      %14 = sbr.rel target = $region3
    $region8: #{tpu_custom_call.1} parent=1 // loop_exit
      _
    %4172 = vsyncpa [#allocation3], 1
    %s4173 = scalar_lea.sflag [#allocation3], 1
    %4174 = vsyncpa %s4173, 1

</llo_original>
